<compile_context>
chip_gen: v6e
topology: v6e:2x2x1
jax: 0.10.0
libtpu: 0.0.40
codegen_flags: <defaults>
</compile_context>

<pallas_src>
import functools

import jax
import jax.numpy as jnp
from jax.experimental import pallas as pl
from jax.experimental.pallas import tpu as pltpu

KH = KW = 5
PAD = 2
EPS = 1e-3  # BatchNorm2d eps


def dwconv_bn_relu_kernel(x_ref, w_ref, gamma_ref, beta_ref, o_ref, xp_ref):
    # x_ref:     (N, H, W, TC)          unpadded input tile (channel slice)
    # w_ref:     (KH*KW, TC)            depthwise weights, row k = (kh, kw)
    # gamma_ref: (1, TC)                BN scale
    # beta_ref:  (1, TC)                BN shift
    # o_ref:     (N, H, W, TC)          output tile
    # xp_ref:    (N, H+2P, W+2P, TC)    VMEM scratch: zero halo + interior copy
    N, H, W, TC = x_ref.shape
    _, Hp, Wp, _ = xp_ref.shape

    # ---- zero only the 2-wide halo strips (cheap; done every step so it is
    #      correct under megacore "parallel" sharding), then copy the interior.
    xp_ref[:, 0:PAD, :, :] = jnp.zeros((N, PAD, Wp, TC), jnp.float32)
    xp_ref[:, PAD + H:Hp, :, :] = jnp.zeros((N, PAD, Wp, TC), jnp.float32)
    xp_ref[:, PAD:PAD + H, 0:PAD, :] = jnp.zeros((N, H, PAD, TC), jnp.float32)
    xp_ref[:, PAD:PAD + H, PAD + W:Wp, :] = jnp.zeros((N, H, PAD, TC), jnp.float32)
    xp_ref[:, PAD:PAD + H, PAD:PAD + W, :] = x_ref[...]

    # ---- depthwise 5x5 convolution ----
    # Each tap is a direct ref-slice load from the padded scratch; only the
    # accumulator (28 vregs at TC=128) plus one in-flight tap are live.
    w_all = w_ref[...]                                        # (25, TC)
    acc = jnp.zeros((N, H, W, TC), jnp.float32)
    for kh in range(KH):
        for kw in range(KW):
            k = kh * KW + kw
            wv = w_all[k].reshape(1, 1, 1, TC)                # (1,1,1,TC)
            tap = xp_ref[:, kh:kh + H, kw:kw + W, :]          # (N,H,W,TC) load
            acc = acc + tap * wv

    # ---- BatchNorm (training mode: biased batch stats), two-pass ----
    cnt = float(N * H * W)
    s1 = jnp.sum(acc, axis=(0, 1, 2))                         # (TC,)
    mean = (s1 * (1.0 / cnt)).reshape(1, TC)                  # (1, TC)

    # centered variance, streamed per row so no full acc**2 temp is built
    mean_b = jnp.broadcast_to(mean, (W, TC))                  # hoisted broadcast
    s2 = jnp.zeros((1, TC), jnp.float32)
    for n in range(N):
        for h in range(H):
            d = acc[n, h] - mean_b                            # (W, TC)
            s2 = s2 + jnp.sum(d * d, axis=0, keepdims=True)
    var = s2 * (1.0 / cnt)                                    # (1, TC), >= 0

    inv = jax.lax.rsqrt(var + EPS)                            # (1, TC)
    sc = inv * gamma_ref[...]                                 # (1, TC)
    sh = beta_ref[...] - mean * sc                            # (1, TC)
    scale = sc.reshape(1, 1, 1, TC)
    shift = sh.reshape(1, 1, 1, TC)

    # ---- ReLU + store ----
    o_ref[...] = jnp.maximum(acc * scale + shift, 0.0).astype(o_ref.dtype)


def _pick_tc(C):
    """128-channel blocks everywhere (keeps the accumulator register-resident
    on the 64-entry vreg file of v5e/v6e/v7x); fall back to full C otherwise."""
    return 128 if C % 128 == 0 else C


@functools.partial(jax.jit, static_argnames=("tc",))
def _fused_impl(x_nchw, w_oihw, gamma, beta, tc):
    N, C, H, W = x_nchw.shape
    assert C % tc == 0

    # layout glue under one jit (single XLA copy on each side; no pad pass)
    x = jnp.transpose(x_nchw, (0, 2, 3, 1))                   # NHWC
    w2 = jnp.transpose(w_oihw.reshape(C, KH * KW), (1, 0))    # (25, C)
    gamma2 = gamma.reshape(1, C)
    beta2 = beta.reshape(1, C)

    Hp, Wp = H + 2 * PAD, W + 2 * PAD
    nblk = C // tc

    cost = pl.CostEstimate(
        flops=2 * KH * KW * N * H * W * C + 10 * N * H * W * C,
        transcendentals=C,
        bytes_accessed=(2 * N * H * W * C + KH * KW * C + 2 * C) * 4,
    )

    out_nhwc = pl.pallas_call(
        dwconv_bn_relu_kernel,
        out_shape=jax.ShapeDtypeStruct((N, H, W, C), x.dtype),
        grid=(nblk,),
        in_specs=[
            pl.BlockSpec((N, H, W, tc), lambda c: (0, 0, 0, c)),
            pl.BlockSpec((KH * KW, tc), lambda c: (0, c)),
            pl.BlockSpec((1, tc), lambda c: (0, c)),
            pl.BlockSpec((1, tc), lambda c: (0, c)),
        ],
        out_specs=pl.BlockSpec((N, H, W, tc), lambda c: (0, 0, 0, c)),
        scratch_shapes=[pltpu.VMEM((N, Hp, Wp, tc), jnp.float32)],
        compiler_params=pltpu.CompilerParams(
            dimension_semantics=("parallel",)),
        cost_estimate=cost,
    )(x, w2, gamma2, beta2)

    return jnp.transpose(out_nhwc, (0, 3, 1, 2))              # back to NCHW


def fused_dwconv_bn_relu(x_nchw, w_oihw, gamma, beta, tc=None):
    """x_nchw: (N, C, H, W) f32; w_oihw: (C, 1, KH, KW); gamma, beta: (C,)."""
    C = x_nchw.shape[1]
    if tc is None:
        tc = _pick_tc(C)
    return _fused_impl(x_nchw, w_oihw, gamma, beta, tc)


if __name__ == "__main__":
    key = jax.random.PRNGKey(0)
    k1, k2, k3, k4 = jax.random.split(key, 4)

    # shapes implied by the module: (1, 384, 14, 14) input, depthwise 5x5 weights
    N, C, H, W = 1, 384, 14, 14
    x = jax.random.normal(k1, (N, C, H, W), jnp.float32)
    w = 0.1 * jax.random.normal(k2, (C, 1, KH, KW), jnp.float32)   # Conv2d weight (O,I/g,KH,KW)
    gamma = 1.0 + 0.1 * jax.random.normal(k3, (C,), jnp.float32)   # BN weight
    beta = 0.1 * jax.random.normal(k4, (C,), jnp.float32)          # BN bias

    out = fused_dwconv_bn_relu(x, w, gamma, beta)
    out = jax.block_until_ready(out)

    # independent reference (XLA depthwise conv + training-mode BN + ReLU)
    conv = jax.lax.conv_general_dilated(
        x, w, window_strides=(1, 1), padding=((PAD, PAD), (PAD, PAD)),
        feature_group_count=C,
        dimension_numbers=("NCHW", "OIHW", "NCHW"))
    mean = jnp.mean(conv, axis=(0, 2, 3), keepdims=True)
    var = jnp.mean((conv - mean) ** 2, axis=(0, 2, 3), keepdims=True)
    ref = jnp.maximum(
        (conv - mean) * jax.lax.rsqrt(var + EPS) * gamma.reshape(1, C, 1, 1)
        + beta.reshape(1, C, 1, 1), 0.0)

    # TODO(synk): PyTorch training-mode BatchNorm also updates running_mean/var
    # (momentum=0.1); only the forward output is produced here.

    assert out.shape == (N, C, H, W)
    assert out.dtype == jnp.float32
    assert jnp.allclose(out, ref, atol=1e-3, rtol=1e-3)
    print("KERNEL_OK")
</pallas_src>

<mosaic_0001>
module attributes {stable_mosaic.version = 11 : i64} {
  func.func @dwconv_bn_relu_kernel(%arg0: i32, %arg1: memref<1x14x14x128xf32, #tpu.memory_space<vmem>>, %arg2: memref<25x128xf32, #tpu.memory_space<vmem>>, %arg3: memref<1x128xf32, #tpu.memory_space<vmem>>, %arg4: memref<1x128xf32, #tpu.memory_space<vmem>>, %arg5: memref<1x14x14x128xf32, #tpu.memory_space<vmem>>, %arg6: memref<1x18x18x128xf32, #tpu.memory_space<vmem>>) attributes {dimension_semantics = [#tpu.dimension_semantics<parallel>], iteration_bounds = array<i64: 3>, scalar_prefetch = 0 : i64, scratch_operands = 1 : i64, tpu.core_type = #tpu.core_type<tc>, window_params = [{transform_indices = @transform_0, window_bounds = array<i64: 1, 14, 14, 128>}, {transform_indices = @transform_1, window_bounds = array<i64: 25, 128>}, {transform_indices = @transform_2, window_bounds = array<i64: 1, 128>}, {transform_indices = @transform_3, window_bounds = array<i64: 1, 128>}, {transform_indices = @transform_4, window_bounds = array<i64: 1, 14, 14, 128>}]} {
    %cst = arith.constant 0.000000e+00 : f32
    %0 = vector.broadcast %cst : f32 to vector<1x2x18x128xf32>
    %c0 = arith.constant 0 : index
    %c0_0 = arith.constant 0 : index
    %c0_1 = arith.constant 0 : index
    %c0_2 = arith.constant 0 : index
    %1 = vector.load %arg6[%c0, %c0_0, %c0_1, %c0_2] : memref<1x18x18x128xf32, #tpu.memory_space<vmem>>, vector<1x2x18x128xf32>
    tpu.vector_store %arg6[%c0, %c0_0, %c0_1, %c0_2], %0 {strides = array<i32>} : memref<1x18x18x128xf32, #tpu.memory_space<vmem>>, vector<1x2x18x128xf32>,
    %cst_3 = arith.constant 0.000000e+00 : f32
    %2 = vector.broadcast %cst_3 : f32 to vector<1x2x18x128xf32>
    %c0_4 = arith.constant 0 : index
    %c16 = arith.constant 16 : index
    %c0_5 = arith.constant 0 : index
    %c0_6 = arith.constant 0 : index
    %3 = vector.load %arg6[%c0_4, %c16, %c0_5, %c0_6] : memref<1x18x18x128xf32, #tpu.memory_space<vmem>>, vector<1x2x18x128xf32>
    tpu.vector_store %arg6[%c0_4, %c16, %c0_5, %c0_6], %2 {strides = array<i32>} : memref<1x18x18x128xf32, #tpu.memory_space<vmem>>, vector<1x2x18x128xf32>,
    %cst_7 = arith.constant 0.000000e+00 : f32
    %4 = vector.broadcast %cst_7 : f32 to vector<1x14x2x128xf32>
    %c0_8 = arith.constant 0 : index
    %c2 = arith.constant 2 : index
    %c0_9 = arith.constant 0 : index
    %c0_10 = arith.constant 0 : index
    %5 = vector.load %arg6[%c0_8, %c2, %c0_9, %c0_10] : memref<1x18x18x128xf32, #tpu.memory_space<vmem>>, vector<1x14x2x128xf32>
    tpu.vector_store %arg6[%c0_8, %c2, %c0_9, %c0_10], %4 {strides = array<i32>} : memref<1x18x18x128xf32, #tpu.memory_space<vmem>>, vector<1x14x2x128xf32>,
    %cst_11 = arith.constant 0.000000e+00 : f32
    %6 = vector.broadcast %cst_11 : f32 to vector<1x14x2x128xf32>
    %c0_12 = arith.constant 0 : index
    %c2_13 = arith.constant 2 : index
    %c16_14 = arith.constant 16 : index
    %c0_15 = arith.constant 0 : index
    %7 = vector.load %arg6[%c0_12, %c2_13, %c16_14, %c0_15] : memref<1x18x18x128xf32, #tpu.memory_space<vmem>>, vector<1x14x2x128xf32>
    tpu.vector_store %arg6[%c0_12, %c2_13, %c16_14, %c0_15], %6 {strides = array<i32>} : memref<1x18x18x128xf32, #tpu.memory_space<vmem>>, vector<1x14x2x128xf32>,
    %c0_16 = arith.constant 0 : index
    %c0_17 = arith.constant 0 : index
    %c0_18 = arith.constant 0 : index
    %c0_19 = arith.constant 0 : index
    %8 = vector.load %arg1[%c0_16, %c0_17, %c0_18, %c0_19] : memref<1x14x14x128xf32, #tpu.memory_space<vmem>>, vector<1x14x14x128xf32>
    %c0_20 = arith.constant 0 : index
    %c2_21 = arith.constant 2 : index
    %c2_22 = arith.constant 2 : index
    %c0_23 = arith.constant 0 : index
    %9 = vector.load %arg6[%c0_20, %c2_21, %c2_22, %c0_23] : memref<1x18x18x128xf32, #tpu.memory_space<vmem>>, vector<1x14x14x128xf32>
    tpu.vector_store %arg6[%c0_20, %c2_21, %c2_22, %c0_23], %8 {strides = array<i32>} : memref<1x18x18x128xf32, #tpu.memory_space<vmem>>, vector<1x14x14x128xf32>,
    %c0_24 = arith.constant 0 : index
    %c0_25 = arith.constant 0 : index
    %10 = vector.load %arg2[%c0_24, %c0_25] : memref<25x128xf32, #tpu.memory_space<vmem>>, vector<25x128xf32>
    %cst_26 = arith.constant 0.000000e+00 : f32
    %11 = vector.broadcast %cst_26 : f32 to vector<1x14x14x128xf32>
    %12 = vector.extract_strided_slice %10 {offsets = [0, 0], sizes = [1, 128], strides = [1, 1]} : vector<25x128xf32> to vector<1x128xf32>
    %13 = vector.shape_cast %12 : vector<1x128xf32> to vector<128xf32>
    %14 = vector.shape_cast %13 : vector<128xf32> to vector<1x1x1x128xf32>
    %c0_27 = arith.constant 0 : index
    %c0_28 = arith.constant 0 : index
    %c0_29 = arith.constant 0 : index
    %c0_30 = arith.constant 0 : index
    %15 = vector.load %arg6[%c0_27, %c0_28, %c0_29, %c0_30] : memref<1x18x18x128xf32, #tpu.memory_space<vmem>>, vector<1x14x14x128xf32>
    %16 = vector.broadcast %14 : vector<1x1x1x128xf32> to vector<1x14x14x128xf32>
    %17 = arith.mulf %15, %16 : vector<1x14x14x128xf32>
    %18 = arith.addf %11, %17 : vector<1x14x14x128xf32>
    %19 = vector.extract_strided_slice %10 {offsets = [1, 0], sizes = [1, 128], strides = [1, 1]} : vector<25x128xf32> to vector<1x128xf32>
    %20 = vector.shape_cast %19 : vector<1x128xf32> to vector<128xf32>
    %21 = vector.shape_cast %20 : vector<128xf32> to vector<1x1x1x128xf32>
    %c0_31 = arith.constant 0 : index
    %c0_32 = arith.constant 0 : index
    %c1 = arith.constant 1 : index
    %c0_33 = arith.constant 0 : index
    %22 = vector.load %arg6[%c0_31, %c0_32, %c1, %c0_33] : memref<1x18x18x128xf32, #tpu.memory_space<vmem>>, vector<1x14x14x128xf32>
    %23 = vector.broadcast %21 : vector<1x1x1x128xf32> to vector<1x14x14x128xf32>
    %24 = arith.mulf %22, %23 : vector<1x14x14x128xf32>
    %25 = arith.addf %18, %24 : vector<1x14x14x128xf32>
    %26 = vector.extract_strided_slice %10 {offsets = [2, 0], sizes = [1, 128], strides = [1, 1]} : vector<25x128xf32> to vector<1x128xf32>
    %27 = vector.shape_cast %26 : vector<1x128xf32> to vector<128xf32>
    %28 = vector.shape_cast %27 : vector<128xf32> to vector<1x1x1x128xf32>
    %c0_34 = arith.constant 0 : index
    %c0_35 = arith.constant 0 : index
    %c2_36 = arith.constant 2 : index
    %c0_37 = arith.constant 0 : index
    %29 = vector.load %arg6[%c0_34, %c0_35, %c2_36, %c0_37] : memref<1x18x18x128xf32, #tpu.memory_space<vmem>>, vector<1x14x14x128xf32>
    %30 = vector.broadcast %28 : vector<1x1x1x128xf32> to vector<1x14x14x128xf32>
    %31 = arith.mulf %29, %30 : vector<1x14x14x128xf32>
    %32 = arith.addf %25, %31 : vector<1x14x14x128xf32>
    %33 = vector.extract_strided_slice %10 {offsets = [3, 0], sizes = [1, 128], strides = [1, 1]} : vector<25x128xf32> to vector<1x128xf32>
    %34 = vector.shape_cast %33 : vector<1x128xf32> to vector<128xf32>
    %35 = vector.shape_cast %34 : vector<128xf32> to vector<1x1x1x128xf32>
    %c0_38 = arith.constant 0 : index
    %c0_39 = arith.constant 0 : index
    %c3 = arith.constant 3 : index
    %c0_40 = arith.constant 0 : index
    %36 = vector.load %arg6[%c0_38, %c0_39, %c3, %c0_40] : memref<1x18x18x128xf32, #tpu.memory_space<vmem>>, vector<1x14x14x128xf32>
    %37 = vector.broadcast %35 : vector<1x1x1x128xf32> to vector<1x14x14x128xf32>
    %38 = arith.mulf %36, %37 : vector<1x14x14x128xf32>
    %39 = arith.addf %32, %38 : vector<1x14x14x128xf32>
    %40 = vector.extract_strided_slice %10 {offsets = [4, 0], sizes = [1, 128], strides = [1, 1]} : vector<25x128xf32> to vector<1x128xf32>
    %41 = vector.shape_cast %40 : vector<1x128xf32> to vector<128xf32>
    %42 = vector.shape_cast %41 : vector<128xf32> to vector<1x1x1x128xf32>
    %c0_41 = arith.constant 0 : index
    %c0_42 = arith.constant 0 : index
    %c4 = arith.constant 4 : index
    %c0_43 = arith.constant 0 : index
    %43 = vector.load %arg6[%c0_41, %c0_42, %c4, %c0_43] : memref<1x18x18x128xf32, #tpu.memory_space<vmem>>, vector<1x14x14x128xf32>
    %44 = vector.broadcast %42 : vector<1x1x1x128xf32> to vector<1x14x14x128xf32>
    %45 = arith.mulf %43, %44 : vector<1x14x14x128xf32>
    %46 = arith.addf %39, %45 : vector<1x14x14x128xf32>
    %47 = vector.extract_strided_slice %10 {offsets = [5, 0], sizes = [1, 128], strides = [1, 1]} : vector<25x128xf32> to vector<1x128xf32>
    %48 = vector.shape_cast %47 : vector<1x128xf32> to vector<128xf32>
    %49 = vector.shape_cast %48 : vector<128xf32> to vector<1x1x1x128xf32>
    %c0_44 = arith.constant 0 : index
    %c1_45 = arith.constant 1 : index
    %c0_46 = arith.constant 0 : index
    %c0_47 = arith.constant 0 : index
    %50 = vector.load %arg6[%c0_44, %c1_45, %c0_46, %c0_47] : memref<1x18x18x128xf32, #tpu.memory_space<vmem>>, vector<1x14x14x128xf32>
    %51 = vector.broadcast %49 : vector<1x1x1x128xf32> to vector<1x14x14x128xf32>
    %52 = arith.mulf %50, %51 : vector<1x14x14x128xf32>
    %53 = arith.addf %46, %52 : vector<1x14x14x128xf32>
    %54 = vector.extract_strided_slice %10 {offsets = [6, 0], sizes = [1, 128], strides = [1, 1]} : vector<25x128xf32> to vector<1x128xf32>
    %55 = vector.shape_cast %54 : vector<1x128xf32> to vector<128xf32>
    %56 = vector.shape_cast %55 : vector<128xf32> to vector<1x1x1x128xf32>
    %c0_48 = arith.constant 0 : index
    %c1_49 = arith.constant 1 : index
    %c1_50 = arith.constant 1 : index
    %c0_51 = arith.constant 0 : index
    %57 = vector.load %arg6[%c0_48, %c1_49, %c1_50, %c0_51] : memref<1x18x18x128xf32, #tpu.memory_space<vmem>>, vector<1x14x14x128xf32>
    %58 = vector.broadcast %56 : vector<1x1x1x128xf32> to vector<1x14x14x128xf32>
    %59 = arith.mulf %57, %58 : vector<1x14x14x128xf32>
    %60 = arith.addf %53, %59 : vector<1x14x14x128xf32>
    %61 = vector.extract_strided_slice %10 {offsets = [7, 0], sizes = [1, 128], strides = [1, 1]} : vector<25x128xf32> to vector<1x128xf32>
    %62 = vector.shape_cast %61 : vector<1x128xf32> to vector<128xf32>
    %63 = vector.shape_cast %62 : vector<128xf32> to vector<1x1x1x128xf32>
    %c0_52 = arith.constant 0 : index
    %c1_53 = arith.constant 1 : index
    %c2_54 = arith.constant 2 : index
    %c0_55 = arith.constant 0 : index
    %64 = vector.load %arg6[%c0_52, %c1_53, %c2_54, %c0_55] : memref<1x18x18x128xf32, #tpu.memory_space<vmem>>, vector<1x14x14x128xf32>
    %65 = vector.broadcast %63 : vector<1x1x1x128xf32> to vector<1x14x14x128xf32>
    %66 = arith.mulf %64, %65 : vector<1x14x14x128xf32>
    %67 = arith.addf %60, %66 : vector<1x14x14x128xf32>
    %68 = vector.extract_strided_slice %10 {offsets = [8, 0], sizes = [1, 128], strides = [1, 1]} : vector<25x128xf32> to vector<1x128xf32>
    %69 = vector.shape_cast %68 : vector<1x128xf32> to vector<128xf32>
    %70 = vector.shape_cast %69 : vector<128xf32> to vector<1x1x1x128xf32>
    %c0_56 = arith.constant 0 : index
    %c1_57 = arith.constant 1 : index
    %c3_58 = arith.constant 3 : index
    %c0_59 = arith.constant 0 : index
    %71 = vector.load %arg6[%c0_56, %c1_57, %c3_58, %c0_59] : memref<1x18x18x128xf32, #tpu.memory_space<vmem>>, vector<1x14x14x128xf32>
    %72 = vector.broadcast %70 : vector<1x1x1x128xf32> to vector<1x14x14x128xf32>
    %73 = arith.mulf %71, %72 : vector<1x14x14x128xf32>
    %74 = arith.addf %67, %73 : vector<1x14x14x128xf32>
    %75 = vector.extract_strided_slice %10 {offsets = [9, 0], sizes = [1, 128], strides = [1, 1]} : vector<25x128xf32> to vector<1x128xf32>
    %76 = vector.shape_cast %75 : vector<1x128xf32> to vector<128xf32>
    %77 = vector.shape_cast %76 : vector<128xf32> to vector<1x1x1x128xf32>
    %c0_60 = arith.constant 0 : index
    %c1_61 = arith.constant 1 : index
    %c4_62 = arith.constant 4 : index
    %c0_63 = arith.constant 0 : index
    %78 = vector.load %arg6[%c0_60, %c1_61, %c4_62, %c0_63] : memref<1x18x18x128xf32, #tpu.memory_space<vmem>>, vector<1x14x14x128xf32>
    %79 = vector.broadcast %77 : vector<1x1x1x128xf32> to vector<1x14x14x128xf32>
    %80 = arith.mulf %78, %79 : vector<1x14x14x128xf32>
    %81 = arith.addf %74, %80 : vector<1x14x14x128xf32>
    %82 = vector.extract_strided_slice %10 {offsets = [10, 0], sizes = [1, 128], strides = [1, 1]} : vector<25x128xf32> to vector<1x128xf32>
    %83 = vector.shape_cast %82 : vector<1x128xf32> to vector<128xf32>
    %84 = vector.shape_cast %83 : vector<128xf32> to vector<1x1x1x128xf32>
    %c0_64 = arith.constant 0 : index
    %c2_65 = arith.constant 2 : index
    %c0_66 = arith.constant 0 : index
    %c0_67 = arith.constant 0 : index
    %85 = vector.load %arg6[%c0_64, %c2_65, %c0_66, %c0_67] : memref<1x18x18x128xf32, #tpu.memory_space<vmem>>, vector<1x14x14x128xf32>
    %86 = vector.broadcast %84 : vector<1x1x1x128xf32> to vector<1x14x14x128xf32>
    %87 = arith.mulf %85, %86 : vector<1x14x14x128xf32>
    %88 = arith.addf %81, %87 : vector<1x14x14x128xf32>
    %89 = vector.extract_strided_slice %10 {offsets = [11, 0], sizes = [1, 128], strides = [1, 1]} : vector<25x128xf32> to vector<1x128xf32>
    %90 = vector.shape_cast %89 : vector<1x128xf32> to vector<128xf32>
    %91 = vector.shape_cast %90 : vector<128xf32> to vector<1x1x1x128xf32>
    %c0_68 = arith.constant 0 : index
    %c2_69 = arith.constant 2 : index
    %c1_70 = arith.constant 1 : index
    %c0_71 = arith.constant 0 : index
    %92 = vector.load %arg6[%c0_68, %c2_69, %c1_70, %c0_71] : memref<1x18x18x128xf32, #tpu.memory_space<vmem>>, vector<1x14x14x128xf32>
    %93 = vector.broadcast %91 : vector<1x1x1x128xf32> to vector<1x14x14x128xf32>
    %94 = arith.mulf %92, %93 : vector<1x14x14x128xf32>
    %95 = arith.addf %88, %94 : vector<1x14x14x128xf32>
    %96 = vector.extract_strided_slice %10 {offsets = [12, 0], sizes = [1, 128], strides = [1, 1]} : vector<25x128xf32> to vector<1x128xf32>
    %97 = vector.shape_cast %96 : vector<1x128xf32> to vector<128xf32>
    %98 = vector.shape_cast %97 : vector<128xf32> to vector<1x1x1x128xf32>
    %c0_72 = arith.constant 0 : index
    %c2_73 = arith.constant 2 : index
    %c2_74 = arith.constant 2 : index
    %c0_75 = arith.constant 0 : index
    %99 = vector.load %arg6[%c0_72, %c2_73, %c2_74, %c0_75] : memref<1x18x18x128xf32, #tpu.memory_space<vmem>>, vector<1x14x14x128xf32>
    %100 = vector.broadcast %98 : vector<1x1x1x128xf32> to vector<1x14x14x128xf32>
    %101 = arith.mulf %99, %100 : vector<1x14x14x128xf32>
    %102 = arith.addf %95, %101 : vector<1x14x14x128xf32>
    %103 = vector.extract_strided_slice %10 {offsets = [13, 0], sizes = [1, 128], strides = [1, 1]} : vector<25x128xf32> to vector<1x128xf32>
    %104 = vector.shape_cast %103 : vector<1x128xf32> to vector<128xf32>
    %105 = vector.shape_cast %104 : vector<128xf32> to vector<1x1x1x128xf32>
    %c0_76 = arith.constant 0 : index
    %c2_77 = arith.constant 2 : index
    %c3_78 = arith.constant 3 : index
    %c0_79 = arith.constant 0 : index
    %106 = vector.load %arg6[%c0_76, %c2_77, %c3_78, %c0_79] : memref<1x18x18x128xf32, #tpu.memory_space<vmem>>, vector<1x14x14x128xf32>
    %107 = vector.broadcast %105 : vector<1x1x1x128xf32> to vector<1x14x14x128xf32>
    %108 = arith.mulf %106, %107 : vector<1x14x14x128xf32>
    %109 = arith.addf %102, %108 : vector<1x14x14x128xf32>
    %110 = vector.extract_strided_slice %10 {offsets = [14, 0], sizes = [1, 128], strides = [1, 1]} : vector<25x128xf32> to vector<1x128xf32>
    %111 = vector.shape_cast %110 : vector<1x128xf32> to vector<128xf32>
    %112 = vector.shape_cast %111 : vector<128xf32> to vector<1x1x1x128xf32>
    %c0_80 = arith.constant 0 : index
    %c2_81 = arith.constant 2 : index
    %c4_82 = arith.constant 4 : index
    %c0_83 = arith.constant 0 : index
    %113 = vector.load %arg6[%c0_80, %c2_81, %c4_82, %c0_83] : memref<1x18x18x128xf32, #tpu.memory_space<vmem>>, vector<1x14x14x128xf32>
    %114 = vector.broadcast %112 : vector<1x1x1x128xf32> to vector<1x14x14x128xf32>
    %115 = arith.mulf %113, %114 : vector<1x14x14x128xf32>
    %116 = arith.addf %109, %115 : vector<1x14x14x128xf32>
    %117 = vector.extract_strided_slice %10 {offsets = [15, 0], sizes = [1, 128], strides = [1, 1]} : vector<25x128xf32> to vector<1x128xf32>
    %118 = vector.shape_cast %117 : vector<1x128xf32> to vector<128xf32>
    %119 = vector.shape_cast %118 : vector<128xf32> to vector<1x1x1x128xf32>
    %c0_84 = arith.constant 0 : index
    %c3_85 = arith.constant 3 : index
    %c0_86 = arith.constant 0 : index
    %c0_87 = arith.constant 0 : index
    %120 = vector.load %arg6[%c0_84, %c3_85, %c0_86, %c0_87] : memref<1x18x18x128xf32, #tpu.memory_space<vmem>>, vector<1x14x14x128xf32>
    %121 = vector.broadcast %119 : vector<1x1x1x128xf32> to vector<1x14x14x128xf32>
    %122 = arith.mulf %120, %121 : vector<1x14x14x128xf32>
    %123 = arith.addf %116, %122 : vector<1x14x14x128xf32>
    %124 = vector.extract_strided_slice %10 {offsets = [16, 0], sizes = [1, 128], strides = [1, 1]} : vector<25x128xf32> to vector<1x128xf32>
    %125 = vector.shape_cast %124 : vector<1x128xf32> to vector<128xf32>
    %126 = vector.shape_cast %125 : vector<128xf32> to vector<1x1x1x128xf32>
    %c0_88 = arith.constant 0 : index
    %c3_89 = arith.constant 3 : index
    %c1_90 = arith.constant 1 : index
    %c0_91 = arith.constant 0 : index
    %127 = vector.load %arg6[%c0_88, %c3_89, %c1_90, %c0_91] : memref<1x18x18x128xf32, #tpu.memory_space<vmem>>, vector<1x14x14x128xf32>
    %128 = vector.broadcast %126 : vector<1x1x1x128xf32> to vector<1x14x14x128xf32>
    %129 = arith.mulf %127, %128 : vector<1x14x14x128xf32>
    %130 = arith.addf %123, %129 : vector<1x14x14x128xf32>
    %131 = vector.extract_strided_slice %10 {offsets = [17, 0], sizes = [1, 128], strides = [1, 1]} : vector<25x128xf32> to vector<1x128xf32>
    %132 = vector.shape_cast %131 : vector<1x128xf32> to vector<128xf32>
    %133 = vector.shape_cast %132 : vector<128xf32> to vector<1x1x1x128xf32>
    %c0_92 = arith.constant 0 : index
    %c3_93 = arith.constant 3 : index
    %c2_94 = arith.constant 2 : index
    %c0_95 = arith.constant 0 : index
    %134 = vector.load %arg6[%c0_92, %c3_93, %c2_94, %c0_95] : memref<1x18x18x128xf32, #tpu.memory_space<vmem>>, vector<1x14x14x128xf32>
    %135 = vector.broadcast %133 : vector<1x1x1x128xf32> to vector<1x14x14x128xf32>
    %136 = arith.mulf %134, %135 : vector<1x14x14x128xf32>
    %137 = arith.addf %130, %136 : vector<1x14x14x128xf32>
    %138 = vector.extract_strided_slice %10 {offsets = [18, 0], sizes = [1, 128], strides = [1, 1]} : vector<25x128xf32> to vector<1x128xf32>
    %139 = vector.shape_cast %138 : vector<1x128xf32> to vector<128xf32>
    %140 = vector.shape_cast %139 : vector<128xf32> to vector<1x1x1x128xf32>
    %c0_96 = arith.constant 0 : index
    %c3_97 = arith.constant 3 : index
    %c3_98 = arith.constant 3 : index
    %c0_99 = arith.constant 0 : index
    %141 = vector.load %arg6[%c0_96, %c3_97, %c3_98, %c0_99] : memref<1x18x18x128xf32, #tpu.memory_space<vmem>>, vector<1x14x14x128xf32>
    %142 = vector.broadcast %140 : vector<1x1x1x128xf32> to vector<1x14x14x128xf32>
    %143 = arith.mulf %141, %142 : vector<1x14x14x128xf32>
    %144 = arith.addf %137, %143 : vector<1x14x14x128xf32>
    %145 = vector.extract_strided_slice %10 {offsets = [19, 0], sizes = [1, 128], strides = [1, 1]} : vector<25x128xf32> to vector<1x128xf32>
    %146 = vector.shape_cast %145 : vector<1x128xf32> to vector<128xf32>
    %147 = vector.shape_cast %146 : vector<128xf32> to vector<1x1x1x128xf32>
    %c0_100 = arith.constant 0 : index
    %c3_101 = arith.constant 3 : index
    %c4_102 = arith.constant 4 : index
    %c0_103 = arith.constant 0 : index
    %148 = vector.load %arg6[%c0_100, %c3_101, %c4_102, %c0_103] : memref<1x18x18x128xf32, #tpu.memory_space<vmem>>, vector<1x14x14x128xf32>
    %149 = vector.broadcast %147 : vector<1x1x1x128xf32> to vector<1x14x14x128xf32>
    %150 = arith.mulf %148, %149 : vector<1x14x14x128xf32>
    %151 = arith.addf %144, %150 : vector<1x14x14x128xf32>
    %152 = vector.extract_strided_slice %10 {offsets = [20, 0], sizes = [1, 128], strides = [1, 1]} : vector<25x128xf32> to vector<1x128xf32>
    %153 = vector.shape_cast %152 : vector<1x128xf32> to vector<128xf32>
    %154 = vector.shape_cast %153 : vector<128xf32> to vector<1x1x1x128xf32>
    %c0_104 = arith.constant 0 : index
    %c4_105 = arith.constant 4 : index
    %c0_106 = arith.constant 0 : index
    %c0_107 = arith.constant 0 : index
    %155 = vector.load %arg6[%c0_104, %c4_105, %c0_106, %c0_107] : memref<1x18x18x128xf32, #tpu.memory_space<vmem>>, vector<1x14x14x128xf32>
    %156 = vector.broadcast %154 : vector<1x1x1x128xf32> to vector<1x14x14x128xf32>
    %157 = arith.mulf %155, %156 : vector<1x14x14x128xf32>
    %158 = arith.addf %151, %157 : vector<1x14x14x128xf32>
    %159 = vector.extract_strided_slice %10 {offsets = [21, 0], sizes = [1, 128], strides = [1, 1]} : vector<25x128xf32> to vector<1x128xf32>
    %160 = vector.shape_cast %159 : vector<1x128xf32> to vector<128xf32>
    %161 = vector.shape_cast %160 : vector<128xf32> to vector<1x1x1x128xf32>
    %c0_108 = arith.constant 0 : index
    %c4_109 = arith.constant 4 : index
    %c1_110 = arith.constant 1 : index
    %c0_111 = arith.constant 0 : index
    %162 = vector.load %arg6[%c0_108, %c4_109, %c1_110, %c0_111] : memref<1x18x18x128xf32, #tpu.memory_space<vmem>>, vector<1x14x14x128xf32>
    %163 = vector.broadcast %161 : vector<1x1x1x128xf32> to vector<1x14x14x128xf32>
    %164 = arith.mulf %162, %163 : vector<1x14x14x128xf32>
    %165 = arith.addf %158, %164 : vector<1x14x14x128xf32>
    %166 = vector.extract_strided_slice %10 {offsets = [22, 0], sizes = [1, 128], strides = [1, 1]} : vector<25x128xf32> to vector<1x128xf32>
    %167 = vector.shape_cast %166 : vector<1x128xf32> to vector<128xf32>
    %168 = vector.shape_cast %167 : vector<128xf32> to vector<1x1x1x128xf32>
    %c0_112 = arith.constant 0 : index
    %c4_113 = arith.constant 4 : index
    %c2_114 = arith.constant 2 : index
    %c0_115 = arith.constant 0 : index
    %169 = vector.load %arg6[%c0_112, %c4_113, %c2_114, %c0_115] : memref<1x18x18x128xf32, #tpu.memory_space<vmem>>, vector<1x14x14x128xf32>
    %170 = vector.broadcast %168 : vector<1x1x1x128xf32> to vector<1x14x14x128xf32>
    %171 = arith.mulf %169, %170 : vector<1x14x14x128xf32>
    %172 = arith.addf %165, %171 : vector<1x14x14x128xf32>
    %173 = vector.extract_strided_slice %10 {offsets = [23, 0], sizes = [1, 128], strides = [1, 1]} : vector<25x128xf32> to vector<1x128xf32>
    %174 = vector.shape_cast %173 : vector<1x128xf32> to vector<128xf32>
    %175 = vector.shape_cast %174 : vector<128xf32> to vector<1x1x1x128xf32>
    %c0_116 = arith.constant 0 : index
    %c4_117 = arith.constant 4 : index
    %c3_118 = arith.constant 3 : index
    %c0_119 = arith.constant 0 : index
    %176 = vector.load %arg6[%c0_116, %c4_117, %c3_118, %c0_119] : memref<1x18x18x128xf32, #tpu.memory_space<vmem>>, vector<1x14x14x128xf32>
    %177 = vector.broadcast %175 : vector<1x1x1x128xf32> to vector<1x14x14x128xf32>
    %178 = arith.mulf %176, %177 : vector<1x14x14x128xf32>
    %179 = arith.addf %172, %178 : vector<1x14x14x128xf32>
    %180 = vector.extract_strided_slice %10 {offsets = [24, 0], sizes = [1, 128], strides = [1, 1]} : vector<25x128xf32> to vector<1x128xf32>
    %181 = vector.shape_cast %180 : vector<1x128xf32> to vector<128xf32>
    %182 = vector.shape_cast %181 : vector<128xf32> to vector<1x1x1x128xf32>
    %c0_120 = arith.constant 0 : index
    %c4_121 = arith.constant 4 : index
    %c4_122 = arith.constant 4 : index
    %c0_123 = arith.constant 0 : index
    %183 = vector.load %arg6[%c0_120, %c4_121, %c4_122, %c0_123] : memref<1x18x18x128xf32, #tpu.memory_space<vmem>>, vector<1x14x14x128xf32>
    %184 = vector.broadcast %182 : vector<1x1x1x128xf32> to vector<1x14x14x128xf32>
    %185 = arith.mulf %183, %184 : vector<1x14x14x128xf32>
    %186 = arith.addf %179, %185 : vector<1x14x14x128xf32>
    %cst_124 = arith.constant dense<0.000000e+00> : vector<128xf32>
    %187 = vector.multi_reduction <add>, %186, %cst_124 [0, 1, 2] : vector<1x14x14x128xf32> to vector<128xf32>
    %cst_125 = arith.constant 0.00510204071 : f32
    %188 = vector.broadcast %cst_125 : f32 to vector<128xf32>
    %189 = arith.mulf %187, %188 : vector<128xf32>
    %190 = vector.shape_cast %189 : vector<128xf32> to vector<1x128xf32>
    %191 = vector.shape_cast %190 : vector<1x128xf32> to vector<1x128xf32>
    %192 = vector.broadcast %191 : vector<1x128xf32> to vector<14x128xf32>
    %cst_126 = arith.constant 0.000000e+00 : f32
    %193 = vector.broadcast %cst_126 : f32 to vector<1x128xf32>
    %194 = vector.extract_strided_slice %186 {offsets = [0, 0, 0, 0], sizes = [1, 1, 14, 128], strides = [1, 1, 1, 1]} : vector<1x14x14x128xf32> to vector<1x1x14x128xf32>
    %195 = vector.shape_cast %194 : vector<1x1x14x128xf32> to vector<14x128xf32>
    %196 = arith.subf %195, %192 : vector<14x128xf32>
    %197 = arith.mulf %196, %196 : vector<14x128xf32>
    %cst_127 = arith.constant dense<0.000000e+00> : vector<128xf32>
    %198 = vector.multi_reduction <add>, %197, %cst_127 [0] : vector<14x128xf32> to vector<128xf32>
    %199 = vector.shape_cast %198 : vector<128xf32> to vector<1x128xf32>
    %200 = arith.addf %193, %199 : vector<1x128xf32>
    %201 = vector.extract_strided_slice %186 {offsets = [0, 1, 0, 0], sizes = [1, 1, 14, 128], strides = [1, 1, 1, 1]} : vector<1x14x14x128xf32> to vector<1x1x14x128xf32>
    %202 = vector.shape_cast %201 : vector<1x1x14x128xf32> to vector<14x128xf32>
    %203 = arith.subf %202, %192 : vector<14x128xf32>
    %204 = arith.mulf %203, %203 : vector<14x128xf32>
    %cst_128 = arith.constant dense<0.000000e+00> : vector<128xf32>
    %205 = vector.multi_reduction <add>, %204, %cst_128 [0] : vector<14x128xf32> to vector<128xf32>
    %206 = vector.shape_cast %205 : vector<128xf32> to vector<1x128xf32>
    %207 = arith.addf %200, %206 : vector<1x128xf32>
    %208 = vector.extract_strided_slice %186 {offsets = [0, 2, 0, 0], sizes = [1, 1, 14, 128], strides = [1, 1, 1, 1]} : vector<1x14x14x128xf32> to vector<1x1x14x128xf32>
    %209 = vector.shape_cast %208 : vector<1x1x14x128xf32> to vector<14x128xf32>
    %210 = arith.subf %209, %192 : vector<14x128xf32>
    %211 = arith.mulf %210, %210 : vector<14x128xf32>
    %cst_129 = arith.constant dense<0.000000e+00> : vector<128xf32>
    %212 = vector.multi_reduction <add>, %211, %cst_129 [0] : vector<14x128xf32> to vector<128xf32>
    %213 = vector.shape_cast %212 : vector<128xf32> to vector<1x128xf32>
    %214 = arith.addf %207, %213 : vector<1x128xf32>
    %215 = vector.extract_strided_slice %186 {offsets = [0, 3, 0, 0], sizes = [1, 1, 14, 128], strides = [1, 1, 1, 1]} : vector<1x14x14x128xf32> to vector<1x1x14x128xf32>
    %216 = vector.shape_cast %215 : vector<1x1x14x128xf32> to vector<14x128xf32>
    %217 = arith.subf %216, %192 : vector<14x128xf32>
    %218 = arith.mulf %217, %217 : vector<14x128xf32>
    %cst_130 = arith.constant dense<0.000000e+00> : vector<128xf32>
    %219 = vector.multi_reduction <add>, %218, %cst_130 [0] : vector<14x128xf32> to vector<128xf32>
    %220 = vector.shape_cast %219 : vector<128xf32> to vector<1x128xf32>
    %221 = arith.addf %214, %220 : vector<1x128xf32>
    %222 = vector.extract_strided_slice %186 {offsets = [0, 4, 0, 0], sizes = [1, 1, 14, 128], strides = [1, 1, 1, 1]} : vector<1x14x14x128xf32> to vector<1x1x14x128xf32>
    %223 = vector.shape_cast %222 : vector<1x1x14x128xf32> to vector<14x128xf32>
    %224 = arith.subf %223, %192 : vector<14x128xf32>
    %225 = arith.mulf %224, %224 : vector<14x128xf32>
    %cst_131 = arith.constant dense<0.000000e+00> : vector<128xf32>
    %226 = vector.multi_reduction <add>, %225, %cst_131 [0] : vector<14x128xf32> to vector<128xf32>
    %227 = vector.shape_cast %226 : vector<128xf32> to vector<1x128xf32>
    %228 = arith.addf %221, %227 : vector<1x128xf32>
    %229 = vector.extract_strided_slice %186 {offsets = [0, 5, 0, 0], sizes = [1, 1, 14, 128], strides = [1, 1, 1, 1]} : vector<1x14x14x128xf32> to vector<1x1x14x128xf32>
    %230 = vector.shape_cast %229 : vector<1x1x14x128xf32> to vector<14x128xf32>
    %231 = arith.subf %230, %192 : vector<14x128xf32>
    %232 = arith.mulf %231, %231 : vector<14x128xf32>
    %cst_132 = arith.constant dense<0.000000e+00> : vector<128xf32>
    %233 = vector.multi_reduction <add>, %232, %cst_132 [0] : vector<14x128xf32> to vector<128xf32>
    %234 = vector.shape_cast %233 : vector<128xf32> to vector<1x128xf32>
    %235 = arith.addf %228, %234 : vector<1x128xf32>
    %236 = vector.extract_strided_slice %186 {offsets = [0, 6, 0, 0], sizes = [1, 1, 14, 128], strides = [1, 1, 1, 1]} : vector<1x14x14x128xf32> to vector<1x1x14x128xf32>
    %237 = vector.shape_cast %236 : vector<1x1x14x128xf32> to vector<14x128xf32>
    %238 = arith.subf %237, %192 : vector<14x128xf32>
    %239 = arith.mulf %238, %238 : vector<14x128xf32>
    %cst_133 = arith.constant dense<0.000000e+00> : vector<128xf32>
    %240 = vector.multi_reduction <add>, %239, %cst_133 [0] : vector<14x128xf32> to vector<128xf32>
    %241 = vector.shape_cast %240 : vector<128xf32> to vector<1x128xf32>
    %242 = arith.addf %235, %241 : vector<1x128xf32>
    %243 = vector.extract_strided_slice %186 {offsets = [0, 7, 0, 0], sizes = [1, 1, 14, 128], strides = [1, 1, 1, 1]} : vector<1x14x14x128xf32> to vector<1x1x14x128xf32>
    %244 = vector.shape_cast %243 : vector<1x1x14x128xf32> to vector<14x128xf32>
    %245 = arith.subf %244, %192 : vector<14x128xf32>
    %246 = arith.mulf %245, %245 : vector<14x128xf32>
    %cst_134 = arith.constant dense<0.000000e+00> : vector<128xf32>
    %247 = vector.multi_reduction <add>, %246, %cst_134 [0] : vector<14x128xf32> to vector<128xf32>
    %248 = vector.shape_cast %247 : vector<128xf32> to vector<1x128xf32>
    %249 = arith.addf %242, %248 : vector<1x128xf32>
    %250 = vector.extract_strided_slice %186 {offsets = [0, 8, 0, 0], sizes = [1, 1, 14, 128], strides = [1, 1, 1, 1]} : vector<1x14x14x128xf32> to vector<1x1x14x128xf32>
    %251 = vector.shape_cast %250 : vector<1x1x14x128xf32> to vector<14x128xf32>
    %252 = arith.subf %251, %192 : vector<14x128xf32>
    %253 = arith.mulf %252, %252 : vector<14x128xf32>
    %cst_135 = arith.constant dense<0.000000e+00> : vector<128xf32>
    %254 = vector.multi_reduction <add>, %253, %cst_135 [0] : vector<14x128xf32> to vector<128xf32>
    %255 = vector.shape_cast %254 : vector<128xf32> to vector<1x128xf32>
    %256 = arith.addf %249, %255 : vector<1x128xf32>
    %257 = vector.extract_strided_slice %186 {offsets = [0, 9, 0, 0], sizes = [1, 1, 14, 128], strides = [1, 1, 1, 1]} : vector<1x14x14x128xf32> to vector<1x1x14x128xf32>
    %258 = vector.shape_cast %257 : vector<1x1x14x128xf32> to vector<14x128xf32>
    %259 = arith.subf %258, %192 : vector<14x128xf32>
    %260 = arith.mulf %259, %259 : vector<14x128xf32>
    %cst_136 = arith.constant dense<0.000000e+00> : vector<128xf32>
    %261 = vector.multi_reduction <add>, %260, %cst_136 [0] : vector<14x128xf32> to vector<128xf32>
    %262 = vector.shape_cast %261 : vector<128xf32> to vector<1x128xf32>
    %263 = arith.addf %256, %262 : vector<1x128xf32>
    %264 = vector.extract_strided_slice %186 {offsets = [0, 10, 0, 0], sizes = [1, 1, 14, 128], strides = [1, 1, 1, 1]} : vector<1x14x14x128xf32> to vector<1x1x14x128xf32>
    %265 = vector.shape_cast %264 : vector<1x1x14x128xf32> to vector<14x128xf32>
    %266 = arith.subf %265, %192 : vector<14x128xf32>
    %267 = arith.mulf %266, %266 : vector<14x128xf32>
    %cst_137 = arith.constant dense<0.000000e+00> : vector<128xf32>
    %268 = vector.multi_reduction <add>, %267, %cst_137 [0] : vector<14x128xf32> to vector<128xf32>
    %269 = vector.shape_cast %268 : vector<128xf32> to vector<1x128xf32>
    %270 = arith.addf %263, %269 : vector<1x128xf32>
    %271 = vector.extract_strided_slice %186 {offsets = [0, 11, 0, 0], sizes = [1, 1, 14, 128], strides = [1, 1, 1, 1]} : vector<1x14x14x128xf32> to vector<1x1x14x128xf32>
    %272 = vector.shape_cast %271 : vector<1x1x14x128xf32> to vector<14x128xf32>
    %273 = arith.subf %272, %192 : vector<14x128xf32>
    %274 = arith.mulf %273, %273 : vector<14x128xf32>
    %cst_138 = arith.constant dense<0.000000e+00> : vector<128xf32>
    %275 = vector.multi_reduction <add>, %274, %cst_138 [0] : vector<14x128xf32> to vector<128xf32>
    %276 = vector.shape_cast %275 : vector<128xf32> to vector<1x128xf32>
    %277 = arith.addf %270, %276 : vector<1x128xf32>
    %278 = vector.extract_strided_slice %186 {offsets = [0, 12, 0, 0], sizes = [1, 1, 14, 128], strides = [1, 1, 1, 1]} : vector<1x14x14x128xf32> to vector<1x1x14x128xf32>
    %279 = vector.shape_cast %278 : vector<1x1x14x128xf32> to vector<14x128xf32>
    %280 = arith.subf %279, %192 : vector<14x128xf32>
    %281 = arith.mulf %280, %280 : vector<14x128xf32>
    %cst_139 = arith.constant dense<0.000000e+00> : vector<128xf32>
    %282 = vector.multi_reduction <add>, %281, %cst_139 [0] : vector<14x128xf32> to vector<128xf32>
    %283 = vector.shape_cast %282 : vector<128xf32> to vector<1x128xf32>
    %284 = arith.addf %277, %283 : vector<1x128xf32>
    %285 = vector.extract_strided_slice %186 {offsets = [0, 13, 0, 0], sizes = [1, 1, 14, 128], strides = [1, 1, 1, 1]} : vector<1x14x14x128xf32> to vector<1x1x14x128xf32>
    %286 = vector.shape_cast %285 : vector<1x1x14x128xf32> to vector<14x128xf32>
    %287 = arith.subf %286, %192 : vector<14x128xf32>
    %288 = arith.mulf %287, %287 : vector<14x128xf32>
    %cst_140 = arith.constant dense<0.000000e+00> : vector<128xf32>
    %289 = vector.multi_reduction <add>, %288, %cst_140 [0] : vector<14x128xf32> to vector<128xf32>
    %290 = vector.shape_cast %289 : vector<128xf32> to vector<1x128xf32>
    %291 = arith.addf %284, %290 : vector<1x128xf32>
    %cst_141 = arith.constant 0.00510204071 : f32
    %292 = vector.broadcast %cst_141 : f32 to vector<1x128xf32>
    %293 = arith.mulf %291, %292 : vector<1x128xf32>
    %cst_142 = arith.constant 1.000000e-03 : f32
    %294 = vector.broadcast %cst_142 : f32 to vector<1x128xf32>
    %295 = arith.addf %293, %294 : vector<1x128xf32>
    %296 = math.rsqrt %295 : vector<1x128xf32>
    %c0_143 = arith.constant 0 : index
    %c0_144 = arith.constant 0 : index
    %297 = vector.load %arg3[%c0_143, %c0_144] : memref<1x128xf32, #tpu.memory_space<vmem>>, vector<1x128xf32>
    %298 = arith.mulf %296, %297 : vector<1x128xf32>
    %c0_145 = arith.constant 0 : index
    %c0_146 = arith.constant 0 : index
    %299 = vector.load %arg4[%c0_145, %c0_146] : memref<1x128xf32, #tpu.memory_space<vmem>>, vector<1x128xf32>
    %300 = arith.mulf %190, %298 : vector<1x128xf32>
    %301 = arith.subf %299, %300 : vector<1x128xf32>
    %302 = vector.shape_cast %298 : vector<1x128xf32> to vector<1x1x1x128xf32>
    %303 = vector.shape_cast %301 : vector<1x128xf32> to vector<1x1x1x128xf32>
    %304 = vector.broadcast %302 : vector<1x1x1x128xf32> to vector<1x14x14x128xf32>
    %305 = arith.mulf %186, %304 : vector<1x14x14x128xf32>
    %306 = vector.broadcast %303 : vector<1x1x1x128xf32> to vector<1x14x14x128xf32>
    %307 = arith.addf %305, %306 : vector<1x14x14x128xf32>
    %cst_147 = arith.constant 0.000000e+00 : f32
    %308 = vector.broadcast %cst_147 : f32 to vector<1x14x14x128xf32>
    %309 = arith.maximumf %307, %308 : vector<1x14x14x128xf32>
    %c0_148 = arith.constant 0 : index
    %c0_149 = arith.constant 0 : index
    %c0_150 = arith.constant 0 : index
    %c0_151 = arith.constant 0 : index
    %310 = vector.load %arg5[%c0_148, %c0_149, %c0_150, %c0_151] : memref<1x14x14x128xf32, #tpu.memory_space<vmem>>, vector<1x14x14x128xf32>
    tpu.vector_store %arg5[%c0_148, %c0_149, %c0_150, %c0_151], %309 {strides = array<i32>} : memref<1x14x14x128xf32, #tpu.memory_space<vmem>>, vector<1x14x14x128xf32>,
    return
  }
  func.func @transform_0(%arg0: i32) -> (i32, i32, i32, i32) {
    %c0_i32 = arith.constant 0 : i32
    %c0_i32_0 = arith.constant 0 : i32
    %c0_i32_1 = arith.constant 0 : i32
    %c0_i32_2 = arith.constant 0 : i32
    return %c0_i32, %c0_i32_0, %c0_i32_1, %arg0 : i32, i32, i32, i32
  }
  func.func @transform_1(%arg0: i32) -> (i32, i32) {
    %c0_i32 = arith.constant 0 : i32
    %c0_i32_0 = arith.constant 0 : i32
    return %c0_i32, %arg0 : i32, i32
  }
  func.func @transform_2(%arg0: i32) -> (i32, i32) {
    %c0_i32 = arith.constant 0 : i32
    %c0_i32_0 = arith.constant 0 : i32
    return %c0_i32, %arg0 : i32, i32
  }
  func.func @transform_3(%arg0: i32) -> (i32, i32) {
    %c0_i32 = arith.constant 0 : i32
    %c0_i32_0 = arith.constant 0 : i32
    return %c0_i32, %arg0 : i32, i32
  }
  func.func @transform_4(%arg0: i32) -> (i32, i32, i32, i32) {
    %c0_i32 = arith.constant 0 : i32
    %c0_i32_0 = arith.constant 0 : i32
    %c0_i32_1 = arith.constant 0 : i32
    %c0_i32_2 = arith.constant 0 : i32
    return %c0_i32, %c0_i32_0, %c0_i32_1, %arg0 : i32, i32, i32, i32
  }
}

</mosaic_0001>

<llo_original>
// kernel: _fused_impl.1
$region0: #{_fused_impl.1}
  #allocation0 [shape = 'u32[]', space=smem, size = 0x4, offset = 0x4, fixed_abs, tag = 'smem constant byte address 0x4 - core index']
  #allocation1 [shape = 'u32[144,128]{1,0:T(1,128)}', space=vmem, size = 0x12000, scoped, tag = 'internal scratch']
  #allocation2 [shape = 'f32[1,18,18,128]{3,2,1,0:T(8,128)}', space=vmem, size = 0x36000, scoped, tag = 'scratch operand']
  %s0 = inlined_call_operand.vmem [shape: f32[1,14,14,384], index: 0, kind: input, shape index: {}]
  %s1 = inlined_call_operand.vmem [shape: f32[25,384], index: 1, kind: input, shape index: {}]
  %s2 = inlined_call_operand.vmem [shape: f32[1,384], index: 2, kind: input, shape index: {}]
  %s3 = inlined_call_operand.vmem [shape: f32[1,384], index: 3, kind: input, shape index: {}]
  %s4 = inlined_call_operand.vmem [shape: f32[1,14,14,384], index: 4, kind: output, shape index: {}]
  %s5 = sld [smem:[#allocation0]]
  $region159: #{_fused_impl.1} parent=0
    _
  %s7 = ssub.s32 1, %s5
  %s8 = scalar_select 0, %s7, %s5
  $region1: #{_fused_impl.1} parent=0
    #allocation3 [shape = 'u8[229376]{0}', space=vmem, size = 0x38000, scoped, tag = 'input window, operand 0']
    #allocation4 [shape = 'u8[32768]{0}', space=vmem, size = 0x8000, scoped, tag = 'input window, operand 1']
    #allocation5 [shape = 'u8[229376]{0}', space=vmem, size = 0x38000, scoped, tag = 'output window, operand 0']
    loop: start=0, step=1, limit=5
    $region2: #{_fused_impl.1} parent=1 // loop_pre_header
      _
    $region3: #{_fused_impl.1} parent=1 // loop_header
      %s10 = sphi 0, %s14
      %p11 = scmp.ge.s32.totalorder %s10, 5
      %s20 = sphi 0, %s22
      %s23 = sphi 0, %s20
      %s24 = sphi 0, %s23
      %s40 = sphi 0, %s24
      %s46 = sphi 0, %s48
      %s49 = sphi 0, %s46
      %s50 = sphi 0, %s49
      %s66 = sphi 0, %s50
      %s72 = sphi 0, %s74
      %s75 = sphi 0, %s72
      %s76 = sphi 0, %s75
      %s92 = sphi 0, %s76
      %s98 = sphi 0, %s100
      %s101 = sphi 0, %s98
      %s102 = sphi 0, %s101
      %s118 = sphi 0, %s102
      %s124 = sphi 0, %s126
      %s127 = sphi 0, %s124
      %s128 = sphi 0, %s127
      %s144 = sphi 0, %s128
    $region4: #{_fused_impl.1} parent=1 // loop_header_branch
      %13 = sbr.rel (%p11) target = $region8
    $region5: #{_fused_impl.1} parent=1 // loop_body
      %s15 = ssub.s32 %s10, 1
      %s16 = ssub.s32 %s10, 2
      %s17 = sadd.s32 %s10, 1
      %s18 = ssub.s32 %s10, %s17
      %p19 = scmp.eq.s32.totalorder %s18, 0
      %s21 = sadd.s32 %s20, 1
      %s22 = scalar_select %p19, %s20, %s21
      %p25 = pneg %p19
      %p26 = scmp.eq.s32.totalorder %s10, 2
      %p27 = por %p25, %p26
      %p28 = scmp.ne.s32.totalorder %s20, %s23
      %p29 = scmp.eq.s32.totalorder %s10, 0
      %p30 = por %p28, %p29
      %p31 = scmp.ne.s32.totalorder %s20, %s23
      %p32 = scmp.eq.s32.totalorder %s15, 2
      %p33 = por %p31, %p32
      %p34 = scmp.ne.s32.totalorder %s23, %s24
      %p35 = scmp.eq.s32.totalorder %s15, 0
      %p36 = por %p34, %p35
      %p37 = scmp.ne.s32.totalorder %s23, %s24
      %p38 = scmp.eq.s32.totalorder %s16, 2
      %p39 = por %p37, %p38
      %p41 = scmp.ne.s32.totalorder %s24, %s40
      %p42 = scmp.eq.s32.totalorder %s16, 0
      %p43 = por %p41, %p42
      %s44 = ssub.s32 %s10, %s17
      %p45 = scmp.eq.s32.totalorder %s44, 0
      %s47 = sadd.s32 %s46, 1
      %s48 = scalar_select %p45, %s46, %s47
      %p51 = pneg %p45
      %p52 = scmp.eq.s32.totalorder %s10, 2
      %p53 = por %p51, %p52
      %p54 = scmp.ne.s32.totalorder %s46, %s49
      %p55 = scmp.eq.s32.totalorder %s10, 0
      %p56 = por %p54, %p55
      %p57 = scmp.ne.s32.totalorder %s46, %s49
      %p58 = scmp.eq.s32.totalorder %s15, 2
      %p59 = por %p57, %p58
      %p60 = scmp.ne.s32.totalorder %s49, %s50
      %p61 = scmp.eq.s32.totalorder %s15, 0
      %p62 = por %p60, %p61
      %p63 = scmp.ne.s32.totalorder %s49, %s50
      %p64 = scmp.eq.s32.totalorder %s16, 2
      %p65 = por %p63, %p64
      %p67 = scmp.ne.s32.totalorder %s50, %s66
      %p68 = scmp.eq.s32.totalorder %s16, 0
      %p69 = por %p67, %p68
      %s70 = ssub.s32 %s10, %s17
      %p71 = scmp.eq.s32.totalorder %s70, 0
      %s73 = sadd.s32 %s72, 1
      %s74 = scalar_select %p71, %s72, %s73
      %p77 = pneg %p71
      %p78 = scmp.eq.s32.totalorder %s10, 2
      %p79 = por %p77, %p78
      %p80 = scmp.ne.s32.totalorder %s72, %s75
      %p81 = scmp.eq.s32.totalorder %s10, 0
      %p82 = por %p80, %p81
      %p83 = scmp.ne.s32.totalorder %s72, %s75
      %p84 = scmp.eq.s32.totalorder %s15, 2
      %p85 = por %p83, %p84
      %p86 = scmp.ne.s32.totalorder %s75, %s76
      %p87 = scmp.eq.s32.totalorder %s15, 0
      %p88 = por %p86, %p87
      %p89 = scmp.ne.s32.totalorder %s75, %s76
      %p90 = scmp.eq.s32.totalorder %s16, 2
      %p91 = por %p89, %p90
      %p93 = scmp.ne.s32.totalorder %s76, %s92
      %p94 = scmp.eq.s32.totalorder %s16, 0
      %p95 = por %p93, %p94
      %s96 = ssub.s32 %s10, %s17
      %p97 = scmp.eq.s32.totalorder %s96, 0
      %s99 = sadd.s32 %s98, 1
      %s100 = scalar_select %p97, %s98, %s99
      %p103 = pneg %p97
      %p104 = scmp.eq.s32.totalorder %s10, 2
      %p105 = por %p103, %p104
      %p106 = scmp.ne.s32.totalorder %s98, %s101
      %p107 = scmp.eq.s32.totalorder %s10, 0
      %p108 = por %p106, %p107
      %p109 = scmp.ne.s32.totalorder %s98, %s101
      %p110 = scmp.eq.s32.totalorder %s15, 2
      %p111 = por %p109, %p110
      %p112 = scmp.ne.s32.totalorder %s101, %s102
      %p113 = scmp.eq.s32.totalorder %s15, 0
      %p114 = por %p112, %p113
      %p115 = scmp.ne.s32.totalorder %s101, %s102
      %p116 = scmp.eq.s32.totalorder %s16, 2
      %p117 = por %p115, %p116
      %p119 = scmp.ne.s32.totalorder %s102, %s118
      %p120 = scmp.eq.s32.totalorder %s16, 0
      %p121 = por %p119, %p120
      %s122 = ssub.s32 %s10, %s17
      %p123 = scmp.eq.s32.totalorder %s122, 0
      %s125 = sadd.s32 %s124, 1
      %s126 = scalar_select %p123, %s124, %s125
      %p129 = pneg %p123
      %p130 = scmp.eq.s32.totalorder %s10, 2
      %p131 = por %p129, %p130
      %p132 = scmp.ne.s32.totalorder %s124, %s127
      %p133 = scmp.eq.s32.totalorder %s10, 0
      %p134 = por %p132, %p133
      %p135 = scmp.ne.s32.totalorder %s124, %s127
      %p136 = scmp.eq.s32.totalorder %s15, 2
      %p137 = por %p135, %p136
      %p138 = scmp.ne.s32.totalorder %s127, %s128
      %p139 = scmp.eq.s32.totalorder %s15, 0
      %p140 = por %p138, %p139
      %p141 = scmp.ne.s32.totalorder %s127, %s128
      %p142 = scmp.eq.s32.totalorder %s16, 2
      %p143 = por %p141, %p142
      %p145 = scmp.ne.s32.totalorder %s128, %s144
      %p146 = scmp.eq.s32.totalorder %s16, 0
      %p147 = por %p145, %p146
      %p148 = scmp.le.s32.totalorder 1, %s10
      %p149 = scmp.lt.s32.totalorder %s10, 4
      %p150 = pnand %p148, %p149
      %p151 = pneg %p150
      // Predicated region
      $region9: #{_fused_impl.1} parent=5 // pred_check
        _
      $region10: #{_fused_impl.1} parent=5 // pred_check_branch
        %153 = sbr.rel (%p150) target = $region12
      $region11: #{_fused_impl.1} parent=5 // pred_region
        %s154 = ssub.s32 %s10, 1
      $region12: #{_fused_impl.1} parent=5 // pred_fallthru
        _
      %p155 = scmp.lt.s32.totalorder %s10, 3
      // Predicated region
      $region13: #{_fused_impl.1} parent=5 // pred_check
        %p156 = pneg %p155
      $region14: #{_fused_impl.1} parent=5 // pred_check_branch
        %158 = sbr.rel (%p156) target = $region16
      $region15: #{_fused_impl.1} parent=5 // pred_region
        // Predicated region
        $region17: #{_fused_impl.1} parent=15 // pred_check
          %p159 = pneg %p30
        $region18: #{_fused_impl.1} parent=15 // pred_check_branch
          %161 = sbr.rel (%p159) target = $region20
        $region19: #{_fused_impl.1} parent=15 // pred_region
          %s162 = sand.u32 %s20, 1
          %s163 = sand.u32 %s20, 1
          %s164 = smul.addr %s163, 224
          %s165 = scalar_lea.vmem [#allocation3], %s164
          %s166 = smul.addr %s10, 8
          %s167 = scalar_lea.vmem %s0, %s166
          // Predicated region
          $region21: #{_fused_impl.1} parent=19 // pred_check
            _
          $region22: #{_fused_impl.1} parent=19 // pred_check_branch
            %169 = sbr.rel (0) target = $region24
          $region23: #{_fused_impl.1} parent=19 // pred_region
            // Predicated region
            $region25: #{_fused_impl.1} parent=23 // pred_check
              _
            $region26: #{_fused_impl.1} parent=23 // pred_check_branch
              %171 = sbr.rel (0) target = $region28
            $region27: #{_fused_impl.1} parent=23 // pred_region
              // Predicated region
              $region40: #{_fused_impl.1} parent=27 // pred_check
                _
              $region41: #{_fused_impl.1} parent=27 // pred_check_branch
                %241 = sbr.rel (0) target = $region43
              $region42: #{_fused_impl.1} parent=27 // pred_region
                loop: start=0, step=1, limit=1
                $region44: #{_fused_impl.1} parent=42 // loop_pre_header
                  _
                $region45: #{_fused_impl.1} parent=42 // loop_header
                  %s243 = sphi 0, %s247
                  %p244 = scmp.ge.s32.totalorder %s243, 1
                  %s248 = sphi %s167, %s167
                  %s249 = sphi %s165, %s165
                $region46: #{_fused_impl.1} parent=42 // loop_header_branch
                  %246 = sbr.rel (%p244) target = $region50
                $region47: #{_fused_impl.1} parent=42 // loop_body
                  %v250 = vld [vmem:[%s248] sm:$0xff]
                  %251 = vst [vmem:[%s249] sm:$0xff] %v250
                  %v252 = vld [vmem:[%s248 + $0x18] sm:$0xff]
                  %253 = vst [vmem:[%s249 + $0x8] sm:$0xff] %v252
                  %v254 = vld [vmem:[%s248 + $0x30] sm:$0xff]
                  %255 = vst [vmem:[%s249 + $0x10] sm:$0xff] %v254
                  %v256 = vld [vmem:[%s248 + $0x48] sm:$0xff]
                  %257 = vst [vmem:[%s249 + $0x18] sm:$0xff] %v256
                  %v258 = vld [vmem:[%s248 + $0x60] sm:$0xff]
                  %259 = vst [vmem:[%s249 + $0x20] sm:$0xff] %v258
                  %v260 = vld [vmem:[%s248 + $0x78] sm:$0xff]
                  %261 = vst [vmem:[%s249 + $0x28] sm:$0xff] %v260
                  %v262 = vld [vmem:[%s248 + $0x90] sm:$0xff]
                  %263 = vst [vmem:[%s249 + $0x30] sm:$0xff] %v262
                  %v264 = vld [vmem:[%s248 + $0xa8] sm:$0xff]
                  %265 = vst [vmem:[%s249 + $0x38] sm:$0xff] %v264
                  %v266 = vld [vmem:[%s248 + $0xc0] sm:$0xff]
                  %267 = vst [vmem:[%s249 + $0x40] sm:$0xff] %v266
                  %v268 = vld [vmem:[%s248 + $0xd8] sm:$0xff]
                  %269 = vst [vmem:[%s249 + $0x48] sm:$0xff] %v268
                  %v270 = vld [vmem:[%s248 + $0xf0] sm:$0xff]
                  %271 = vst [vmem:[%s249 + $0x50] sm:$0xff] %v270
                  %v272 = vld [vmem:[%s248 + $0x108] sm:$0xff]
                  %273 = vst [vmem:[%s249 + $0x58] sm:$0xff] %v272
                  %v274 = vld [vmem:[%s248 + $0x120] sm:$0xff]
                  %275 = vst [vmem:[%s249 + $0x60] sm:$0xff] %v274
                  %v276 = vld [vmem:[%s248 + $0x138] sm:$0xff]
                  %277 = vst [vmem:[%s249 + $0x68] sm:$0xff] %v276
                  %v278 = vld [vmem:[%s248 + $0x150] sm:$0xff]
                  %279 = vst [vmem:[%s249 + $0x70] sm:$0xff] %v278
                  %v280 = vld [vmem:[%s248 + $0x168] sm:$0xff]
                  %281 = vst [vmem:[%s249 + $0x78] sm:$0xff] %v280
                  %v282 = vld [vmem:[%s248 + $0x180] sm:$0xff]
                  %283 = vst [vmem:[%s249 + $0x80] sm:$0xff] %v282
                  %v284 = vld [vmem:[%s248 + $0x198] sm:$0xff]
                  %285 = vst [vmem:[%s249 + $0x88] sm:$0xff] %v284
                  %v286 = vld [vmem:[%s248 + $0x1b0] sm:$0xff]
                  %287 = vst [vmem:[%s249 + $0x90] sm:$0xff] %v286
                  %v288 = vld [vmem:[%s248 + $0x1c8] sm:$0xff]
                  %289 = vst [vmem:[%s249 + $0x98] sm:$0xff] %v288
                  %v290 = vld [vmem:[%s248 + $0x1e0] sm:$0xff]
                  %291 = vst [vmem:[%s249 + $0xa0] sm:$0xff] %v290
                  %v292 = vld [vmem:[%s248 + $0x1f8] sm:$0xff]
                  %293 = vst [vmem:[%s249 + $0xa8] sm:$0xff] %v292
                  %v294 = vld [vmem:[%s248 + $0x210] sm:$0xff]
                  %295 = vst [vmem:[%s249 + $0xb0] sm:$0xff] %v294
                  %v296 = vld [vmem:[%s248 + $0x228] sm:$0xff]
                  %297 = vst [vmem:[%s249 + $0xb8] sm:$0xff] %v296
                  %v298 = vld [vmem:[%s248 + $0x240] sm:$0xff]
                  %299 = vst [vmem:[%s249 + $0xc0] sm:$0xff] %v298
                  %v300 = vld [vmem:[%s248 + $0x258] sm:$0xff]
                  %301 = vst [vmem:[%s249 + $0xc8] sm:$0xff] %v300
                  %v302 = vld [vmem:[%s248 + $0x270] sm:$0xff]
                  %303 = vst [vmem:[%s249 + $0xd0] sm:$0xff] %v302
                  %v304 = vld [vmem:[%s248 + $0x288] sm:$0xff]
                  %305 = vst [vmem:[%s249 + $0xd8] sm:$0xff] %v304
                $region48: #{_fused_impl.1} parent=42 // loop_footer
                  %s247 = sadd.s32 1, %s243
                $region49: #{_fused_impl.1} parent=42 // loop_footer_branch
                  %242 = sbr.rel target = $region45
                $region50: #{_fused_impl.1} parent=42 // loop_exit
                  _
              $region43: #{_fused_impl.1} parent=27 // pred_fallthru
                _
              // Predicated region
              $region51: #{_fused_impl.1} parent=27 // pred_check
                _
              $region52: #{_fused_impl.1} parent=27 // pred_check_branch
                %307 = sbr.rel target = $region54
              $region53: #{_fused_impl.1} parent=27 // pred_region
                _
              $region54: #{_fused_impl.1} parent=27 // pred_fallthru
                _
            $region28: #{_fused_impl.1} parent=23 // pred_fallthru
              _
            // Predicated region
            $region29: #{_fused_impl.1} parent=23 // pred_check
              _
            $region30: #{_fused_impl.1} parent=23 // pred_check_branch
              %173 = sbr.rel target = $region32
            $region31: #{_fused_impl.1} parent=23 // pred_region
              %s175 = ssub.s32 256, 1
              loop: start=0, step=1, limit=1
              $region33: #{_fused_impl.1} parent=31 // loop_pre_header
                _
              $region34: #{_fused_impl.1} parent=31 // loop_header
                %s177 = sphi 0, %s181
                %p178 = scmp.ge.s32.totalorder %s177, 1
                %s182 = sphi %s167, %s167
                %s183 = sphi %s165, %s165
              $region35: #{_fused_impl.1} parent=31 // loop_header_branch
                %180 = sbr.rel (%p178) target = $region39
              $region36: #{_fused_impl.1} parent=31 // loop_body
                %v184 = vld [vmem:[%s182] sm:%s175]
                %185 = vst [vmem:[%s183] sm:%s175] %v184
                %v186 = vld [vmem:[%s182 + $0x18] sm:%s175]
                %187 = vst [vmem:[%s183 + $0x8] sm:%s175] %v186
                %v188 = vld [vmem:[%s182 + $0x30] sm:%s175]
                %189 = vst [vmem:[%s183 + $0x10] sm:%s175] %v188
                %v190 = vld [vmem:[%s182 + $0x48] sm:%s175]
                %191 = vst [vmem:[%s183 + $0x18] sm:%s175] %v190
                %v192 = vld [vmem:[%s182 + $0x60] sm:%s175]
                %193 = vst [vmem:[%s183 + $0x20] sm:%s175] %v192
                %v194 = vld [vmem:[%s182 + $0x78] sm:%s175]
                %195 = vst [vmem:[%s183 + $0x28] sm:%s175] %v194
                %v196 = vld [vmem:[%s182 + $0x90] sm:%s175]
                %197 = vst [vmem:[%s183 + $0x30] sm:%s175] %v196
                %v198 = vld [vmem:[%s182 + $0xa8] sm:%s175]
                %199 = vst [vmem:[%s183 + $0x38] sm:%s175] %v198
                %v200 = vld [vmem:[%s182 + $0xc0] sm:%s175]
                %201 = vst [vmem:[%s183 + $0x40] sm:%s175] %v200
                %v202 = vld [vmem:[%s182 + $0xd8] sm:%s175]
                %203 = vst [vmem:[%s183 + $0x48] sm:%s175] %v202
                %v204 = vld [vmem:[%s182 + $0xf0] sm:%s175]
                %205 = vst [vmem:[%s183 + $0x50] sm:%s175] %v204
                %v206 = vld [vmem:[%s182 + $0x108] sm:%s175]
                %207 = vst [vmem:[%s183 + $0x58] sm:%s175] %v206
                %v208 = vld [vmem:[%s182 + $0x120] sm:%s175]
                %209 = vst [vmem:[%s183 + $0x60] sm:%s175] %v208
                %v210 = vld [vmem:[%s182 + $0x138] sm:%s175]
                %211 = vst [vmem:[%s183 + $0x68] sm:%s175] %v210
                %v212 = vld [vmem:[%s182 + $0x150] sm:%s175]
                %213 = vst [vmem:[%s183 + $0x70] sm:%s175] %v212
                %v214 = vld [vmem:[%s182 + $0x168] sm:%s175]
                %215 = vst [vmem:[%s183 + $0x78] sm:%s175] %v214
                %v216 = vld [vmem:[%s182 + $0x180] sm:%s175]
                %217 = vst [vmem:[%s183 + $0x80] sm:%s175] %v216
                %v218 = vld [vmem:[%s182 + $0x198] sm:%s175]
                %219 = vst [vmem:[%s183 + $0x88] sm:%s175] %v218
                %v220 = vld [vmem:[%s182 + $0x1b0] sm:%s175]
                %221 = vst [vmem:[%s183 + $0x90] sm:%s175] %v220
                %v222 = vld [vmem:[%s182 + $0x1c8] sm:%s175]
                %223 = vst [vmem:[%s183 + $0x98] sm:%s175] %v222
                %v224 = vld [vmem:[%s182 + $0x1e0] sm:%s175]
                %225 = vst [vmem:[%s183 + $0xa0] sm:%s175] %v224
                %v226 = vld [vmem:[%s182 + $0x1f8] sm:%s175]
                %227 = vst [vmem:[%s183 + $0xa8] sm:%s175] %v226
                %v228 = vld [vmem:[%s182 + $0x210] sm:%s175]
                %229 = vst [vmem:[%s183 + $0xb0] sm:%s175] %v228
                %v230 = vld [vmem:[%s182 + $0x228] sm:%s175]
                %231 = vst [vmem:[%s183 + $0xb8] sm:%s175] %v230
                %v232 = vld [vmem:[%s182 + $0x240] sm:%s175]
                %233 = vst [vmem:[%s183 + $0xc0] sm:%s175] %v232
                %v234 = vld [vmem:[%s182 + $0x258] sm:%s175]
                %235 = vst [vmem:[%s183 + $0xc8] sm:%s175] %v234
                %v236 = vld [vmem:[%s182 + $0x270] sm:%s175]
                %237 = vst [vmem:[%s183 + $0xd0] sm:%s175] %v236
                %v238 = vld [vmem:[%s182 + $0x288] sm:%s175]
                %239 = vst [vmem:[%s183 + $0xd8] sm:%s175] %v238
              $region37: #{_fused_impl.1} parent=31 // loop_footer
                %s181 = sadd.s32 1, %s177
              $region38: #{_fused_impl.1} parent=31 // loop_footer_branch
                %176 = sbr.rel target = $region34
              $region39: #{_fused_impl.1} parent=31 // loop_exit
                _
            $region32: #{_fused_impl.1} parent=23 // pred_fallthru
              _
          $region24: #{_fused_impl.1} parent=19 // pred_fallthru
            _
          %308 = vnop
        $region20: #{_fused_impl.1} parent=15 // pred_fallthru
          _
        // Predicated region
        $region55: #{_fused_impl.1} parent=15 // pred_check
          %p309 = pneg %p56
        $region56: #{_fused_impl.1} parent=15 // pred_check_branch
          %311 = sbr.rel (%p309) target = $region58
        $region57: #{_fused_impl.1} parent=15 // pred_region
          %s312 = sand.u32 %s46, 1
          %s313 = sand.u32 %s46, 1
          %s314 = smul.addr %s313, 32
          %s315 = scalar_lea.vmem [#allocation4], %s314
          %s316 = smul.addr %s10, 8
          %s317 = scalar_lea.vmem %s1, %s316
          // Predicated region
          $region59: #{_fused_impl.1} parent=57 // pred_check
            _
          $region60: #{_fused_impl.1} parent=57 // pred_check_branch
            %319 = sbr.rel (0) target = $region62
          $region61: #{_fused_impl.1} parent=57 // pred_region
            // Predicated region
            $region63: #{_fused_impl.1} parent=61 // pred_check
              _
            $region64: #{_fused_impl.1} parent=61 // pred_check_branch
              %321 = sbr.rel (0) target = $region66
            $region65: #{_fused_impl.1} parent=61 // pred_region
              // Predicated region
              $region78: #{_fused_impl.1} parent=65 // pred_check
                _
              $region79: #{_fused_impl.1} parent=65 // pred_check_branch
                %343 = sbr.rel (0) target = $region81
              $region80: #{_fused_impl.1} parent=65 // pred_region
                loop: start=0, step=1, limit=1
                $region82: #{_fused_impl.1} parent=80 // loop_pre_header
                  _
                $region83: #{_fused_impl.1} parent=80 // loop_header
                  %s345 = sphi 0, %s349
                  %p346 = scmp.ge.s32.totalorder %s345, 1
                  %s350 = sphi %s317, %s317
                  %s351 = sphi %s315, %s315
                $region84: #{_fused_impl.1} parent=80 // loop_header_branch
                  %348 = sbr.rel (%p346) target = $region88
                $region85: #{_fused_impl.1} parent=80 // loop_body
                  %v352 = vld [vmem:[%s350] sm:$0xff]
                  %353 = vst [vmem:[%s351] sm:$0xff] %v352
                  %v354 = vld [vmem:[%s350 + $0x18] sm:$0xff]
                  %355 = vst [vmem:[%s351 + $0x8] sm:$0xff] %v354
                  %v356 = vld [vmem:[%s350 + $0x30] sm:$0xff]
                  %357 = vst [vmem:[%s351 + $0x10] sm:$0xff] %v356
                  %v358 = vld [vmem:[%s350 + $0x48] sm:$0xff]
                  %359 = vst [vmem:[%s351 + $0x18] sm:$0xff] %v358
                $region86: #{_fused_impl.1} parent=80 // loop_footer
                  %s349 = sadd.s32 1, %s345
                $region87: #{_fused_impl.1} parent=80 // loop_footer_branch
                  %344 = sbr.rel target = $region83
                $region88: #{_fused_impl.1} parent=80 // loop_exit
                  _
              $region81: #{_fused_impl.1} parent=65 // pred_fallthru
                _
              // Predicated region
              $region89: #{_fused_impl.1} parent=65 // pred_check
                _
              $region90: #{_fused_impl.1} parent=65 // pred_check_branch
                %361 = sbr.rel target = $region92
              $region91: #{_fused_impl.1} parent=65 // pred_region
                _
              $region92: #{_fused_impl.1} parent=65 // pred_fallthru
                _
            $region66: #{_fused_impl.1} parent=61 // pred_fallthru
              _
            // Predicated region
            $region67: #{_fused_impl.1} parent=61 // pred_check
              _
            $region68: #{_fused_impl.1} parent=61 // pred_check_branch
              %323 = sbr.rel target = $region70
            $region69: #{_fused_impl.1} parent=61 // pred_region
              %s325 = ssub.s32 256, 1
              loop: start=0, step=1, limit=1
              $region71: #{_fused_impl.1} parent=69 // loop_pre_header
                _
              $region72: #{_fused_impl.1} parent=69 // loop_header
                %s327 = sphi 0, %s331
                %p328 = scmp.ge.s32.totalorder %s327, 1
                %s332 = sphi %s317, %s317
                %s333 = sphi %s315, %s315
              $region73: #{_fused_impl.1} parent=69 // loop_header_branch
                %330 = sbr.rel (%p328) target = $region77
              $region74: #{_fused_impl.1} parent=69 // loop_body
                %v334 = vld [vmem:[%s332] sm:%s325]
                %335 = vst [vmem:[%s333] sm:%s325] %v334
                %v336 = vld [vmem:[%s332 + $0x18] sm:%s325]
                %337 = vst [vmem:[%s333 + $0x8] sm:%s325] %v336
                %v338 = vld [vmem:[%s332 + $0x30] sm:%s325]
                %339 = vst [vmem:[%s333 + $0x10] sm:%s325] %v338
                %v340 = vld [vmem:[%s332 + $0x48] sm:%s325]
                %341 = vst [vmem:[%s333 + $0x18] sm:%s325] %v340
              $region75: #{_fused_impl.1} parent=69 // loop_footer
                %s331 = sadd.s32 1, %s327
              $region76: #{_fused_impl.1} parent=69 // loop_footer_branch
                %326 = sbr.rel target = $region72
              $region77: #{_fused_impl.1} parent=69 // loop_exit
                _
            $region70: #{_fused_impl.1} parent=61 // pred_fallthru
              _
          $region62: #{_fused_impl.1} parent=57 // pred_fallthru
            _
          %362 = vnop
        $region58: #{_fused_impl.1} parent=15 // pred_fallthru
          _
        // Predicated region
        $region93: #{_fused_impl.1} parent=15 // pred_check
          %p363 = pneg %p82
        $region94: #{_fused_impl.1} parent=15 // pred_check_branch
          %365 = sbr.rel (%p363) target = $region96
        $region95: #{_fused_impl.1} parent=15 // pred_region
          %p366 = scmp.lt.s32.totalorder %s10, 2
          %s367 = scalar_select %p366, %s10, 2
          %s368 = scalar_lea.vmem %s2, %s367
        $region96: #{_fused_impl.1} parent=15 // pred_fallthru
          _
        // Predicated region
        $region97: #{_fused_impl.1} parent=15 // pred_check
          %p369 = pneg %p108
        $region98: #{_fused_impl.1} parent=15 // pred_check_branch
          %371 = sbr.rel (%p369) target = $region100
        $region99: #{_fused_impl.1} parent=15 // pred_region
          %p372 = scmp.lt.s32.totalorder %s10, 2
          %s373 = scalar_select %p372, %s10, 2
          %s374 = scalar_lea.vmem %s3, %s373
        $region100: #{_fused_impl.1} parent=15 // pred_fallthru
          _
      $region16: #{_fused_impl.1} parent=5 // pred_fallthru
        _
      %p375 = scmp.le.s32.totalorder 1, %s10
      %p376 = scmp.lt.s32.totalorder %s10, 4
      %p377 = pnand %p375, %p376
      %p378 = pneg %p377
      // Predicated region
      $region101: #{_fused_impl.1} parent=5 // pred_check
        _
      $region102: #{_fused_impl.1} parent=5 // pred_check_branch
        %380 = sbr.rel (%p377) target = $region104
      $region103: #{_fused_impl.1} parent=5 // pred_region
        %s381 = ssub.s32 %s10, 1
        %s382 = sand.u32 %s23, 1
        %s383 = sand.u32 %s23, 1
        %s384 = smul.addr %s383, 224
        %s385 = scalar_lea.vmem [#allocation3], %s384
        // Predicated region
        $region105: #{_fused_impl.1} parent=103 // pred_check
          %p386 = pneg %p36
        $region106: #{_fused_impl.1} parent=103 // pred_check_branch
          %388 = sbr.rel (%p386) target = $region108
        $region107: #{_fused_impl.1} parent=103 // pred_region
          _
        $region108: #{_fused_impl.1} parent=103 // pred_fallthru
          _
        %s389 = sand.u32 %s49, 1
        %s390 = sand.u32 %s49, 1
        %s391 = smul.addr %s390, 32
        %s392 = scalar_lea.vmem [#allocation4], %s391
        // Predicated region
        $region109: #{_fused_impl.1} parent=103 // pred_check
          %p393 = pneg %p62
        $region110: #{_fused_impl.1} parent=103 // pred_check_branch
          %395 = sbr.rel (%p393) target = $region112
        $region111: #{_fused_impl.1} parent=103 // pred_region
          _
        $region112: #{_fused_impl.1} parent=103 // pred_fallthru
          _
        %s396 = sand.u32 %s23, 1
        %s397 = sand.u32 %s23, 1
        %s398 = smul.addr %s397, 224
        %s399 = scalar_lea.vmem [#allocation3], %s398
        %p400 = pneg %p36
        %p401 = pneg %p33
        %s402 = sand.u32 %s49, 1
        %s403 = sand.u32 %s49, 1
        %s404 = smul.addr %s403, 32
        %s405 = scalar_lea.vmem [#allocation4], %s404
        %p406 = pneg %p62
        %p407 = pneg %p59
        %p408 = scmp.lt.s32.totalorder %s15, 2
        %s409 = scalar_select %p408, %s15, 2
        %s410 = scalar_lea.vmem %s2, %s409
        %p411 = pneg %p88
        %p412 = pneg %p85
        %p413 = scmp.lt.s32.totalorder %s15, 2
        %s414 = scalar_select %p413, %s15, 2
        %s415 = scalar_lea.vmem %s3, %s414
        %p416 = pneg %p114
        %p417 = pneg %p111
        %p418 = pneg %p140
        %p419 = pneg %p137
        %s420 = sand.u32 %s127, 1
        %s421 = sand.u32 %s127, 1
        %s422 = smul.addr %s421, 224
        %s423 = scalar_lea.vmem [#allocation5], %s422
        %p424 = scmp.lt.s32.totalorder %s15, 2
        %s425 = scalar_select %p424, %s15, 2
        %s426 = scalar_lea.vmem %s2, %s425
        %p427 = scmp.lt.s32.totalorder %s15, 2
        %s428 = scalar_select %p427, %s15, 2
        %s429 = scalar_lea.vmem %s3, %s428
        %430 = vst [vmem:[#allocation2] sm:$0xff] 0.0
        %431 = vst [vmem:[#allocation2 + $0x8] sm:$0xff] 0.0
        %432 = vst [vmem:[#allocation2 + $0x10] sm:$0x3] 0.0
        %433 = vst [vmem:[#allocation2 + $0x18] sm:$0xff] 0.0
        %434 = vst [vmem:[#allocation2 + $0x20] sm:$0xff] 0.0
        %435 = vst [vmem:[#allocation2 + $0x28] sm:$0x3] 0.0
        %s436 = scalar_lea.vmem [#allocation2], 384
        %437 = vst [vmem:[%s436] sm:$0xff] 0.0
        %438 = vst [vmem:[%s436 + $0x8] sm:$0xff] 0.0
        %439 = vst [vmem:[%s436 + $0x10] sm:$0x3] 0.0
        %440 = vst [vmem:[%s436 + $0x18] sm:$0xff] 0.0
        %441 = vst [vmem:[%s436 + $0x20] sm:$0xff] 0.0
        %442 = vst [vmem:[%s436 + $0x28] sm:$0x3] 0.0
        %s443 = scalar_lea.vmem [#allocation2], 48
        %444 = vst [vmem:[%s443] sm:$0x3] 0.0
        %445 = vst [vmem:[%s443 + $0x18] sm:$0x3] 0.0
        %446 = vst [vmem:[%s443 + $0x30] sm:$0x3] 0.0
        %447 = vst [vmem:[%s443 + $0x48] sm:$0x3] 0.0
        %448 = vst [vmem:[%s443 + $0x60] sm:$0x3] 0.0
        %449 = vst [vmem:[%s443 + $0x78] sm:$0x3] 0.0
        %450 = vst [vmem:[%s443 + $0x90] sm:$0x3] 0.0
        %451 = vst [vmem:[%s443 + $0xa8] sm:$0x3] 0.0
        %452 = vst [vmem:[%s443 + $0xc0] sm:$0x3] 0.0
        %453 = vst [vmem:[%s443 + $0xd8] sm:$0x3] 0.0
        %454 = vst [vmem:[%s443 + $0xf0] sm:$0x3] 0.0
        %455 = vst [vmem:[%s443 + $0x108] sm:$0x3] 0.0
        %456 = vst [vmem:[%s443 + $0x120] sm:$0x3] 0.0
        %457 = vst [vmem:[%s443 + $0x138] sm:$0x3] 0.0
        %458 = vst [vmem:[%s443 + $0x10] sm:$0x3] 0.0
        %459 = vst [vmem:[%s443 + $0x28] sm:$0x3] 0.0
        %460 = vst [vmem:[%s443 + $0x40] sm:$0x3] 0.0
        %461 = vst [vmem:[%s443 + $0x58] sm:$0x3] 0.0
        %462 = vst [vmem:[%s443 + $0x70] sm:$0x3] 0.0
        %463 = vst [vmem:[%s443 + $0x88] sm:$0x3] 0.0
        %464 = vst [vmem:[%s443 + $0xa0] sm:$0x3] 0.0
        %465 = vst [vmem:[%s443 + $0xb8] sm:$0x3] 0.0
        %466 = vst [vmem:[%s443 + $0xd0] sm:$0x3] 0.0
        %467 = vst [vmem:[%s443 + $0xe8] sm:$0x3] 0.0
        %468 = vst [vmem:[%s443 + $0x100] sm:$0x3] 0.0
        %469 = vst [vmem:[%s443 + $0x118] sm:$0x3] 0.0
        %470 = vst [vmem:[%s443 + $0x130] sm:$0x3] 0.0
        %471 = vst [vmem:[%s443 + $0x148] sm:$0x3] 0.0
        %v472 = vld [vmem:[%s385] sm:$0xff]
        %v473 = vld [vmem:[%s385 + $0x8] sm:$0x3f]
        %v474 = vld [vmem:[%s385 + $0x10] sm:$0xff]
        %v475 = vld [vmem:[%s385 + $0x18] sm:$0x3f]
        %v476 = vld [vmem:[%s385 + $0x20] sm:$0xff]
        %v477 = vld [vmem:[%s385 + $0x28] sm:$0x3f]
        %v478 = vld [vmem:[%s385 + $0x30] sm:$0xff]
        %v479 = vld [vmem:[%s385 + $0x38] sm:$0x3f]
        %v480 = vld [vmem:[%s385 + $0x40] sm:$0xff]
        %v481 = vld [vmem:[%s385 + $0x48] sm:$0x3f]
        %v482 = vld [vmem:[%s385 + $0x50] sm:$0xff]
        %v483 = vld [vmem:[%s385 + $0x58] sm:$0x3f]
        %v484 = vld [vmem:[%s385 + $0x60] sm:$0xff]
        %v485 = vld [vmem:[%s385 + $0x68] sm:$0x3f]
        %v486 = vld [vmem:[%s385 + $0x70] sm:$0xff]
        %v487 = vld [vmem:[%s385 + $0x78] sm:$0x3f]
        %v488 = vld [vmem:[%s385 + $0x80] sm:$0xff]
        %v489 = vld [vmem:[%s385 + $0x88] sm:$0x3f]
        %v490 = vld [vmem:[%s385 + $0x90] sm:$0xff]
        %v491 = vld [vmem:[%s385 + $0x98] sm:$0x3f]
        %v492 = vld [vmem:[%s385 + $0xa0] sm:$0xff]
        %v493 = vld [vmem:[%s385 + $0xa8] sm:$0x3f]
        %v494 = vld [vmem:[%s385 + $0xb0] sm:$0xff]
        %v495 = vld [vmem:[%s385 + $0xb8] sm:$0x3f]
        %v496 = vld [vmem:[%s385 + $0xc0] sm:$0xff]
        %v497 = vld [vmem:[%s385 + $0xc8] sm:$0x3f]
        %v498 = vld [vmem:[%s385 + $0xd0] sm:$0xff]
        %v499 = vld [vmem:[%s385 + $0xd8] sm:$0x3f]
        %500 = vst [vmem:[%s443 + $0x2] sm:$0xff] %v472
        %501 = vst [vmem:[%s443 + $0xa] sm:$0x3f] %v473
        %502 = vst [vmem:[%s443 + $0x1a] sm:$0xff] %v474
        %503 = vst [vmem:[%s443 + $0x22] sm:$0x3f] %v475
        %504 = vst [vmem:[%s443 + $0x32] sm:$0xff] %v476
        %505 = vst [vmem:[%s443 + $0x3a] sm:$0x3f] %v477
        %506 = vst [vmem:[%s443 + $0x4a] sm:$0xff] %v478
        %507 = vst [vmem:[%s443 + $0x52] sm:$0x3f] %v479
        %508 = vst [vmem:[%s443 + $0x62] sm:$0xff] %v480
        %509 = vst [vmem:[%s443 + $0x6a] sm:$0x3f] %v481
        %510 = vst [vmem:[%s443 + $0x7a] sm:$0xff] %v482
        %511 = vst [vmem:[%s443 + $0x82] sm:$0x3f] %v483
        %512 = vst [vmem:[%s443 + $0x92] sm:$0xff] %v484
        %513 = vst [vmem:[%s443 + $0x9a] sm:$0x3f] %v485
        %514 = vst [vmem:[%s443 + $0xaa] sm:$0xff] %v486
        %515 = vst [vmem:[%s443 + $0xb2] sm:$0x3f] %v487
        %516 = vst [vmem:[%s443 + $0xc2] sm:$0xff] %v488
        %517 = vst [vmem:[%s443 + $0xca] sm:$0x3f] %v489
        %518 = vst [vmem:[%s443 + $0xda] sm:$0xff] %v490
        %519 = vst [vmem:[%s443 + $0xe2] sm:$0x3f] %v491
        %520 = vst [vmem:[%s443 + $0xf2] sm:$0xff] %v492
        %521 = vst [vmem:[%s443 + $0xfa] sm:$0x3f] %v493
        %522 = vst [vmem:[%s443 + $0x10a] sm:$0xff] %v494
        %523 = vst [vmem:[%s443 + $0x112] sm:$0x3f] %v495
        %524 = vst [vmem:[%s443 + $0x122] sm:$0xff] %v496
        %525 = vst [vmem:[%s443 + $0x12a] sm:$0x3f] %v497
        %526 = vst [vmem:[%s443 + $0x13a] sm:$0xff] %v498
        %527 = vst [vmem:[%s443 + $0x142] sm:$0x3f] %v499
        %v528 = vld [vmem:[%s392] sm:$0xff]
        %v529 = vld [vmem:[%s392 + $0x8] sm:$0xff]
        %v530 = vld [vmem:[%s392 + $0x10] sm:$0xff]
        %v531 = vld [vmem:[%s392 + $0x18] sm:$0x1]
        %v532 = vld [vmem:[#allocation2] sm:$0xff]
        %v533 = vld [vmem:[#allocation2 + $0x8] sm:$0x3f]
        %v534 = vld [vmem:[#allocation2 + $0x18] sm:$0xff]
        %v535 = vld [vmem:[#allocation2 + $0x20] sm:$0x3f]
        %v536 = vld [vmem:[#allocation2 + $0x30] sm:$0xff]
        %v537 = vld [vmem:[#allocation2 + $0x38] sm:$0x3f]
        %v538 = vld [vmem:[#allocation2 + $0x48] sm:$0xff]
        %v539 = vld [vmem:[#allocation2 + $0x50] sm:$0x3f]
        %v540 = vld [vmem:[#allocation2 + $0x60] sm:$0xff]
        %v541 = vld [vmem:[#allocation2 + $0x68] sm:$0x3f]
        %v542 = vld [vmem:[#allocation2 + $0x78] sm:$0xff]
        %v543 = vld [vmem:[#allocation2 + $0x80] sm:$0x3f]
        %v544 = vld [vmem:[#allocation2 + $0x90] sm:$0xff]
        %v545 = vld [vmem:[#allocation2 + $0x98] sm:$0x3f]
        %v546 = vld [vmem:[#allocation2 + $0xa8] sm:$0xff]
        %v547 = vld [vmem:[#allocation2 + $0xb0] sm:$0x3f]
        %v548 = vld [vmem:[#allocation2 + $0xc0] sm:$0xff]
        %v549 = vld [vmem:[#allocation2 + $0xc8] sm:$0x3f]
        %v550 = vld [vmem:[#allocation2 + $0xd8] sm:$0xff]
        %v551 = vld [vmem:[#allocation2 + $0xe0] sm:$0x3f]
        %v552 = vld [vmem:[#allocation2 + $0xf0] sm:$0xff]
        %v553 = vld [vmem:[#allocation2 + $0xf8] sm:$0x3f]
        %v554 = vld [vmem:[#allocation2 + $0x108] sm:$0xff]
        %v555 = vld [vmem:[#allocation2 + $0x110] sm:$0x3f]
        %v556 = vld [vmem:[#allocation2 + $0x120] sm:$0xff]
        %v557 = vld [vmem:[#allocation2 + $0x128] sm:$0x3f]
        %v558 = vld [vmem:[#allocation2 + $0x138] sm:$0xff]
        %v559 = vld [vmem:[#allocation2 + $0x140] sm:$0x3f]
        %v560 = vlaneseq
        %v561 = vshrl.u32 %v560, 7
        %v562 = vsub.s32 0, %v561
        %v563 = vrot.slane %v528, %v562
        %v564 = vmul.f32 %v532, %v563
        %v565 = vmul.f32 %v533, %v563
        %v566 = vmul.f32 %v534, %v563
        %v567 = vmul.f32 %v535, %v563
        %v568 = vmul.f32 %v536, %v563
        %v569 = vmul.f32 %v537, %v563
        %v570 = vmul.f32 %v538, %v563
        %v571 = vmul.f32 %v539, %v563
        %v572 = vmul.f32 %v540, %v563
        %v573 = vmul.f32 %v541, %v563
        %v574 = vmul.f32 %v542, %v563
        %v575 = vmul.f32 %v543, %v563
        %v576 = vmul.f32 %v544, %v563
        %v577 = vmul.f32 %v545, %v563
        %v578 = vmul.f32 %v546, %v563
        %v579 = vmul.f32 %v547, %v563
        %v580 = vmul.f32 %v548, %v563
        %v581 = vmul.f32 %v549, %v563
        %v582 = vmul.f32 %v550, %v563
        %v583 = vmul.f32 %v551, %v563
        %v584 = vmul.f32 %v552, %v563
        %v585 = vmul.f32 %v553, %v563
        %v586 = vmul.f32 %v554, %v563
        %v587 = vmul.f32 %v555, %v563
        %v588 = vmul.f32 %v556, %v563
        %v589 = vmul.f32 %v557, %v563
        %v590 = vmul.f32 %v558, %v563
        %v591 = vmul.f32 %v559, %v563
        %v592 = vadd.f32 %v564, 0.0
        %v593 = vadd.f32 %v565, 0.0
        %v594 = vadd.f32 %v566, 0.0
        %v595 = vadd.f32 %v567, 0.0
        %v596 = vadd.f32 %v568, 0.0
        %v597 = vadd.f32 %v569, 0.0
        %v598 = vadd.f32 %v570, 0.0
        %v599 = vadd.f32 %v571, 0.0
        %v600 = vadd.f32 %v572, 0.0
        %v601 = vadd.f32 %v573, 0.0
        %v602 = vadd.f32 %v574, 0.0
        %v603 = vadd.f32 %v575, 0.0
        %v604 = vadd.f32 %v576, 0.0
        %v605 = vadd.f32 %v577, 0.0
        %v606 = vadd.f32 %v578, 0.0
        %v607 = vadd.f32 %v579, 0.0
        %v608 = vadd.f32 %v580, 0.0
        %v609 = vadd.f32 %v581, 0.0
        %v610 = vadd.f32 %v582, 0.0
        %v611 = vadd.f32 %v583, 0.0
        %v612 = vadd.f32 %v584, 0.0
        %v613 = vadd.f32 %v585, 0.0
        %v614 = vadd.f32 %v586, 0.0
        %v615 = vadd.f32 %v587, 0.0
        %v616 = vadd.f32 %v588, 0.0
        %v617 = vadd.f32 %v589, 0.0
        %v618 = vadd.f32 %v590, 0.0
        %v619 = vadd.f32 %v591, 0.0
        %v620 = vld [vmem:[#allocation2 + $0x1] sm:$0xff]
        %v621 = vld [vmem:[#allocation2 + $0x9] sm:$0x3f]
        %v622 = vld [vmem:[#allocation2 + $0x19] sm:$0xff]
        %v623 = vld [vmem:[#allocation2 + $0x21] sm:$0x3f]
        %v624 = vld [vmem:[#allocation2 + $0x31] sm:$0xff]
        %v625 = vld [vmem:[#allocation2 + $0x39] sm:$0x3f]
        %v626 = vld [vmem:[#allocation2 + $0x49] sm:$0xff]
        %v627 = vld [vmem:[#allocation2 + $0x51] sm:$0x3f]
        %v628 = vld [vmem:[#allocation2 + $0x61] sm:$0xff]
        %v629 = vld [vmem:[#allocation2 + $0x69] sm:$0x3f]
        %v630 = vld [vmem:[#allocation2 + $0x79] sm:$0xff]
        %v631 = vld [vmem:[#allocation2 + $0x81] sm:$0x3f]
        %v632 = vld [vmem:[#allocation2 + $0x91] sm:$0xff]
        %v633 = vld [vmem:[#allocation2 + $0x99] sm:$0x3f]
        %v634 = vld [vmem:[#allocation2 + $0xa9] sm:$0xff]
        %v635 = vld [vmem:[#allocation2 + $0xb1] sm:$0x3f]
        %v636 = vld [vmem:[#allocation2 + $0xc1] sm:$0xff]
        %v637 = vld [vmem:[#allocation2 + $0xc9] sm:$0x3f]
        %v638 = vld [vmem:[#allocation2 + $0xd9] sm:$0xff]
        %v639 = vld [vmem:[#allocation2 + $0xe1] sm:$0x3f]
        %v640 = vld [vmem:[#allocation2 + $0xf1] sm:$0xff]
        %v641 = vld [vmem:[#allocation2 + $0xf9] sm:$0x3f]
        %v642 = vld [vmem:[#allocation2 + $0x109] sm:$0xff]
        %v643 = vld [vmem:[#allocation2 + $0x111] sm:$0x3f]
        %v644 = vld [vmem:[#allocation2 + $0x121] sm:$0xff]
        %v645 = vld [vmem:[#allocation2 + $0x129] sm:$0x3f]
        %v646 = vld [vmem:[#allocation2 + $0x139] sm:$0xff]
        %v647 = vld [vmem:[#allocation2 + $0x141] sm:$0x3f]
        %v648 = vlaneseq
        %v649 = vshrl.u32 %v648, 7
        %v650 = vsub.s32 1, %v649
        %v651 = vrot.slane %v528, %v650
        %v652 = vmul.f32 %v620, %v651
        %v653 = vmul.f32 %v621, %v651
        %v654 = vmul.f32 %v622, %v651
        %v655 = vmul.f32 %v623, %v651
        %v656 = vmul.f32 %v624, %v651
        %v657 = vmul.f32 %v625, %v651
        %v658 = vmul.f32 %v626, %v651
        %v659 = vmul.f32 %v627, %v651
        %v660 = vmul.f32 %v628, %v651
        %v661 = vmul.f32 %v629, %v651
        %v662 = vmul.f32 %v630, %v651
        %v663 = vmul.f32 %v631, %v651
        %v664 = vmul.f32 %v632, %v651
        %v665 = vmul.f32 %v633, %v651
        %v666 = vmul.f32 %v634, %v651
        %v667 = vmul.f32 %v635, %v651
        %v668 = vmul.f32 %v636, %v651
        %v669 = vmul.f32 %v637, %v651
        %v670 = vmul.f32 %v638, %v651
        %v671 = vmul.f32 %v639, %v651
        %v672 = vmul.f32 %v640, %v651
        %v673 = vmul.f32 %v641, %v651
        %v674 = vmul.f32 %v642, %v651
        %v675 = vmul.f32 %v643, %v651
        %v676 = vmul.f32 %v644, %v651
        %v677 = vmul.f32 %v645, %v651
        %v678 = vmul.f32 %v646, %v651
        %v679 = vmul.f32 %v647, %v651
        %v680 = vadd.f32 %v592, %v652
        %v681 = vadd.f32 %v593, %v653
        %v682 = vadd.f32 %v594, %v654
        %v683 = vadd.f32 %v595, %v655
        %v684 = vadd.f32 %v596, %v656
        %v685 = vadd.f32 %v597, %v657
        %v686 = vadd.f32 %v598, %v658
        %v687 = vadd.f32 %v599, %v659
        %v688 = vadd.f32 %v600, %v660
        %v689 = vadd.f32 %v601, %v661
        %v690 = vadd.f32 %v602, %v662
        %v691 = vadd.f32 %v603, %v663
        %v692 = vadd.f32 %v604, %v664
        %v693 = vadd.f32 %v605, %v665
        %v694 = vadd.f32 %v606, %v666
        %v695 = vadd.f32 %v607, %v667
        %v696 = vadd.f32 %v608, %v668
        %v697 = vadd.f32 %v609, %v669
        %v698 = vadd.f32 %v610, %v670
        %v699 = vadd.f32 %v611, %v671
        %v700 = vadd.f32 %v612, %v672
        %v701 = vadd.f32 %v613, %v673
        %v702 = vadd.f32 %v614, %v674
        %v703 = vadd.f32 %v615, %v675
        %v704 = vadd.f32 %v616, %v676
        %v705 = vadd.f32 %v617, %v677
        %v706 = vadd.f32 %v618, %v678
        %v707 = vadd.f32 %v619, %v679
        %v708 = vld [vmem:[#allocation2 + $0x2] sm:$0xff]
        %v709 = vld [vmem:[#allocation2 + $0xa] sm:$0x3f]
        %v710 = vld [vmem:[#allocation2 + $0x1a] sm:$0xff]
        %v711 = vld [vmem:[#allocation2 + $0x22] sm:$0x3f]
        %v712 = vld [vmem:[#allocation2 + $0x32] sm:$0xff]
        %v713 = vld [vmem:[#allocation2 + $0x3a] sm:$0x3f]
        %v714 = vld [vmem:[#allocation2 + $0x4a] sm:$0xff]
        %v715 = vld [vmem:[#allocation2 + $0x52] sm:$0x3f]
        %v716 = vld [vmem:[#allocation2 + $0x62] sm:$0xff]
        %v717 = vld [vmem:[#allocation2 + $0x6a] sm:$0x3f]
        %v718 = vld [vmem:[#allocation2 + $0x7a] sm:$0xff]
        %v719 = vld [vmem:[#allocation2 + $0x82] sm:$0x3f]
        %v720 = vld [vmem:[#allocation2 + $0x92] sm:$0xff]
        %v721 = vld [vmem:[#allocation2 + $0x9a] sm:$0x3f]
        %v722 = vld [vmem:[#allocation2 + $0xaa] sm:$0xff]
        %v723 = vld [vmem:[#allocation2 + $0xb2] sm:$0x3f]
        %v724 = vld [vmem:[#allocation2 + $0xc2] sm:$0xff]
        %v725 = vld [vmem:[#allocation2 + $0xca] sm:$0x3f]
        %v726 = vld [vmem:[#allocation2 + $0xda] sm:$0xff]
        %v727 = vld [vmem:[#allocation2 + $0xe2] sm:$0x3f]
        %v728 = vld [vmem:[#allocation2 + $0xf2] sm:$0xff]
        %v729 = vld [vmem:[#allocation2 + $0xfa] sm:$0x3f]
        %v730 = vld [vmem:[#allocation2 + $0x10a] sm:$0xff]
        %v731 = vld [vmem:[#allocation2 + $0x112] sm:$0x3f]
        %v732 = vld [vmem:[#allocation2 + $0x122] sm:$0xff]
        %v733 = vld [vmem:[#allocation2 + $0x12a] sm:$0x3f]
        %v734 = vld [vmem:[#allocation2 + $0x13a] sm:$0xff]
        %v735 = vld [vmem:[#allocation2 + $0x142] sm:$0x3f]
        %v736 = vlaneseq
        %v737 = vshrl.u32 %v736, 7
        %v738 = vsub.s32 2, %v737
        %v739 = vrot.slane %v528, %v738
        %v740 = vmul.f32 %v708, %v739
        %v741 = vmul.f32 %v709, %v739
        %v742 = vmul.f32 %v710, %v739
        %v743 = vmul.f32 %v711, %v739
        %v744 = vmul.f32 %v712, %v739
        %v745 = vmul.f32 %v713, %v739
        %v746 = vmul.f32 %v714, %v739
        %v747 = vmul.f32 %v715, %v739
        %v748 = vmul.f32 %v716, %v739
        %v749 = vmul.f32 %v717, %v739
        %v750 = vmul.f32 %v718, %v739
        %v751 = vmul.f32 %v719, %v739
        %v752 = vmul.f32 %v720, %v739
        %v753 = vmul.f32 %v721, %v739
        %v754 = vmul.f32 %v722, %v739
        %v755 = vmul.f32 %v723, %v739
        %v756 = vmul.f32 %v724, %v739
        %v757 = vmul.f32 %v725, %v739
        %v758 = vmul.f32 %v726, %v739
        %v759 = vmul.f32 %v727, %v739
        %v760 = vmul.f32 %v728, %v739
        %v761 = vmul.f32 %v729, %v739
        %v762 = vmul.f32 %v730, %v739
        %v763 = vmul.f32 %v731, %v739
        %v764 = vmul.f32 %v732, %v739
        %v765 = vmul.f32 %v733, %v739
        %v766 = vmul.f32 %v734, %v739
        %v767 = vmul.f32 %v735, %v739
        %v768 = vadd.f32 %v680, %v740
        %v769 = vadd.f32 %v681, %v741
        %v770 = vadd.f32 %v682, %v742
        %v771 = vadd.f32 %v683, %v743
        %v772 = vadd.f32 %v684, %v744
        %v773 = vadd.f32 %v685, %v745
        %v774 = vadd.f32 %v686, %v746
        %v775 = vadd.f32 %v687, %v747
        %v776 = vadd.f32 %v688, %v748
        %v777 = vadd.f32 %v689, %v749
        %v778 = vadd.f32 %v690, %v750
        %v779 = vadd.f32 %v691, %v751
        %v780 = vadd.f32 %v692, %v752
        %v781 = vadd.f32 %v693, %v753
        %v782 = vadd.f32 %v694, %v754
        %v783 = vadd.f32 %v695, %v755
        %v784 = vadd.f32 %v696, %v756
        %v785 = vadd.f32 %v697, %v757
        %v786 = vadd.f32 %v698, %v758
        %v787 = vadd.f32 %v699, %v759
        %v788 = vadd.f32 %v700, %v760
        %v789 = vadd.f32 %v701, %v761
        %v790 = vadd.f32 %v702, %v762
        %v791 = vadd.f32 %v703, %v763
        %v792 = vadd.f32 %v704, %v764
        %v793 = vadd.f32 %v705, %v765
        %v794 = vadd.f32 %v706, %v766
        %v795 = vadd.f32 %v707, %v767
        %v796 = vld [vmem:[#allocation2 + $0x3] sm:$0xff]
        %v797 = vld [vmem:[#allocation2 + $0xb] sm:$0x3f]
        %v798 = vld [vmem:[#allocation2 + $0x1b] sm:$0xff]
        %v799 = vld [vmem:[#allocation2 + $0x23] sm:$0x3f]
        %v800 = vld [vmem:[#allocation2 + $0x33] sm:$0xff]
        %v801 = vld [vmem:[#allocation2 + $0x3b] sm:$0x3f]
        %v802 = vld [vmem:[#allocation2 + $0x4b] sm:$0xff]
        %v803 = vld [vmem:[#allocation2 + $0x53] sm:$0x3f]
        %v804 = vld [vmem:[#allocation2 + $0x63] sm:$0xff]
        %v805 = vld [vmem:[#allocation2 + $0x6b] sm:$0x3f]
        %v806 = vld [vmem:[#allocation2 + $0x7b] sm:$0xff]
        %v807 = vld [vmem:[#allocation2 + $0x83] sm:$0x3f]
        %v808 = vld [vmem:[#allocation2 + $0x93] sm:$0xff]
        %v809 = vld [vmem:[#allocation2 + $0x9b] sm:$0x3f]
        %v810 = vld [vmem:[#allocation2 + $0xab] sm:$0xff]
        %v811 = vld [vmem:[#allocation2 + $0xb3] sm:$0x3f]
        %v812 = vld [vmem:[#allocation2 + $0xc3] sm:$0xff]
        %v813 = vld [vmem:[#allocation2 + $0xcb] sm:$0x3f]
        %v814 = vld [vmem:[#allocation2 + $0xdb] sm:$0xff]
        %v815 = vld [vmem:[#allocation2 + $0xe3] sm:$0x3f]
        %v816 = vld [vmem:[#allocation2 + $0xf3] sm:$0xff]
        %v817 = vld [vmem:[#allocation2 + $0xfb] sm:$0x3f]
        %v818 = vld [vmem:[#allocation2 + $0x10b] sm:$0xff]
        %v819 = vld [vmem:[#allocation2 + $0x113] sm:$0x3f]
        %v820 = vld [vmem:[#allocation2 + $0x123] sm:$0xff]
        %v821 = vld [vmem:[#allocation2 + $0x12b] sm:$0x3f]
        %v822 = vld [vmem:[#allocation2 + $0x13b] sm:$0xff]
        %v823 = vld [vmem:[#allocation2 + $0x143] sm:$0x3f]
        %v824 = vlaneseq
        %v825 = vshrl.u32 %v824, 7
        %v826 = vsub.s32 3, %v825
        %v827 = vrot.slane %v528, %v826
        %v828 = vmul.f32 %v796, %v827
        %v829 = vmul.f32 %v797, %v827
        %v830 = vmul.f32 %v798, %v827
        %v831 = vmul.f32 %v799, %v827
        %v832 = vmul.f32 %v800, %v827
        %v833 = vmul.f32 %v801, %v827
        %v834 = vmul.f32 %v802, %v827
        %v835 = vmul.f32 %v803, %v827
        %v836 = vmul.f32 %v804, %v827
        %v837 = vmul.f32 %v805, %v827
        %v838 = vmul.f32 %v806, %v827
        %v839 = vmul.f32 %v807, %v827
        %v840 = vmul.f32 %v808, %v827
        %v841 = vmul.f32 %v809, %v827
        %v842 = vmul.f32 %v810, %v827
        %v843 = vmul.f32 %v811, %v827
        %v844 = vmul.f32 %v812, %v827
        %v845 = vmul.f32 %v813, %v827
        %v846 = vmul.f32 %v814, %v827
        %v847 = vmul.f32 %v815, %v827
        %v848 = vmul.f32 %v816, %v827
        %v849 = vmul.f32 %v817, %v827
        %v850 = vmul.f32 %v818, %v827
        %v851 = vmul.f32 %v819, %v827
        %v852 = vmul.f32 %v820, %v827
        %v853 = vmul.f32 %v821, %v827
        %v854 = vmul.f32 %v822, %v827
        %v855 = vmul.f32 %v823, %v827
        %v856 = vadd.f32 %v768, %v828
        %v857 = vadd.f32 %v769, %v829
        %v858 = vadd.f32 %v770, %v830
        %v859 = vadd.f32 %v771, %v831
        %v860 = vadd.f32 %v772, %v832
        %v861 = vadd.f32 %v773, %v833
        %v862 = vadd.f32 %v774, %v834
        %v863 = vadd.f32 %v775, %v835
        %v864 = vadd.f32 %v776, %v836
        %v865 = vadd.f32 %v777, %v837
        %v866 = vadd.f32 %v778, %v838
        %v867 = vadd.f32 %v779, %v839
        %v868 = vadd.f32 %v780, %v840
        %v869 = vadd.f32 %v781, %v841
        %v870 = vadd.f32 %v782, %v842
        %v871 = vadd.f32 %v783, %v843
        %v872 = vadd.f32 %v784, %v844
        %v873 = vadd.f32 %v785, %v845
        %v874 = vadd.f32 %v786, %v846
        %v875 = vadd.f32 %v787, %v847
        %v876 = vadd.f32 %v788, %v848
        %v877 = vadd.f32 %v789, %v849
        %v878 = vadd.f32 %v790, %v850
        %v879 = vadd.f32 %v791, %v851
        %v880 = vadd.f32 %v792, %v852
        %v881 = vadd.f32 %v793, %v853
        %v882 = vadd.f32 %v794, %v854
        %v883 = vadd.f32 %v795, %v855
        %v884 = vld [vmem:[#allocation2 + $0x4] sm:$0xff]
        %v885 = vld [vmem:[#allocation2 + $0xc] sm:$0x3f]
        %v886 = vld [vmem:[#allocation2 + $0x1c] sm:$0xff]
        %v887 = vld [vmem:[#allocation2 + $0x24] sm:$0x3f]
        %v888 = vld [vmem:[#allocation2 + $0x34] sm:$0xff]
        %v889 = vld [vmem:[#allocation2 + $0x3c] sm:$0x3f]
        %v890 = vld [vmem:[#allocation2 + $0x4c] sm:$0xff]
        %v891 = vld [vmem:[#allocation2 + $0x54] sm:$0x3f]
        %v892 = vld [vmem:[#allocation2 + $0x64] sm:$0xff]
        %v893 = vld [vmem:[#allocation2 + $0x6c] sm:$0x3f]
        %v894 = vld [vmem:[#allocation2 + $0x7c] sm:$0xff]
        %v895 = vld [vmem:[#allocation2 + $0x84] sm:$0x3f]
        %v896 = vld [vmem:[#allocation2 + $0x94] sm:$0xff]
        %v897 = vld [vmem:[#allocation2 + $0x9c] sm:$0x3f]
        %v898 = vld [vmem:[#allocation2 + $0xac] sm:$0xff]
        %v899 = vld [vmem:[#allocation2 + $0xb4] sm:$0x3f]
        %v900 = vld [vmem:[#allocation2 + $0xc4] sm:$0xff]
        %v901 = vld [vmem:[#allocation2 + $0xcc] sm:$0x3f]
        %v902 = vld [vmem:[#allocation2 + $0xdc] sm:$0xff]
        %v903 = vld [vmem:[#allocation2 + $0xe4] sm:$0x3f]
        %v904 = vld [vmem:[#allocation2 + $0xf4] sm:$0xff]
        %v905 = vld [vmem:[#allocation2 + $0xfc] sm:$0x3f]
        %v906 = vld [vmem:[#allocation2 + $0x10c] sm:$0xff]
        %v907 = vld [vmem:[#allocation2 + $0x114] sm:$0x3f]
        %v908 = vld [vmem:[#allocation2 + $0x124] sm:$0xff]
        %v909 = vld [vmem:[#allocation2 + $0x12c] sm:$0x3f]
        %v910 = vld [vmem:[#allocation2 + $0x13c] sm:$0xff]
        %v911 = vld [vmem:[#allocation2 + $0x144] sm:$0x3f]
        %v912 = vlaneseq
        %v913 = vshrl.u32 %v912, 7
        %v914 = vsub.s32 4, %v913
        %v915 = vrot.slane %v528, %v914
        %v916 = vmul.f32 %v884, %v915
        %v917 = vmul.f32 %v885, %v915
        %v918 = vmul.f32 %v886, %v915
        %v919 = vmul.f32 %v887, %v915
        %v920 = vmul.f32 %v888, %v915
        %v921 = vmul.f32 %v889, %v915
        %v922 = vmul.f32 %v890, %v915
        %v923 = vmul.f32 %v891, %v915
        %v924 = vmul.f32 %v892, %v915
        %v925 = vmul.f32 %v893, %v915
        %v926 = vmul.f32 %v894, %v915
        %v927 = vmul.f32 %v895, %v915
        %v928 = vmul.f32 %v896, %v915
        %v929 = vmul.f32 %v897, %v915
        %v930 = vmul.f32 %v898, %v915
        %v931 = vmul.f32 %v899, %v915
        %v932 = vmul.f32 %v900, %v915
        %v933 = vmul.f32 %v901, %v915
        %v934 = vmul.f32 %v902, %v915
        %v935 = vmul.f32 %v903, %v915
        %v936 = vmul.f32 %v904, %v915
        %v937 = vmul.f32 %v905, %v915
        %v938 = vmul.f32 %v906, %v915
        %v939 = vmul.f32 %v907, %v915
        %v940 = vmul.f32 %v908, %v915
        %v941 = vmul.f32 %v909, %v915
        %v942 = vmul.f32 %v910, %v915
        %v943 = vmul.f32 %v911, %v915
        %v944 = vadd.f32 %v856, %v916
        %v945 = vadd.f32 %v857, %v917
        %v946 = vadd.f32 %v858, %v918
        %v947 = vadd.f32 %v859, %v919
        %v948 = vadd.f32 %v860, %v920
        %v949 = vadd.f32 %v861, %v921
        %v950 = vadd.f32 %v862, %v922
        %v951 = vadd.f32 %v863, %v923
        %v952 = vadd.f32 %v864, %v924
        %v953 = vadd.f32 %v865, %v925
        %v954 = vadd.f32 %v866, %v926
        %v955 = vadd.f32 %v867, %v927
        %v956 = vadd.f32 %v868, %v928
        %v957 = vadd.f32 %v869, %v929
        %v958 = vadd.f32 %v870, %v930
        %v959 = vadd.f32 %v871, %v931
        %v960 = vadd.f32 %v872, %v932
        %v961 = vadd.f32 %v873, %v933
        %v962 = vadd.f32 %v874, %v934
        %v963 = vadd.f32 %v875, %v935
        %v964 = vadd.f32 %v876, %v936
        %v965 = vadd.f32 %v877, %v937
        %v966 = vadd.f32 %v878, %v938
        %v967 = vadd.f32 %v879, %v939
        %v968 = vadd.f32 %v880, %v940
        %v969 = vadd.f32 %v881, %v941
        %v970 = vadd.f32 %v882, %v942
        %v971 = vadd.f32 %v883, %v943
        %s972 = scalar_lea.vmem [#allocation2], 24
        %v973 = vld [vmem:[%s972] sm:$0xff]
        %v974 = vld [vmem:[%s972 + $0x8] sm:$0x3f]
        %v975 = vld [vmem:[%s972 + $0x18] sm:$0xff]
        %v976 = vld [vmem:[%s972 + $0x20] sm:$0x3f]
        %v977 = vld [vmem:[%s972 + $0x30] sm:$0xff]
        %v978 = vld [vmem:[%s972 + $0x38] sm:$0x3f]
        %v979 = vld [vmem:[%s972 + $0x48] sm:$0xff]
        %v980 = vld [vmem:[%s972 + $0x50] sm:$0x3f]
        %v981 = vld [vmem:[%s972 + $0x60] sm:$0xff]
        %v982 = vld [vmem:[%s972 + $0x68] sm:$0x3f]
        %v983 = vld [vmem:[%s972 + $0x78] sm:$0xff]
        %v984 = vld [vmem:[%s972 + $0x80] sm:$0x3f]
        %v985 = vld [vmem:[%s972 + $0x90] sm:$0xff]
        %v986 = vld [vmem:[%s972 + $0x98] sm:$0x3f]
        %v987 = vld [vmem:[%s972 + $0xa8] sm:$0xff]
        %v988 = vld [vmem:[%s972 + $0xb0] sm:$0x3f]
        %v989 = vld [vmem:[%s972 + $0xc0] sm:$0xff]
        %v990 = vld [vmem:[%s972 + $0xc8] sm:$0x3f]
        %v991 = vld [vmem:[%s972 + $0xd8] sm:$0xff]
        %v992 = vld [vmem:[%s972 + $0xe0] sm:$0x3f]
        %v993 = vld [vmem:[%s972 + $0xf0] sm:$0xff]
        %v994 = vld [vmem:[%s972 + $0xf8] sm:$0x3f]
        %v995 = vld [vmem:[%s972 + $0x108] sm:$0xff]
        %v996 = vld [vmem:[%s972 + $0x110] sm:$0x3f]
        %v997 = vld [vmem:[%s972 + $0x120] sm:$0xff]
        %v998 = vld [vmem:[%s972 + $0x128] sm:$0x3f]
        %v999 = vld [vmem:[%s972 + $0x138] sm:$0xff]
        %v1000 = vld [vmem:[%s972 + $0x140] sm:$0x3f]
        %v1001 = vlaneseq
        %v1002 = vshrl.u32 %v1001, 7
        %v1003 = vsub.s32 5, %v1002
        %v1004 = vrot.slane %v528, %v1003
        %v1005 = vmul.f32 %v973, %v1004
        %v1006 = vmul.f32 %v974, %v1004
        %v1007 = vmul.f32 %v975, %v1004
        %v1008 = vmul.f32 %v976, %v1004
        %v1009 = vmul.f32 %v977, %v1004
        %v1010 = vmul.f32 %v978, %v1004
        %v1011 = vmul.f32 %v979, %v1004
        %v1012 = vmul.f32 %v980, %v1004
        %v1013 = vmul.f32 %v981, %v1004
        %v1014 = vmul.f32 %v982, %v1004
        %v1015 = vmul.f32 %v983, %v1004
        %v1016 = vmul.f32 %v984, %v1004
        %v1017 = vmul.f32 %v985, %v1004
        %v1018 = vmul.f32 %v986, %v1004
        %v1019 = vmul.f32 %v987, %v1004
        %v1020 = vmul.f32 %v988, %v1004
        %v1021 = vmul.f32 %v989, %v1004
        %v1022 = vmul.f32 %v990, %v1004
        %v1023 = vmul.f32 %v991, %v1004
        %v1024 = vmul.f32 %v992, %v1004
        %v1025 = vmul.f32 %v993, %v1004
        %v1026 = vmul.f32 %v994, %v1004
        %v1027 = vmul.f32 %v995, %v1004
        %v1028 = vmul.f32 %v996, %v1004
        %v1029 = vmul.f32 %v997, %v1004
        %v1030 = vmul.f32 %v998, %v1004
        %v1031 = vmul.f32 %v999, %v1004
        %v1032 = vmul.f32 %v1000, %v1004
        %v1033 = vadd.f32 %v944, %v1005
        %v1034 = vadd.f32 %v945, %v1006
        %v1035 = vadd.f32 %v946, %v1007
        %v1036 = vadd.f32 %v947, %v1008
        %v1037 = vadd.f32 %v948, %v1009
        %v1038 = vadd.f32 %v949, %v1010
        %v1039 = vadd.f32 %v950, %v1011
        %v1040 = vadd.f32 %v951, %v1012
        %v1041 = vadd.f32 %v952, %v1013
        %v1042 = vadd.f32 %v953, %v1014
        %v1043 = vadd.f32 %v954, %v1015
        %v1044 = vadd.f32 %v955, %v1016
        %v1045 = vadd.f32 %v956, %v1017
        %v1046 = vadd.f32 %v957, %v1018
        %v1047 = vadd.f32 %v958, %v1019
        %v1048 = vadd.f32 %v959, %v1020
        %v1049 = vadd.f32 %v960, %v1021
        %v1050 = vadd.f32 %v961, %v1022
        %v1051 = vadd.f32 %v962, %v1023
        %v1052 = vadd.f32 %v963, %v1024
        %v1053 = vadd.f32 %v964, %v1025
        %v1054 = vadd.f32 %v965, %v1026
        %v1055 = vadd.f32 %v966, %v1027
        %v1056 = vadd.f32 %v967, %v1028
        %v1057 = vadd.f32 %v968, %v1029
        %v1058 = vadd.f32 %v969, %v1030
        %v1059 = vadd.f32 %v970, %v1031
        %v1060 = vadd.f32 %v971, %v1032
        %v1061 = vld [vmem:[%s972 + $0x1] sm:$0xff]
        %v1062 = vld [vmem:[%s972 + $0x9] sm:$0x3f]
        %v1063 = vld [vmem:[%s972 + $0x19] sm:$0xff]
        %v1064 = vld [vmem:[%s972 + $0x21] sm:$0x3f]
        %v1065 = vld [vmem:[%s972 + $0x31] sm:$0xff]
        %v1066 = vld [vmem:[%s972 + $0x39] sm:$0x3f]
        %v1067 = vld [vmem:[%s972 + $0x49] sm:$0xff]
        %v1068 = vld [vmem:[%s972 + $0x51] sm:$0x3f]
        %v1069 = vld [vmem:[%s972 + $0x61] sm:$0xff]
        %v1070 = vld [vmem:[%s972 + $0x69] sm:$0x3f]
        %v1071 = vld [vmem:[%s972 + $0x79] sm:$0xff]
        %v1072 = vld [vmem:[%s972 + $0x81] sm:$0x3f]
        %v1073 = vld [vmem:[%s972 + $0x91] sm:$0xff]
        %v1074 = vld [vmem:[%s972 + $0x99] sm:$0x3f]
        %v1075 = vld [vmem:[%s972 + $0xa9] sm:$0xff]
        %v1076 = vld [vmem:[%s972 + $0xb1] sm:$0x3f]
        %v1077 = vld [vmem:[%s972 + $0xc1] sm:$0xff]
        %v1078 = vld [vmem:[%s972 + $0xc9] sm:$0x3f]
        %v1079 = vld [vmem:[%s972 + $0xd9] sm:$0xff]
        %v1080 = vld [vmem:[%s972 + $0xe1] sm:$0x3f]
        %v1081 = vld [vmem:[%s972 + $0xf1] sm:$0xff]
        %v1082 = vld [vmem:[%s972 + $0xf9] sm:$0x3f]
        %v1083 = vld [vmem:[%s972 + $0x109] sm:$0xff]
        %v1084 = vld [vmem:[%s972 + $0x111] sm:$0x3f]
        %v1085 = vld [vmem:[%s972 + $0x121] sm:$0xff]
        %v1086 = vld [vmem:[%s972 + $0x129] sm:$0x3f]
        %v1087 = vld [vmem:[%s972 + $0x139] sm:$0xff]
        %v1088 = vld [vmem:[%s972 + $0x141] sm:$0x3f]
        %v1089 = vlaneseq
        %v1090 = vshrl.u32 %v1089, 7
        %v1091 = vsub.s32 6, %v1090
        %v1092 = vrot.slane %v528, %v1091
        %v1093 = vmul.f32 %v1061, %v1092
        %v1094 = vmul.f32 %v1062, %v1092
        %v1095 = vmul.f32 %v1063, %v1092
        %v1096 = vmul.f32 %v1064, %v1092
        %v1097 = vmul.f32 %v1065, %v1092
        %v1098 = vmul.f32 %v1066, %v1092
        %v1099 = vmul.f32 %v1067, %v1092
        %v1100 = vmul.f32 %v1068, %v1092
        %v1101 = vmul.f32 %v1069, %v1092
        %v1102 = vmul.f32 %v1070, %v1092
        %v1103 = vmul.f32 %v1071, %v1092
        %v1104 = vmul.f32 %v1072, %v1092
        %v1105 = vmul.f32 %v1073, %v1092
        %v1106 = vmul.f32 %v1074, %v1092
        %v1107 = vmul.f32 %v1075, %v1092
        %v1108 = vmul.f32 %v1076, %v1092
        %v1109 = vmul.f32 %v1077, %v1092
        %v1110 = vmul.f32 %v1078, %v1092
        %v1111 = vmul.f32 %v1079, %v1092
        %v1112 = vmul.f32 %v1080, %v1092
        %v1113 = vmul.f32 %v1081, %v1092
        %v1114 = vmul.f32 %v1082, %v1092
        %v1115 = vmul.f32 %v1083, %v1092
        %v1116 = vmul.f32 %v1084, %v1092
        %v1117 = vmul.f32 %v1085, %v1092
        %v1118 = vmul.f32 %v1086, %v1092
        %v1119 = vmul.f32 %v1087, %v1092
        %v1120 = vmul.f32 %v1088, %v1092
        %v1121 = vadd.f32 %v1033, %v1093
        %v1122 = vadd.f32 %v1034, %v1094
        %v1123 = vadd.f32 %v1035, %v1095
        %v1124 = vadd.f32 %v1036, %v1096
        %v1125 = vadd.f32 %v1037, %v1097
        %v1126 = vadd.f32 %v1038, %v1098
        %v1127 = vadd.f32 %v1039, %v1099
        %v1128 = vadd.f32 %v1040, %v1100
        %v1129 = vadd.f32 %v1041, %v1101
        %v1130 = vadd.f32 %v1042, %v1102
        %v1131 = vadd.f32 %v1043, %v1103
        %v1132 = vadd.f32 %v1044, %v1104
        %v1133 = vadd.f32 %v1045, %v1105
        %v1134 = vadd.f32 %v1046, %v1106
        %v1135 = vadd.f32 %v1047, %v1107
        %v1136 = vadd.f32 %v1048, %v1108
        %v1137 = vadd.f32 %v1049, %v1109
        %v1138 = vadd.f32 %v1050, %v1110
        %v1139 = vadd.f32 %v1051, %v1111
        %v1140 = vadd.f32 %v1052, %v1112
        %v1141 = vadd.f32 %v1053, %v1113
        %v1142 = vadd.f32 %v1054, %v1114
        %v1143 = vadd.f32 %v1055, %v1115
        %v1144 = vadd.f32 %v1056, %v1116
        %v1145 = vadd.f32 %v1057, %v1117
        %v1146 = vadd.f32 %v1058, %v1118
        %v1147 = vadd.f32 %v1059, %v1119
        %v1148 = vadd.f32 %v1060, %v1120
        %v1149 = vld [vmem:[%s972 + $0x2] sm:$0xff]
        %v1150 = vld [vmem:[%s972 + $0xa] sm:$0x3f]
        %v1151 = vld [vmem:[%s972 + $0x1a] sm:$0xff]
        %v1152 = vld [vmem:[%s972 + $0x22] sm:$0x3f]
        %v1153 = vld [vmem:[%s972 + $0x32] sm:$0xff]
        %v1154 = vld [vmem:[%s972 + $0x3a] sm:$0x3f]
        %v1155 = vld [vmem:[%s972 + $0x4a] sm:$0xff]
        %v1156 = vld [vmem:[%s972 + $0x52] sm:$0x3f]
        %v1157 = vld [vmem:[%s972 + $0x62] sm:$0xff]
        %v1158 = vld [vmem:[%s972 + $0x6a] sm:$0x3f]
        %v1159 = vld [vmem:[%s972 + $0x7a] sm:$0xff]
        %v1160 = vld [vmem:[%s972 + $0x82] sm:$0x3f]
        %v1161 = vld [vmem:[%s972 + $0x92] sm:$0xff]
        %v1162 = vld [vmem:[%s972 + $0x9a] sm:$0x3f]
        %v1163 = vld [vmem:[%s972 + $0xaa] sm:$0xff]
        %v1164 = vld [vmem:[%s972 + $0xb2] sm:$0x3f]
        %v1165 = vld [vmem:[%s972 + $0xc2] sm:$0xff]
        %v1166 = vld [vmem:[%s972 + $0xca] sm:$0x3f]
        %v1167 = vld [vmem:[%s972 + $0xda] sm:$0xff]
        %v1168 = vld [vmem:[%s972 + $0xe2] sm:$0x3f]
        %v1169 = vld [vmem:[%s972 + $0xf2] sm:$0xff]
        %v1170 = vld [vmem:[%s972 + $0xfa] sm:$0x3f]
        %v1171 = vld [vmem:[%s972 + $0x10a] sm:$0xff]
        %v1172 = vld [vmem:[%s972 + $0x112] sm:$0x3f]
        %v1173 = vld [vmem:[%s972 + $0x122] sm:$0xff]
        %v1174 = vld [vmem:[%s972 + $0x12a] sm:$0x3f]
        %v1175 = vld [vmem:[%s972 + $0x13a] sm:$0xff]
        %v1176 = vld [vmem:[%s972 + $0x142] sm:$0x3f]
        %v1177 = vlaneseq
        %v1178 = vshrl.u32 %v1177, 7
        %v1179 = vsub.s32 7, %v1178
        %v1180 = vrot.slane %v528, %v1179
        %v1181 = vmul.f32 %v1149, %v1180
        %v1182 = vmul.f32 %v1150, %v1180
        %v1183 = vmul.f32 %v1151, %v1180
        %v1184 = vmul.f32 %v1152, %v1180
        %v1185 = vmul.f32 %v1153, %v1180
        %v1186 = vmul.f32 %v1154, %v1180
        %v1187 = vmul.f32 %v1155, %v1180
        %v1188 = vmul.f32 %v1156, %v1180
        %v1189 = vmul.f32 %v1157, %v1180
        %v1190 = vmul.f32 %v1158, %v1180
        %v1191 = vmul.f32 %v1159, %v1180
        %v1192 = vmul.f32 %v1160, %v1180
        %v1193 = vmul.f32 %v1161, %v1180
        %v1194 = vmul.f32 %v1162, %v1180
        %v1195 = vmul.f32 %v1163, %v1180
        %v1196 = vmul.f32 %v1164, %v1180
        %v1197 = vmul.f32 %v1165, %v1180
        %v1198 = vmul.f32 %v1166, %v1180
        %v1199 = vmul.f32 %v1167, %v1180
        %v1200 = vmul.f32 %v1168, %v1180
        %v1201 = vmul.f32 %v1169, %v1180
        %v1202 = vmul.f32 %v1170, %v1180
        %v1203 = vmul.f32 %v1171, %v1180
        %v1204 = vmul.f32 %v1172, %v1180
        %v1205 = vmul.f32 %v1173, %v1180
        %v1206 = vmul.f32 %v1174, %v1180
        %v1207 = vmul.f32 %v1175, %v1180
        %v1208 = vmul.f32 %v1176, %v1180
        %v1209 = vadd.f32 %v1121, %v1181
        %v1210 = vadd.f32 %v1122, %v1182
        %v1211 = vadd.f32 %v1123, %v1183
        %v1212 = vadd.f32 %v1124, %v1184
        %v1213 = vadd.f32 %v1125, %v1185
        %v1214 = vadd.f32 %v1126, %v1186
        %v1215 = vadd.f32 %v1127, %v1187
        %v1216 = vadd.f32 %v1128, %v1188
        %v1217 = vadd.f32 %v1129, %v1189
        %v1218 = vadd.f32 %v1130, %v1190
        %v1219 = vadd.f32 %v1131, %v1191
        %v1220 = vadd.f32 %v1132, %v1192
        %v1221 = vadd.f32 %v1133, %v1193
        %v1222 = vadd.f32 %v1134, %v1194
        %v1223 = vadd.f32 %v1135, %v1195
        %v1224 = vadd.f32 %v1136, %v1196
        %v1225 = vadd.f32 %v1137, %v1197
        %v1226 = vadd.f32 %v1138, %v1198
        %v1227 = vadd.f32 %v1139, %v1199
        %v1228 = vadd.f32 %v1140, %v1200
        %v1229 = vadd.f32 %v1141, %v1201
        %v1230 = vadd.f32 %v1142, %v1202
        %v1231 = vadd.f32 %v1143, %v1203
        %v1232 = vadd.f32 %v1144, %v1204
        %v1233 = vadd.f32 %v1145, %v1205
        %v1234 = vadd.f32 %v1146, %v1206
        %v1235 = vadd.f32 %v1147, %v1207
        %v1236 = vadd.f32 %v1148, %v1208
        %v1237 = vld [vmem:[%s972 + $0x3] sm:$0xff]
        %v1238 = vld [vmem:[%s972 + $0xb] sm:$0x3f]
        %v1239 = vld [vmem:[%s972 + $0x1b] sm:$0xff]
        %v1240 = vld [vmem:[%s972 + $0x23] sm:$0x3f]
        %v1241 = vld [vmem:[%s972 + $0x33] sm:$0xff]
        %v1242 = vld [vmem:[%s972 + $0x3b] sm:$0x3f]
        %v1243 = vld [vmem:[%s972 + $0x4b] sm:$0xff]
        %v1244 = vld [vmem:[%s972 + $0x53] sm:$0x3f]
        %v1245 = vld [vmem:[%s972 + $0x63] sm:$0xff]
        %v1246 = vld [vmem:[%s972 + $0x6b] sm:$0x3f]
        %v1247 = vld [vmem:[%s972 + $0x7b] sm:$0xff]
        %v1248 = vld [vmem:[%s972 + $0x83] sm:$0x3f]
        %v1249 = vld [vmem:[%s972 + $0x93] sm:$0xff]
        %v1250 = vld [vmem:[%s972 + $0x9b] sm:$0x3f]
        %v1251 = vld [vmem:[%s972 + $0xab] sm:$0xff]
        %v1252 = vld [vmem:[%s972 + $0xb3] sm:$0x3f]
        %v1253 = vld [vmem:[%s972 + $0xc3] sm:$0xff]
        %v1254 = vld [vmem:[%s972 + $0xcb] sm:$0x3f]
        %v1255 = vld [vmem:[%s972 + $0xdb] sm:$0xff]
        %v1256 = vld [vmem:[%s972 + $0xe3] sm:$0x3f]
        %v1257 = vld [vmem:[%s972 + $0xf3] sm:$0xff]
        %v1258 = vld [vmem:[%s972 + $0xfb] sm:$0x3f]
        %v1259 = vld [vmem:[%s972 + $0x10b] sm:$0xff]
        %v1260 = vld [vmem:[%s972 + $0x113] sm:$0x3f]
        %v1261 = vld [vmem:[%s972 + $0x123] sm:$0xff]
        %v1262 = vld [vmem:[%s972 + $0x12b] sm:$0x3f]
        %v1263 = vld [vmem:[%s972 + $0x13b] sm:$0xff]
        %v1264 = vld [vmem:[%s972 + $0x143] sm:$0x3f]
        %v1265 = vlaneseq
        %v1266 = vshrl.u32 %v1265, 7
        %v1267 = vsub.s32 0, %v1266
        %v1268 = vrot.slane %v529, %v1267
        %v1269 = vmul.f32 %v1237, %v1268
        %v1270 = vmul.f32 %v1238, %v1268
        %v1271 = vmul.f32 %v1239, %v1268
        %v1272 = vmul.f32 %v1240, %v1268
        %v1273 = vmul.f32 %v1241, %v1268
        %v1274 = vmul.f32 %v1242, %v1268
        %v1275 = vmul.f32 %v1243, %v1268
        %v1276 = vmul.f32 %v1244, %v1268
        %v1277 = vmul.f32 %v1245, %v1268
        %v1278 = vmul.f32 %v1246, %v1268
        %v1279 = vmul.f32 %v1247, %v1268
        %v1280 = vmul.f32 %v1248, %v1268
        %v1281 = vmul.f32 %v1249, %v1268
        %v1282 = vmul.f32 %v1250, %v1268
        %v1283 = vmul.f32 %v1251, %v1268
        %v1284 = vmul.f32 %v1252, %v1268
        %v1285 = vmul.f32 %v1253, %v1268
        %v1286 = vmul.f32 %v1254, %v1268
        %v1287 = vmul.f32 %v1255, %v1268
        %v1288 = vmul.f32 %v1256, %v1268
        %v1289 = vmul.f32 %v1257, %v1268
        %v1290 = vmul.f32 %v1258, %v1268
        %v1291 = vmul.f32 %v1259, %v1268
        %v1292 = vmul.f32 %v1260, %v1268
        %v1293 = vmul.f32 %v1261, %v1268
        %v1294 = vmul.f32 %v1262, %v1268
        %v1295 = vmul.f32 %v1263, %v1268
        %v1296 = vmul.f32 %v1264, %v1268
        %v1297 = vadd.f32 %v1209, %v1269
        %v1298 = vadd.f32 %v1210, %v1270
        %v1299 = vadd.f32 %v1211, %v1271
        %v1300 = vadd.f32 %v1212, %v1272
        %v1301 = vadd.f32 %v1213, %v1273
        %v1302 = vadd.f32 %v1214, %v1274
        %v1303 = vadd.f32 %v1215, %v1275
        %v1304 = vadd.f32 %v1216, %v1276
        %v1305 = vadd.f32 %v1217, %v1277
        %v1306 = vadd.f32 %v1218, %v1278
        %v1307 = vadd.f32 %v1219, %v1279
        %v1308 = vadd.f32 %v1220, %v1280
        %v1309 = vadd.f32 %v1221, %v1281
        %v1310 = vadd.f32 %v1222, %v1282
        %v1311 = vadd.f32 %v1223, %v1283
        %v1312 = vadd.f32 %v1224, %v1284
        %v1313 = vadd.f32 %v1225, %v1285
        %v1314 = vadd.f32 %v1226, %v1286
        %v1315 = vadd.f32 %v1227, %v1287
        %v1316 = vadd.f32 %v1228, %v1288
        %v1317 = vadd.f32 %v1229, %v1289
        %v1318 = vadd.f32 %v1230, %v1290
        %v1319 = vadd.f32 %v1231, %v1291
        %v1320 = vadd.f32 %v1232, %v1292
        %v1321 = vadd.f32 %v1233, %v1293
        %v1322 = vadd.f32 %v1234, %v1294
        %v1323 = vadd.f32 %v1235, %v1295
        %v1324 = vadd.f32 %v1236, %v1296
        %v1325 = vld [vmem:[%s972 + $0x4] sm:$0xff]
        %v1326 = vld [vmem:[%s972 + $0xc] sm:$0x3f]
        %v1327 = vld [vmem:[%s972 + $0x1c] sm:$0xff]
        %v1328 = vld [vmem:[%s972 + $0x24] sm:$0x3f]
        %v1329 = vld [vmem:[%s972 + $0x34] sm:$0xff]
        %v1330 = vld [vmem:[%s972 + $0x3c] sm:$0x3f]
        %v1331 = vld [vmem:[%s972 + $0x4c] sm:$0xff]
        %v1332 = vld [vmem:[%s972 + $0x54] sm:$0x3f]
        %v1333 = vld [vmem:[%s972 + $0x64] sm:$0xff]
        %v1334 = vld [vmem:[%s972 + $0x6c] sm:$0x3f]
        %v1335 = vld [vmem:[%s972 + $0x7c] sm:$0xff]
        %v1336 = vld [vmem:[%s972 + $0x84] sm:$0x3f]
        %v1337 = vld [vmem:[%s972 + $0x94] sm:$0xff]
        %v1338 = vld [vmem:[%s972 + $0x9c] sm:$0x3f]
        %v1339 = vld [vmem:[%s972 + $0xac] sm:$0xff]
        %v1340 = vld [vmem:[%s972 + $0xb4] sm:$0x3f]
        %v1341 = vld [vmem:[%s972 + $0xc4] sm:$0xff]
        %v1342 = vld [vmem:[%s972 + $0xcc] sm:$0x3f]
        %v1343 = vld [vmem:[%s972 + $0xdc] sm:$0xff]
        %v1344 = vld [vmem:[%s972 + $0xe4] sm:$0x3f]
        %v1345 = vld [vmem:[%s972 + $0xf4] sm:$0xff]
        %v1346 = vld [vmem:[%s972 + $0xfc] sm:$0x3f]
        %v1347 = vld [vmem:[%s972 + $0x10c] sm:$0xff]
        %v1348 = vld [vmem:[%s972 + $0x114] sm:$0x3f]
        %v1349 = vld [vmem:[%s972 + $0x124] sm:$0xff]
        %v1350 = vld [vmem:[%s972 + $0x12c] sm:$0x3f]
        %v1351 = vld [vmem:[%s972 + $0x13c] sm:$0xff]
        %v1352 = vld [vmem:[%s972 + $0x144] sm:$0x3f]
        %v1353 = vlaneseq
        %v1354 = vshrl.u32 %v1353, 7
        %v1355 = vsub.s32 1, %v1354
        %v1356 = vrot.slane %v529, %v1355
        %v1357 = vmul.f32 %v1325, %v1356
        %v1358 = vmul.f32 %v1326, %v1356
        %v1359 = vmul.f32 %v1327, %v1356
        %v1360 = vmul.f32 %v1328, %v1356
        %v1361 = vmul.f32 %v1329, %v1356
        %v1362 = vmul.f32 %v1330, %v1356
        %v1363 = vmul.f32 %v1331, %v1356
        %v1364 = vmul.f32 %v1332, %v1356
        %v1365 = vmul.f32 %v1333, %v1356
        %v1366 = vmul.f32 %v1334, %v1356
        %v1367 = vmul.f32 %v1335, %v1356
        %v1368 = vmul.f32 %v1336, %v1356
        %v1369 = vmul.f32 %v1337, %v1356
        %v1370 = vmul.f32 %v1338, %v1356
        %v1371 = vmul.f32 %v1339, %v1356
        %v1372 = vmul.f32 %v1340, %v1356
        %v1373 = vmul.f32 %v1341, %v1356
        %v1374 = vmul.f32 %v1342, %v1356
        %v1375 = vmul.f32 %v1343, %v1356
        %v1376 = vmul.f32 %v1344, %v1356
        %v1377 = vmul.f32 %v1345, %v1356
        %v1378 = vmul.f32 %v1346, %v1356
        %v1379 = vmul.f32 %v1347, %v1356
        %v1380 = vmul.f32 %v1348, %v1356
        %v1381 = vmul.f32 %v1349, %v1356
        %v1382 = vmul.f32 %v1350, %v1356
        %v1383 = vmul.f32 %v1351, %v1356
        %v1384 = vmul.f32 %v1352, %v1356
        %v1385 = vadd.f32 %v1297, %v1357
        %v1386 = vadd.f32 %v1298, %v1358
        %v1387 = vadd.f32 %v1299, %v1359
        %v1388 = vadd.f32 %v1300, %v1360
        %v1389 = vadd.f32 %v1301, %v1361
        %v1390 = vadd.f32 %v1302, %v1362
        %v1391 = vadd.f32 %v1303, %v1363
        %v1392 = vadd.f32 %v1304, %v1364
        %v1393 = vadd.f32 %v1305, %v1365
        %v1394 = vadd.f32 %v1306, %v1366
        %v1395 = vadd.f32 %v1307, %v1367
        %v1396 = vadd.f32 %v1308, %v1368
        %v1397 = vadd.f32 %v1309, %v1369
        %v1398 = vadd.f32 %v1310, %v1370
        %v1399 = vadd.f32 %v1311, %v1371
        %v1400 = vadd.f32 %v1312, %v1372
        %v1401 = vadd.f32 %v1313, %v1373
        %v1402 = vadd.f32 %v1314, %v1374
        %v1403 = vadd.f32 %v1315, %v1375
        %v1404 = vadd.f32 %v1316, %v1376
        %v1405 = vadd.f32 %v1317, %v1377
        %v1406 = vadd.f32 %v1318, %v1378
        %v1407 = vadd.f32 %v1319, %v1379
        %v1408 = vadd.f32 %v1320, %v1380
        %v1409 = vadd.f32 %v1321, %v1381
        %v1410 = vadd.f32 %v1322, %v1382
        %v1411 = vadd.f32 %v1323, %v1383
        %v1412 = vadd.f32 %v1324, %v1384
        %v1413 = vld [vmem:[%s443] sm:$0xff]
        %v1414 = vld [vmem:[%s443 + $0x8] sm:$0x3f]
        %v1415 = vld [vmem:[%s443 + $0x18] sm:$0xff]
        %v1416 = vld [vmem:[%s443 + $0x20] sm:$0x3f]
        %v1417 = vld [vmem:[%s443 + $0x30] sm:$0xff]
        %v1418 = vld [vmem:[%s443 + $0x38] sm:$0x3f]
        %v1419 = vld [vmem:[%s443 + $0x48] sm:$0xff]
        %v1420 = vld [vmem:[%s443 + $0x50] sm:$0x3f]
        %v1421 = vld [vmem:[%s443 + $0x60] sm:$0xff]
        %v1422 = vld [vmem:[%s443 + $0x68] sm:$0x3f]
        %v1423 = vld [vmem:[%s443 + $0x78] sm:$0xff]
        %v1424 = vld [vmem:[%s443 + $0x80] sm:$0x3f]
        %v1425 = vld [vmem:[%s443 + $0x90] sm:$0xff]
        %v1426 = vld [vmem:[%s443 + $0x98] sm:$0x3f]
        %v1427 = vld [vmem:[%s443 + $0xa8] sm:$0xff]
        %v1428 = vld [vmem:[%s443 + $0xb0] sm:$0x3f]
        %v1429 = vld [vmem:[%s443 + $0xc0] sm:$0xff]
        %v1430 = vld [vmem:[%s443 + $0xc8] sm:$0x3f]
        %v1431 = vld [vmem:[%s443 + $0xd8] sm:$0xff]
        %v1432 = vld [vmem:[%s443 + $0xe0] sm:$0x3f]
        %v1433 = vld [vmem:[%s443 + $0xf0] sm:$0xff]
        %v1434 = vld [vmem:[%s443 + $0xf8] sm:$0x3f]
        %v1435 = vld [vmem:[%s443 + $0x108] sm:$0xff]
        %v1436 = vld [vmem:[%s443 + $0x110] sm:$0x3f]
        %v1437 = vld [vmem:[%s443 + $0x120] sm:$0xff]
        %v1438 = vld [vmem:[%s443 + $0x128] sm:$0x3f]
        %v1439 = vld [vmem:[%s443 + $0x138] sm:$0xff]
        %v1440 = vld [vmem:[%s443 + $0x140] sm:$0x3f]
        %v1441 = vlaneseq
        %v1442 = vshrl.u32 %v1441, 7
        %v1443 = vsub.s32 2, %v1442
        %v1444 = vrot.slane %v529, %v1443
        %v1445 = vmul.f32 %v1413, %v1444
        %v1446 = vmul.f32 %v1414, %v1444
        %v1447 = vmul.f32 %v1415, %v1444
        %v1448 = vmul.f32 %v1416, %v1444
        %v1449 = vmul.f32 %v1417, %v1444
        %v1450 = vmul.f32 %v1418, %v1444
        %v1451 = vmul.f32 %v1419, %v1444
        %v1452 = vmul.f32 %v1420, %v1444
        %v1453 = vmul.f32 %v1421, %v1444
        %v1454 = vmul.f32 %v1422, %v1444
        %v1455 = vmul.f32 %v1423, %v1444
        %v1456 = vmul.f32 %v1424, %v1444
        %v1457 = vmul.f32 %v1425, %v1444
        %v1458 = vmul.f32 %v1426, %v1444
        %v1459 = vmul.f32 %v1427, %v1444
        %v1460 = vmul.f32 %v1428, %v1444
        %v1461 = vmul.f32 %v1429, %v1444
        %v1462 = vmul.f32 %v1430, %v1444
        %v1463 = vmul.f32 %v1431, %v1444
        %v1464 = vmul.f32 %v1432, %v1444
        %v1465 = vmul.f32 %v1433, %v1444
        %v1466 = vmul.f32 %v1434, %v1444
        %v1467 = vmul.f32 %v1435, %v1444
        %v1468 = vmul.f32 %v1436, %v1444
        %v1469 = vmul.f32 %v1437, %v1444
        %v1470 = vmul.f32 %v1438, %v1444
        %v1471 = vmul.f32 %v1439, %v1444
        %v1472 = vmul.f32 %v1440, %v1444
        %v1473 = vadd.f32 %v1385, %v1445
        %v1474 = vadd.f32 %v1386, %v1446
        %v1475 = vadd.f32 %v1387, %v1447
        %v1476 = vadd.f32 %v1388, %v1448
        %v1477 = vadd.f32 %v1389, %v1449
        %v1478 = vadd.f32 %v1390, %v1450
        %v1479 = vadd.f32 %v1391, %v1451
        %v1480 = vadd.f32 %v1392, %v1452
        %v1481 = vadd.f32 %v1393, %v1453
        %v1482 = vadd.f32 %v1394, %v1454
        %v1483 = vadd.f32 %v1395, %v1455
        %v1484 = vadd.f32 %v1396, %v1456
        %v1485 = vadd.f32 %v1397, %v1457
        %v1486 = vadd.f32 %v1398, %v1458
        %v1487 = vadd.f32 %v1399, %v1459
        %v1488 = vadd.f32 %v1400, %v1460
        %v1489 = vadd.f32 %v1401, %v1461
        %v1490 = vadd.f32 %v1402, %v1462
        %v1491 = vadd.f32 %v1403, %v1463
        %v1492 = vadd.f32 %v1404, %v1464
        %v1493 = vadd.f32 %v1405, %v1465
        %v1494 = vadd.f32 %v1406, %v1466
        %v1495 = vadd.f32 %v1407, %v1467
        %v1496 = vadd.f32 %v1408, %v1468
        %v1497 = vadd.f32 %v1409, %v1469
        %v1498 = vadd.f32 %v1410, %v1470
        %v1499 = vadd.f32 %v1411, %v1471
        %v1500 = vadd.f32 %v1412, %v1472
        %v1501 = vld [vmem:[%s443 + $0x1] sm:$0xff]
        %v1502 = vld [vmem:[%s443 + $0x9] sm:$0x3f]
        %v1503 = vld [vmem:[%s443 + $0x19] sm:$0xff]
        %v1504 = vld [vmem:[%s443 + $0x21] sm:$0x3f]
        %v1505 = vld [vmem:[%s443 + $0x31] sm:$0xff]
        %v1506 = vld [vmem:[%s443 + $0x39] sm:$0x3f]
        %v1507 = vld [vmem:[%s443 + $0x49] sm:$0xff]
        %v1508 = vld [vmem:[%s443 + $0x51] sm:$0x3f]
        %v1509 = vld [vmem:[%s443 + $0x61] sm:$0xff]
        %v1510 = vld [vmem:[%s443 + $0x69] sm:$0x3f]
        %v1511 = vld [vmem:[%s443 + $0x79] sm:$0xff]
        %v1512 = vld [vmem:[%s443 + $0x81] sm:$0x3f]
        %v1513 = vld [vmem:[%s443 + $0x91] sm:$0xff]
        %v1514 = vld [vmem:[%s443 + $0x99] sm:$0x3f]
        %v1515 = vld [vmem:[%s443 + $0xa9] sm:$0xff]
        %v1516 = vld [vmem:[%s443 + $0xb1] sm:$0x3f]
        %v1517 = vld [vmem:[%s443 + $0xc1] sm:$0xff]
        %v1518 = vld [vmem:[%s443 + $0xc9] sm:$0x3f]
        %v1519 = vld [vmem:[%s443 + $0xd9] sm:$0xff]
        %v1520 = vld [vmem:[%s443 + $0xe1] sm:$0x3f]
        %v1521 = vld [vmem:[%s443 + $0xf1] sm:$0xff]
        %v1522 = vld [vmem:[%s443 + $0xf9] sm:$0x3f]
        %v1523 = vld [vmem:[%s443 + $0x109] sm:$0xff]
        %v1524 = vld [vmem:[%s443 + $0x111] sm:$0x3f]
        %v1525 = vld [vmem:[%s443 + $0x121] sm:$0xff]
        %v1526 = vld [vmem:[%s443 + $0x129] sm:$0x3f]
        %v1527 = vld [vmem:[%s443 + $0x139] sm:$0xff]
        %v1528 = vld [vmem:[%s443 + $0x141] sm:$0x3f]
        %v1529 = vlaneseq
        %v1530 = vshrl.u32 %v1529, 7
        %v1531 = vsub.s32 3, %v1530
        %v1532 = vrot.slane %v529, %v1531
        %v1533 = vmul.f32 %v1501, %v1532
        %v1534 = vmul.f32 %v1502, %v1532
        %v1535 = vmul.f32 %v1503, %v1532
        %v1536 = vmul.f32 %v1504, %v1532
        %v1537 = vmul.f32 %v1505, %v1532
        %v1538 = vmul.f32 %v1506, %v1532
        %v1539 = vmul.f32 %v1507, %v1532
        %v1540 = vmul.f32 %v1508, %v1532
        %v1541 = vmul.f32 %v1509, %v1532
        %v1542 = vmul.f32 %v1510, %v1532
        %v1543 = vmul.f32 %v1511, %v1532
        %v1544 = vmul.f32 %v1512, %v1532
        %v1545 = vmul.f32 %v1513, %v1532
        %v1546 = vmul.f32 %v1514, %v1532
        %v1547 = vmul.f32 %v1515, %v1532
        %v1548 = vmul.f32 %v1516, %v1532
        %v1549 = vmul.f32 %v1517, %v1532
        %v1550 = vmul.f32 %v1518, %v1532
        %v1551 = vmul.f32 %v1519, %v1532
        %v1552 = vmul.f32 %v1520, %v1532
        %v1553 = vmul.f32 %v1521, %v1532
        %v1554 = vmul.f32 %v1522, %v1532
        %v1555 = vmul.f32 %v1523, %v1532
        %v1556 = vmul.f32 %v1524, %v1532
        %v1557 = vmul.f32 %v1525, %v1532
        %v1558 = vmul.f32 %v1526, %v1532
        %v1559 = vmul.f32 %v1527, %v1532
        %v1560 = vmul.f32 %v1528, %v1532
        %v1561 = vadd.f32 %v1473, %v1533
        %v1562 = vadd.f32 %v1474, %v1534
        %v1563 = vadd.f32 %v1475, %v1535
        %v1564 = vadd.f32 %v1476, %v1536
        %v1565 = vadd.f32 %v1477, %v1537
        %v1566 = vadd.f32 %v1478, %v1538
        %v1567 = vadd.f32 %v1479, %v1539
        %v1568 = vadd.f32 %v1480, %v1540
        %v1569 = vadd.f32 %v1481, %v1541
        %v1570 = vadd.f32 %v1482, %v1542
        %v1571 = vadd.f32 %v1483, %v1543
        %v1572 = vadd.f32 %v1484, %v1544
        %v1573 = vadd.f32 %v1485, %v1545
        %v1574 = vadd.f32 %v1486, %v1546
        %v1575 = vadd.f32 %v1487, %v1547
        %v1576 = vadd.f32 %v1488, %v1548
        %v1577 = vadd.f32 %v1489, %v1549
        %v1578 = vadd.f32 %v1490, %v1550
        %v1579 = vadd.f32 %v1491, %v1551
        %v1580 = vadd.f32 %v1492, %v1552
        %v1581 = vadd.f32 %v1493, %v1553
        %v1582 = vadd.f32 %v1494, %v1554
        %v1583 = vadd.f32 %v1495, %v1555
        %v1584 = vadd.f32 %v1496, %v1556
        %v1585 = vadd.f32 %v1497, %v1557
        %v1586 = vadd.f32 %v1498, %v1558
        %v1587 = vadd.f32 %v1499, %v1559
        %v1588 = vadd.f32 %v1500, %v1560
        %v1589 = vld [vmem:[%s443 + $0x2] sm:$0xff]
        %v1590 = vld [vmem:[%s443 + $0xa] sm:$0x3f]
        %v1591 = vld [vmem:[%s443 + $0x1a] sm:$0xff]
        %v1592 = vld [vmem:[%s443 + $0x22] sm:$0x3f]
        %v1593 = vld [vmem:[%s443 + $0x32] sm:$0xff]
        %v1594 = vld [vmem:[%s443 + $0x3a] sm:$0x3f]
        %v1595 = vld [vmem:[%s443 + $0x4a] sm:$0xff]
        %v1596 = vld [vmem:[%s443 + $0x52] sm:$0x3f]
        %v1597 = vld [vmem:[%s443 + $0x62] sm:$0xff]
        %v1598 = vld [vmem:[%s443 + $0x6a] sm:$0x3f]
        %v1599 = vld [vmem:[%s443 + $0x7a] sm:$0xff]
        %v1600 = vld [vmem:[%s443 + $0x82] sm:$0x3f]
        %v1601 = vld [vmem:[%s443 + $0x92] sm:$0xff]
        %v1602 = vld [vmem:[%s443 + $0x9a] sm:$0x3f]
        %v1603 = vld [vmem:[%s443 + $0xaa] sm:$0xff]
        %v1604 = vld [vmem:[%s443 + $0xb2] sm:$0x3f]
        %v1605 = vld [vmem:[%s443 + $0xc2] sm:$0xff]
        %v1606 = vld [vmem:[%s443 + $0xca] sm:$0x3f]
        %v1607 = vld [vmem:[%s443 + $0xda] sm:$0xff]
        %v1608 = vld [vmem:[%s443 + $0xe2] sm:$0x3f]
        %v1609 = vld [vmem:[%s443 + $0xf2] sm:$0xff]
        %v1610 = vld [vmem:[%s443 + $0xfa] sm:$0x3f]
        %v1611 = vld [vmem:[%s443 + $0x10a] sm:$0xff]
        %v1612 = vld [vmem:[%s443 + $0x112] sm:$0x3f]
        %v1613 = vld [vmem:[%s443 + $0x122] sm:$0xff]
        %v1614 = vld [vmem:[%s443 + $0x12a] sm:$0x3f]
        %v1615 = vld [vmem:[%s443 + $0x13a] sm:$0xff]
        %v1616 = vld [vmem:[%s443 + $0x142] sm:$0x3f]
        %v1617 = vlaneseq
        %v1618 = vshrl.u32 %v1617, 7
        %v1619 = vsub.s32 4, %v1618
        %v1620 = vrot.slane %v529, %v1619
        %v1621 = vmul.f32 %v1589, %v1620
        %v1622 = vmul.f32 %v1590, %v1620
        %v1623 = vmul.f32 %v1591, %v1620
        %v1624 = vmul.f32 %v1592, %v1620
        %v1625 = vmul.f32 %v1593, %v1620
        %v1626 = vmul.f32 %v1594, %v1620
        %v1627 = vmul.f32 %v1595, %v1620
        %v1628 = vmul.f32 %v1596, %v1620
        %v1629 = vmul.f32 %v1597, %v1620
        %v1630 = vmul.f32 %v1598, %v1620
        %v1631 = vmul.f32 %v1599, %v1620
        %v1632 = vmul.f32 %v1600, %v1620
        %v1633 = vmul.f32 %v1601, %v1620
        %v1634 = vmul.f32 %v1602, %v1620
        %v1635 = vmul.f32 %v1603, %v1620
        %v1636 = vmul.f32 %v1604, %v1620
        %v1637 = vmul.f32 %v1605, %v1620
        %v1638 = vmul.f32 %v1606, %v1620
        %v1639 = vmul.f32 %v1607, %v1620
        %v1640 = vmul.f32 %v1608, %v1620
        %v1641 = vmul.f32 %v1609, %v1620
        %v1642 = vmul.f32 %v1610, %v1620
        %v1643 = vmul.f32 %v1611, %v1620
        %v1644 = vmul.f32 %v1612, %v1620
        %v1645 = vmul.f32 %v1613, %v1620
        %v1646 = vmul.f32 %v1614, %v1620
        %v1647 = vmul.f32 %v1615, %v1620
        %v1648 = vmul.f32 %v1616, %v1620
        %v1649 = vadd.f32 %v1561, %v1621
        %v1650 = vadd.f32 %v1562, %v1622
        %v1651 = vadd.f32 %v1563, %v1623
        %v1652 = vadd.f32 %v1564, %v1624
        %v1653 = vadd.f32 %v1565, %v1625
        %v1654 = vadd.f32 %v1566, %v1626
        %v1655 = vadd.f32 %v1567, %v1627
        %v1656 = vadd.f32 %v1568, %v1628
        %v1657 = vadd.f32 %v1569, %v1629
        %v1658 = vadd.f32 %v1570, %v1630
        %v1659 = vadd.f32 %v1571, %v1631
        %v1660 = vadd.f32 %v1572, %v1632
        %v1661 = vadd.f32 %v1573, %v1633
        %v1662 = vadd.f32 %v1574, %v1634
        %v1663 = vadd.f32 %v1575, %v1635
        %v1664 = vadd.f32 %v1576, %v1636
        %v1665 = vadd.f32 %v1577, %v1637
        %v1666 = vadd.f32 %v1578, %v1638
        %v1667 = vadd.f32 %v1579, %v1639
        %v1668 = vadd.f32 %v1580, %v1640
        %v1669 = vadd.f32 %v1581, %v1641
        %v1670 = vadd.f32 %v1582, %v1642
        %v1671 = vadd.f32 %v1583, %v1643
        %v1672 = vadd.f32 %v1584, %v1644
        %v1673 = vadd.f32 %v1585, %v1645
        %v1674 = vadd.f32 %v1586, %v1646
        %v1675 = vadd.f32 %v1587, %v1647
        %v1676 = vadd.f32 %v1588, %v1648
        %v1677 = vld [vmem:[%s443 + $0x3] sm:$0xff]
        %v1678 = vld [vmem:[%s443 + $0xb] sm:$0x3f]
        %v1679 = vld [vmem:[%s443 + $0x1b] sm:$0xff]
        %v1680 = vld [vmem:[%s443 + $0x23] sm:$0x3f]
        %v1681 = vld [vmem:[%s443 + $0x33] sm:$0xff]
        %v1682 = vld [vmem:[%s443 + $0x3b] sm:$0x3f]
        %v1683 = vld [vmem:[%s443 + $0x4b] sm:$0xff]
        %v1684 = vld [vmem:[%s443 + $0x53] sm:$0x3f]
        %v1685 = vld [vmem:[%s443 + $0x63] sm:$0xff]
        %v1686 = vld [vmem:[%s443 + $0x6b] sm:$0x3f]
        %v1687 = vld [vmem:[%s443 + $0x7b] sm:$0xff]
        %v1688 = vld [vmem:[%s443 + $0x83] sm:$0x3f]
        %v1689 = vld [vmem:[%s443 + $0x93] sm:$0xff]
        %v1690 = vld [vmem:[%s443 + $0x9b] sm:$0x3f]
        %v1691 = vld [vmem:[%s443 + $0xab] sm:$0xff]
        %v1692 = vld [vmem:[%s443 + $0xb3] sm:$0x3f]
        %v1693 = vld [vmem:[%s443 + $0xc3] sm:$0xff]
        %v1694 = vld [vmem:[%s443 + $0xcb] sm:$0x3f]
        %v1695 = vld [vmem:[%s443 + $0xdb] sm:$0xff]
        %v1696 = vld [vmem:[%s443 + $0xe3] sm:$0x3f]
        %v1697 = vld [vmem:[%s443 + $0xf3] sm:$0xff]
        %v1698 = vld [vmem:[%s443 + $0xfb] sm:$0x3f]
        %v1699 = vld [vmem:[%s443 + $0x10b] sm:$0xff]
        %v1700 = vld [vmem:[%s443 + $0x113] sm:$0x3f]
        %v1701 = vld [vmem:[%s443 + $0x123] sm:$0xff]
        %v1702 = vld [vmem:[%s443 + $0x12b] sm:$0x3f]
        %v1703 = vld [vmem:[%s443 + $0x13b] sm:$0xff]
        %v1704 = vld [vmem:[%s443 + $0x143] sm:$0x3f]
        %v1705 = vlaneseq
        %v1706 = vshrl.u32 %v1705, 7
        %v1707 = vsub.s32 5, %v1706
        %v1708 = vrot.slane %v529, %v1707
        %v1709 = vmul.f32 %v1677, %v1708
        %v1710 = vmul.f32 %v1678, %v1708
        %v1711 = vmul.f32 %v1679, %v1708
        %v1712 = vmul.f32 %v1680, %v1708
        %v1713 = vmul.f32 %v1681, %v1708
        %v1714 = vmul.f32 %v1682, %v1708
        %v1715 = vmul.f32 %v1683, %v1708
        %v1716 = vmul.f32 %v1684, %v1708
        %v1717 = vmul.f32 %v1685, %v1708
        %v1718 = vmul.f32 %v1686, %v1708
        %v1719 = vmul.f32 %v1687, %v1708
        %v1720 = vmul.f32 %v1688, %v1708
        %v1721 = vmul.f32 %v1689, %v1708
        %v1722 = vmul.f32 %v1690, %v1708
        %v1723 = vmul.f32 %v1691, %v1708
        %v1724 = vmul.f32 %v1692, %v1708
        %v1725 = vmul.f32 %v1693, %v1708
        %v1726 = vmul.f32 %v1694, %v1708
        %v1727 = vmul.f32 %v1695, %v1708
        %v1728 = vmul.f32 %v1696, %v1708
        %v1729 = vmul.f32 %v1697, %v1708
        %v1730 = vmul.f32 %v1698, %v1708
        %v1731 = vmul.f32 %v1699, %v1708
        %v1732 = vmul.f32 %v1700, %v1708
        %v1733 = vmul.f32 %v1701, %v1708
        %v1734 = vmul.f32 %v1702, %v1708
        %v1735 = vmul.f32 %v1703, %v1708
        %v1736 = vmul.f32 %v1704, %v1708
        %v1737 = vadd.f32 %v1649, %v1709
        %v1738 = vadd.f32 %v1650, %v1710
        %v1739 = vadd.f32 %v1651, %v1711
        %v1740 = vadd.f32 %v1652, %v1712
        %v1741 = vadd.f32 %v1653, %v1713
        %v1742 = vadd.f32 %v1654, %v1714
        %v1743 = vadd.f32 %v1655, %v1715
        %v1744 = vadd.f32 %v1656, %v1716
        %v1745 = vadd.f32 %v1657, %v1717
        %v1746 = vadd.f32 %v1658, %v1718
        %v1747 = vadd.f32 %v1659, %v1719
        %v1748 = vadd.f32 %v1660, %v1720
        %v1749 = vadd.f32 %v1661, %v1721
        %v1750 = vadd.f32 %v1662, %v1722
        %v1751 = vadd.f32 %v1663, %v1723
        %v1752 = vadd.f32 %v1664, %v1724
        %v1753 = vadd.f32 %v1665, %v1725
        %v1754 = vadd.f32 %v1666, %v1726
        %v1755 = vadd.f32 %v1667, %v1727
        %v1756 = vadd.f32 %v1668, %v1728
        %v1757 = vadd.f32 %v1669, %v1729
        %v1758 = vadd.f32 %v1670, %v1730
        %v1759 = vadd.f32 %v1671, %v1731
        %v1760 = vadd.f32 %v1672, %v1732
        %v1761 = vadd.f32 %v1673, %v1733
        %v1762 = vadd.f32 %v1674, %v1734
        %v1763 = vadd.f32 %v1675, %v1735
        %v1764 = vadd.f32 %v1676, %v1736
        %v1765 = vld [vmem:[%s443 + $0x4] sm:$0xff]
        %v1766 = vld [vmem:[%s443 + $0xc] sm:$0x3f]
        %v1767 = vld [vmem:[%s443 + $0x1c] sm:$0xff]
        %v1768 = vld [vmem:[%s443 + $0x24] sm:$0x3f]
        %v1769 = vld [vmem:[%s443 + $0x34] sm:$0xff]
        %v1770 = vld [vmem:[%s443 + $0x3c] sm:$0x3f]
        %v1771 = vld [vmem:[%s443 + $0x4c] sm:$0xff]
        %v1772 = vld [vmem:[%s443 + $0x54] sm:$0x3f]
        %v1773 = vld [vmem:[%s443 + $0x64] sm:$0xff]
        %v1774 = vld [vmem:[%s443 + $0x6c] sm:$0x3f]
        %v1775 = vld [vmem:[%s443 + $0x7c] sm:$0xff]
        %v1776 = vld [vmem:[%s443 + $0x84] sm:$0x3f]
        %v1777 = vld [vmem:[%s443 + $0x94] sm:$0xff]
        %v1778 = vld [vmem:[%s443 + $0x9c] sm:$0x3f]
        %v1779 = vld [vmem:[%s443 + $0xac] sm:$0xff]
        %v1780 = vld [vmem:[%s443 + $0xb4] sm:$0x3f]
        %v1781 = vld [vmem:[%s443 + $0xc4] sm:$0xff]
        %v1782 = vld [vmem:[%s443 + $0xcc] sm:$0x3f]
        %v1783 = vld [vmem:[%s443 + $0xdc] sm:$0xff]
        %v1784 = vld [vmem:[%s443 + $0xe4] sm:$0x3f]
        %v1785 = vld [vmem:[%s443 + $0xf4] sm:$0xff]
        %v1786 = vld [vmem:[%s443 + $0xfc] sm:$0x3f]
        %v1787 = vld [vmem:[%s443 + $0x10c] sm:$0xff]
        %v1788 = vld [vmem:[%s443 + $0x114] sm:$0x3f]
        %v1789 = vld [vmem:[%s443 + $0x124] sm:$0xff]
        %v1790 = vld [vmem:[%s443 + $0x12c] sm:$0x3f]
        %v1791 = vld [vmem:[%s443 + $0x13c] sm:$0xff]
        %v1792 = vld [vmem:[%s443 + $0x144] sm:$0x3f]
        %v1793 = vlaneseq
        %v1794 = vshrl.u32 %v1793, 7
        %v1795 = vsub.s32 6, %v1794
        %v1796 = vrot.slane %v529, %v1795
        %v1797 = vmul.f32 %v1765, %v1796
        %v1798 = vmul.f32 %v1766, %v1796
        %v1799 = vmul.f32 %v1767, %v1796
        %v1800 = vmul.f32 %v1768, %v1796
        %v1801 = vmul.f32 %v1769, %v1796
        %v1802 = vmul.f32 %v1770, %v1796
        %v1803 = vmul.f32 %v1771, %v1796
        %v1804 = vmul.f32 %v1772, %v1796
        %v1805 = vmul.f32 %v1773, %v1796
        %v1806 = vmul.f32 %v1774, %v1796
        %v1807 = vmul.f32 %v1775, %v1796
        %v1808 = vmul.f32 %v1776, %v1796
        %v1809 = vmul.f32 %v1777, %v1796
        %v1810 = vmul.f32 %v1778, %v1796
        %v1811 = vmul.f32 %v1779, %v1796
        %v1812 = vmul.f32 %v1780, %v1796
        %v1813 = vmul.f32 %v1781, %v1796
        %v1814 = vmul.f32 %v1782, %v1796
        %v1815 = vmul.f32 %v1783, %v1796
        %v1816 = vmul.f32 %v1784, %v1796
        %v1817 = vmul.f32 %v1785, %v1796
        %v1818 = vmul.f32 %v1786, %v1796
        %v1819 = vmul.f32 %v1787, %v1796
        %v1820 = vmul.f32 %v1788, %v1796
        %v1821 = vmul.f32 %v1789, %v1796
        %v1822 = vmul.f32 %v1790, %v1796
        %v1823 = vmul.f32 %v1791, %v1796
        %v1824 = vmul.f32 %v1792, %v1796
        %v1825 = vadd.f32 %v1737, %v1797
        %v1826 = vadd.f32 %v1738, %v1798
        %v1827 = vadd.f32 %v1739, %v1799
        %v1828 = vadd.f32 %v1740, %v1800
        %v1829 = vadd.f32 %v1741, %v1801
        %v1830 = vadd.f32 %v1742, %v1802
        %v1831 = vadd.f32 %v1743, %v1803
        %v1832 = vadd.f32 %v1744, %v1804
        %v1833 = vadd.f32 %v1745, %v1805
        %v1834 = vadd.f32 %v1746, %v1806
        %v1835 = vadd.f32 %v1747, %v1807
        %v1836 = vadd.f32 %v1748, %v1808
        %v1837 = vadd.f32 %v1749, %v1809
        %v1838 = vadd.f32 %v1750, %v1810
        %v1839 = vadd.f32 %v1751, %v1811
        %v1840 = vadd.f32 %v1752, %v1812
        %v1841 = vadd.f32 %v1753, %v1813
        %v1842 = vadd.f32 %v1754, %v1814
        %v1843 = vadd.f32 %v1755, %v1815
        %v1844 = vadd.f32 %v1756, %v1816
        %v1845 = vadd.f32 %v1757, %v1817
        %v1846 = vadd.f32 %v1758, %v1818
        %v1847 = vadd.f32 %v1759, %v1819
        %v1848 = vadd.f32 %v1760, %v1820
        %v1849 = vadd.f32 %v1761, %v1821
        %v1850 = vadd.f32 %v1762, %v1822
        %v1851 = vadd.f32 %v1763, %v1823
        %v1852 = vadd.f32 %v1764, %v1824
        %s1853 = scalar_lea.vmem [#allocation2], 72
        %v1854 = vld [vmem:[%s1853] sm:$0xff]
        %v1855 = vld [vmem:[%s1853 + $0x8] sm:$0x3f]
        %v1856 = vld [vmem:[%s1853 + $0x18] sm:$0xff]
        %v1857 = vld [vmem:[%s1853 + $0x20] sm:$0x3f]
        %v1858 = vld [vmem:[%s1853 + $0x30] sm:$0xff]
        %v1859 = vld [vmem:[%s1853 + $0x38] sm:$0x3f]
        %v1860 = vld [vmem:[%s1853 + $0x48] sm:$0xff]
        %v1861 = vld [vmem:[%s1853 + $0x50] sm:$0x3f]
        %v1862 = vld [vmem:[%s1853 + $0x60] sm:$0xff]
        %v1863 = vld [vmem:[%s1853 + $0x68] sm:$0x3f]
        %v1864 = vld [vmem:[%s1853 + $0x78] sm:$0xff]
        %v1865 = vld [vmem:[%s1853 + $0x80] sm:$0x3f]
        %v1866 = vld [vmem:[%s1853 + $0x90] sm:$0xff]
        %v1867 = vld [vmem:[%s1853 + $0x98] sm:$0x3f]
        %v1868 = vld [vmem:[%s1853 + $0xa8] sm:$0xff]
        %v1869 = vld [vmem:[%s1853 + $0xb0] sm:$0x3f]
        %v1870 = vld [vmem:[%s1853 + $0xc0] sm:$0xff]
        %v1871 = vld [vmem:[%s1853 + $0xc8] sm:$0x3f]
        %v1872 = vld [vmem:[%s1853 + $0xd8] sm:$0xff]
        %v1873 = vld [vmem:[%s1853 + $0xe0] sm:$0x3f]
        %v1874 = vld [vmem:[%s1853 + $0xf0] sm:$0xff]
        %v1875 = vld [vmem:[%s1853 + $0xf8] sm:$0x3f]
        %v1876 = vld [vmem:[%s1853 + $0x108] sm:$0xff]
        %v1877 = vld [vmem:[%s1853 + $0x110] sm:$0x3f]
        %v1878 = vld [vmem:[%s1853 + $0x120] sm:$0xff]
        %v1879 = vld [vmem:[%s1853 + $0x128] sm:$0x3f]
        %v1880 = vld [vmem:[%s1853 + $0x138] sm:$0xff]
        %v1881 = vld [vmem:[%s1853 + $0x140] sm:$0x3f]
        %v1882 = vlaneseq
        %v1883 = vshrl.u32 %v1882, 7
        %v1884 = vsub.s32 7, %v1883
        %v1885 = vrot.slane %v529, %v1884
        %v1886 = vmul.f32 %v1854, %v1885
        %v1887 = vmul.f32 %v1855, %v1885
        %v1888 = vmul.f32 %v1856, %v1885
        %v1889 = vmul.f32 %v1857, %v1885
        %v1890 = vmul.f32 %v1858, %v1885
        %v1891 = vmul.f32 %v1859, %v1885
        %v1892 = vmul.f32 %v1860, %v1885
        %v1893 = vmul.f32 %v1861, %v1885
        %v1894 = vmul.f32 %v1862, %v1885
        %v1895 = vmul.f32 %v1863, %v1885
        %v1896 = vmul.f32 %v1864, %v1885
        %v1897 = vmul.f32 %v1865, %v1885
        %v1898 = vmul.f32 %v1866, %v1885
        %v1899 = vmul.f32 %v1867, %v1885
        %v1900 = vmul.f32 %v1868, %v1885
        %v1901 = vmul.f32 %v1869, %v1885
        %v1902 = vmul.f32 %v1870, %v1885
        %v1903 = vmul.f32 %v1871, %v1885
        %v1904 = vmul.f32 %v1872, %v1885
        %v1905 = vmul.f32 %v1873, %v1885
        %v1906 = vmul.f32 %v1874, %v1885
        %v1907 = vmul.f32 %v1875, %v1885
        %v1908 = vmul.f32 %v1876, %v1885
        %v1909 = vmul.f32 %v1877, %v1885
        %v1910 = vmul.f32 %v1878, %v1885
        %v1911 = vmul.f32 %v1879, %v1885
        %v1912 = vmul.f32 %v1880, %v1885
        %v1913 = vmul.f32 %v1881, %v1885
        %v1914 = vadd.f32 %v1825, %v1886
        %v1915 = vadd.f32 %v1826, %v1887
        %v1916 = vadd.f32 %v1827, %v1888
        %v1917 = vadd.f32 %v1828, %v1889
        %v1918 = vadd.f32 %v1829, %v1890
        %v1919 = vadd.f32 %v1830, %v1891
        %v1920 = vadd.f32 %v1831, %v1892
        %v1921 = vadd.f32 %v1832, %v1893
        %v1922 = vadd.f32 %v1833, %v1894
        %v1923 = vadd.f32 %v1834, %v1895
        %v1924 = vadd.f32 %v1835, %v1896
        %v1925 = vadd.f32 %v1836, %v1897
        %v1926 = vadd.f32 %v1837, %v1898
        %v1927 = vadd.f32 %v1838, %v1899
        %v1928 = vadd.f32 %v1839, %v1900
        %v1929 = vadd.f32 %v1840, %v1901
        %v1930 = vadd.f32 %v1841, %v1902
        %v1931 = vadd.f32 %v1842, %v1903
        %v1932 = vadd.f32 %v1843, %v1904
        %v1933 = vadd.f32 %v1844, %v1905
        %v1934 = vadd.f32 %v1845, %v1906
        %v1935 = vadd.f32 %v1846, %v1907
        %v1936 = vadd.f32 %v1847, %v1908
        %v1937 = vadd.f32 %v1848, %v1909
        %v1938 = vadd.f32 %v1849, %v1910
        %v1939 = vadd.f32 %v1850, %v1911
        %v1940 = vadd.f32 %v1851, %v1912
        %v1941 = vadd.f32 %v1852, %v1913
        %v1942 = vld [vmem:[%s1853 + $0x1] sm:$0xff]
        %v1943 = vld [vmem:[%s1853 + $0x9] sm:$0x3f]
        %v1944 = vld [vmem:[%s1853 + $0x19] sm:$0xff]
        %v1945 = vld [vmem:[%s1853 + $0x21] sm:$0x3f]
        %v1946 = vld [vmem:[%s1853 + $0x31] sm:$0xff]
        %v1947 = vld [vmem:[%s1853 + $0x39] sm:$0x3f]
        %v1948 = vld [vmem:[%s1853 + $0x49] sm:$0xff]
        %v1949 = vld [vmem:[%s1853 + $0x51] sm:$0x3f]
        %v1950 = vld [vmem:[%s1853 + $0x61] sm:$0xff]
        %v1951 = vld [vmem:[%s1853 + $0x69] sm:$0x3f]
        %v1952 = vld [vmem:[%s1853 + $0x79] sm:$0xff]
        %v1953 = vld [vmem:[%s1853 + $0x81] sm:$0x3f]
        %v1954 = vld [vmem:[%s1853 + $0x91] sm:$0xff]
        %v1955 = vld [vmem:[%s1853 + $0x99] sm:$0x3f]
        %v1956 = vld [vmem:[%s1853 + $0xa9] sm:$0xff]
        %v1957 = vld [vmem:[%s1853 + $0xb1] sm:$0x3f]
        %v1958 = vld [vmem:[%s1853 + $0xc1] sm:$0xff]
        %v1959 = vld [vmem:[%s1853 + $0xc9] sm:$0x3f]
        %v1960 = vld [vmem:[%s1853 + $0xd9] sm:$0xff]
        %v1961 = vld [vmem:[%s1853 + $0xe1] sm:$0x3f]
        %v1962 = vld [vmem:[%s1853 + $0xf1] sm:$0xff]
        %v1963 = vld [vmem:[%s1853 + $0xf9] sm:$0x3f]
        %v1964 = vld [vmem:[%s1853 + $0x109] sm:$0xff]
        %v1965 = vld [vmem:[%s1853 + $0x111] sm:$0x3f]
        %v1966 = vld [vmem:[%s1853 + $0x121] sm:$0xff]
        %v1967 = vld [vmem:[%s1853 + $0x129] sm:$0x3f]
        %v1968 = vld [vmem:[%s1853 + $0x139] sm:$0xff]
        %v1969 = vld [vmem:[%s1853 + $0x141] sm:$0x3f]
        %v1970 = vlaneseq
        %v1971 = vshrl.u32 %v1970, 7
        %v1972 = vsub.s32 0, %v1971
        %v1973 = vrot.slane %v530, %v1972
        %v1974 = vmul.f32 %v1942, %v1973
        %v1975 = vmul.f32 %v1943, %v1973
        %v1976 = vmul.f32 %v1944, %v1973
        %v1977 = vmul.f32 %v1945, %v1973
        %v1978 = vmul.f32 %v1946, %v1973
        %v1979 = vmul.f32 %v1947, %v1973
        %v1980 = vmul.f32 %v1948, %v1973
        %v1981 = vmul.f32 %v1949, %v1973
        %v1982 = vmul.f32 %v1950, %v1973
        %v1983 = vmul.f32 %v1951, %v1973
        %v1984 = vmul.f32 %v1952, %v1973
        %v1985 = vmul.f32 %v1953, %v1973
        %v1986 = vmul.f32 %v1954, %v1973
        %v1987 = vmul.f32 %v1955, %v1973
        %v1988 = vmul.f32 %v1956, %v1973
        %v1989 = vmul.f32 %v1957, %v1973
        %v1990 = vmul.f32 %v1958, %v1973
        %v1991 = vmul.f32 %v1959, %v1973
        %v1992 = vmul.f32 %v1960, %v1973
        %v1993 = vmul.f32 %v1961, %v1973
        %v1994 = vmul.f32 %v1962, %v1973
        %v1995 = vmul.f32 %v1963, %v1973
        %v1996 = vmul.f32 %v1964, %v1973
        %v1997 = vmul.f32 %v1965, %v1973
        %v1998 = vmul.f32 %v1966, %v1973
        %v1999 = vmul.f32 %v1967, %v1973
        %v2000 = vmul.f32 %v1968, %v1973
        %v2001 = vmul.f32 %v1969, %v1973
        %v2002 = vadd.f32 %v1914, %v1974
        %v2003 = vadd.f32 %v1915, %v1975
        %v2004 = vadd.f32 %v1916, %v1976
        %v2005 = vadd.f32 %v1917, %v1977
        %v2006 = vadd.f32 %v1918, %v1978
        %v2007 = vadd.f32 %v1919, %v1979
        %v2008 = vadd.f32 %v1920, %v1980
        %v2009 = vadd.f32 %v1921, %v1981
        %v2010 = vadd.f32 %v1922, %v1982
        %v2011 = vadd.f32 %v1923, %v1983
        %v2012 = vadd.f32 %v1924, %v1984
        %v2013 = vadd.f32 %v1925, %v1985
        %v2014 = vadd.f32 %v1926, %v1986
        %v2015 = vadd.f32 %v1927, %v1987
        %v2016 = vadd.f32 %v1928, %v1988
        %v2017 = vadd.f32 %v1929, %v1989
        %v2018 = vadd.f32 %v1930, %v1990
        %v2019 = vadd.f32 %v1931, %v1991
        %v2020 = vadd.f32 %v1932, %v1992
        %v2021 = vadd.f32 %v1933, %v1993
        %v2022 = vadd.f32 %v1934, %v1994
        %v2023 = vadd.f32 %v1935, %v1995
        %v2024 = vadd.f32 %v1936, %v1996
        %v2025 = vadd.f32 %v1937, %v1997
        %v2026 = vadd.f32 %v1938, %v1998
        %v2027 = vadd.f32 %v1939, %v1999
        %v2028 = vadd.f32 %v1940, %v2000
        %v2029 = vadd.f32 %v1941, %v2001
        %v2030 = vld [vmem:[%s1853 + $0x2] sm:$0xff]
        %v2031 = vld [vmem:[%s1853 + $0xa] sm:$0x3f]
        %v2032 = vld [vmem:[%s1853 + $0x1a] sm:$0xff]
        %v2033 = vld [vmem:[%s1853 + $0x22] sm:$0x3f]
        %v2034 = vld [vmem:[%s1853 + $0x32] sm:$0xff]
        %v2035 = vld [vmem:[%s1853 + $0x3a] sm:$0x3f]
        %v2036 = vld [vmem:[%s1853 + $0x4a] sm:$0xff]
        %v2037 = vld [vmem:[%s1853 + $0x52] sm:$0x3f]
        %v2038 = vld [vmem:[%s1853 + $0x62] sm:$0xff]
        %v2039 = vld [vmem:[%s1853 + $0x6a] sm:$0x3f]
        %v2040 = vld [vmem:[%s1853 + $0x7a] sm:$0xff]
        %v2041 = vld [vmem:[%s1853 + $0x82] sm:$0x3f]
        %v2042 = vld [vmem:[%s1853 + $0x92] sm:$0xff]
        %v2043 = vld [vmem:[%s1853 + $0x9a] sm:$0x3f]
        %v2044 = vld [vmem:[%s1853 + $0xaa] sm:$0xff]
        %v2045 = vld [vmem:[%s1853 + $0xb2] sm:$0x3f]
        %v2046 = vld [vmem:[%s1853 + $0xc2] sm:$0xff]
        %v2047 = vld [vmem:[%s1853 + $0xca] sm:$0x3f]
        %v2048 = vld [vmem:[%s1853 + $0xda] sm:$0xff]
        %v2049 = vld [vmem:[%s1853 + $0xe2] sm:$0x3f]
        %v2050 = vld [vmem:[%s1853 + $0xf2] sm:$0xff]
        %v2051 = vld [vmem:[%s1853 + $0xfa] sm:$0x3f]
        %v2052 = vld [vmem:[%s1853 + $0x10a] sm:$0xff]
        %v2053 = vld [vmem:[%s1853 + $0x112] sm:$0x3f]
        %v2054 = vld [vmem:[%s1853 + $0x122] sm:$0xff]
        %v2055 = vld [vmem:[%s1853 + $0x12a] sm:$0x3f]
        %v2056 = vld [vmem:[%s1853 + $0x13a] sm:$0xff]
        %v2057 = vld [vmem:[%s1853 + $0x142] sm:$0x3f]
        %v2058 = vlaneseq
        %v2059 = vshrl.u32 %v2058, 7
        %v2060 = vsub.s32 1, %v2059
        %v2061 = vrot.slane %v530, %v2060
        %v2062 = vmul.f32 %v2030, %v2061
        %v2063 = vmul.f32 %v2031, %v2061
        %v2064 = vmul.f32 %v2032, %v2061
        %v2065 = vmul.f32 %v2033, %v2061
        %v2066 = vmul.f32 %v2034, %v2061
        %v2067 = vmul.f32 %v2035, %v2061
        %v2068 = vmul.f32 %v2036, %v2061
        %v2069 = vmul.f32 %v2037, %v2061
        %v2070 = vmul.f32 %v2038, %v2061
        %v2071 = vmul.f32 %v2039, %v2061
        %v2072 = vmul.f32 %v2040, %v2061
        %v2073 = vmul.f32 %v2041, %v2061
        %v2074 = vmul.f32 %v2042, %v2061
        %v2075 = vmul.f32 %v2043, %v2061
        %v2076 = vmul.f32 %v2044, %v2061
        %v2077 = vmul.f32 %v2045, %v2061
        %v2078 = vmul.f32 %v2046, %v2061
        %v2079 = vmul.f32 %v2047, %v2061
        %v2080 = vmul.f32 %v2048, %v2061
        %v2081 = vmul.f32 %v2049, %v2061
        %v2082 = vmul.f32 %v2050, %v2061
        %v2083 = vmul.f32 %v2051, %v2061
        %v2084 = vmul.f32 %v2052, %v2061
        %v2085 = vmul.f32 %v2053, %v2061
        %v2086 = vmul.f32 %v2054, %v2061
        %v2087 = vmul.f32 %v2055, %v2061
        %v2088 = vmul.f32 %v2056, %v2061
        %v2089 = vmul.f32 %v2057, %v2061
        %v2090 = vadd.f32 %v2002, %v2062
        %v2091 = vadd.f32 %v2003, %v2063
        %v2092 = vadd.f32 %v2004, %v2064
        %v2093 = vadd.f32 %v2005, %v2065
        %v2094 = vadd.f32 %v2006, %v2066
        %v2095 = vadd.f32 %v2007, %v2067
        %v2096 = vadd.f32 %v2008, %v2068
        %v2097 = vadd.f32 %v2009, %v2069
        %v2098 = vadd.f32 %v2010, %v2070
        %v2099 = vadd.f32 %v2011, %v2071
        %v2100 = vadd.f32 %v2012, %v2072
        %v2101 = vadd.f32 %v2013, %v2073
        %v2102 = vadd.f32 %v2014, %v2074
        %v2103 = vadd.f32 %v2015, %v2075
        %v2104 = vadd.f32 %v2016, %v2076
        %v2105 = vadd.f32 %v2017, %v2077
        %v2106 = vadd.f32 %v2018, %v2078
        %v2107 = vadd.f32 %v2019, %v2079
        %v2108 = vadd.f32 %v2020, %v2080
        %v2109 = vadd.f32 %v2021, %v2081
        %v2110 = vadd.f32 %v2022, %v2082
        %v2111 = vadd.f32 %v2023, %v2083
        %v2112 = vadd.f32 %v2024, %v2084
        %v2113 = vadd.f32 %v2025, %v2085
        %v2114 = vadd.f32 %v2026, %v2086
        %v2115 = vadd.f32 %v2027, %v2087
        %v2116 = vadd.f32 %v2028, %v2088
        %v2117 = vadd.f32 %v2029, %v2089
        %v2118 = vld [vmem:[%s1853 + $0x3] sm:$0xff]
        %v2119 = vld [vmem:[%s1853 + $0xb] sm:$0x3f]
        %v2120 = vld [vmem:[%s1853 + $0x1b] sm:$0xff]
        %v2121 = vld [vmem:[%s1853 + $0x23] sm:$0x3f]
        %v2122 = vld [vmem:[%s1853 + $0x33] sm:$0xff]
        %v2123 = vld [vmem:[%s1853 + $0x3b] sm:$0x3f]
        %v2124 = vld [vmem:[%s1853 + $0x4b] sm:$0xff]
        %v2125 = vld [vmem:[%s1853 + $0x53] sm:$0x3f]
        %v2126 = vld [vmem:[%s1853 + $0x63] sm:$0xff]
        %v2127 = vld [vmem:[%s1853 + $0x6b] sm:$0x3f]
        %v2128 = vld [vmem:[%s1853 + $0x7b] sm:$0xff]
        %v2129 = vld [vmem:[%s1853 + $0x83] sm:$0x3f]
        %v2130 = vld [vmem:[%s1853 + $0x93] sm:$0xff]
        %v2131 = vld [vmem:[%s1853 + $0x9b] sm:$0x3f]
        %v2132 = vld [vmem:[%s1853 + $0xab] sm:$0xff]
        %v2133 = vld [vmem:[%s1853 + $0xb3] sm:$0x3f]
        %v2134 = vld [vmem:[%s1853 + $0xc3] sm:$0xff]
        %v2135 = vld [vmem:[%s1853 + $0xcb] sm:$0x3f]
        %v2136 = vld [vmem:[%s1853 + $0xdb] sm:$0xff]
        %v2137 = vld [vmem:[%s1853 + $0xe3] sm:$0x3f]
        %v2138 = vld [vmem:[%s1853 + $0xf3] sm:$0xff]
        %v2139 = vld [vmem:[%s1853 + $0xfb] sm:$0x3f]
        %v2140 = vld [vmem:[%s1853 + $0x10b] sm:$0xff]
        %v2141 = vld [vmem:[%s1853 + $0x113] sm:$0x3f]
        %v2142 = vld [vmem:[%s1853 + $0x123] sm:$0xff]
        %v2143 = vld [vmem:[%s1853 + $0x12b] sm:$0x3f]
        %v2144 = vld [vmem:[%s1853 + $0x13b] sm:$0xff]
        %v2145 = vld [vmem:[%s1853 + $0x143] sm:$0x3f]
        %v2146 = vlaneseq
        %v2147 = vshrl.u32 %v2146, 7
        %v2148 = vsub.s32 2, %v2147
        %v2149 = vrot.slane %v530, %v2148
        %v2150 = vmul.f32 %v2118, %v2149
        %v2151 = vmul.f32 %v2119, %v2149
        %v2152 = vmul.f32 %v2120, %v2149
        %v2153 = vmul.f32 %v2121, %v2149
        %v2154 = vmul.f32 %v2122, %v2149
        %v2155 = vmul.f32 %v2123, %v2149
        %v2156 = vmul.f32 %v2124, %v2149
        %v2157 = vmul.f32 %v2125, %v2149
        %v2158 = vmul.f32 %v2126, %v2149
        %v2159 = vmul.f32 %v2127, %v2149
        %v2160 = vmul.f32 %v2128, %v2149
        %v2161 = vmul.f32 %v2129, %v2149
        %v2162 = vmul.f32 %v2130, %v2149
        %v2163 = vmul.f32 %v2131, %v2149
        %v2164 = vmul.f32 %v2132, %v2149
        %v2165 = vmul.f32 %v2133, %v2149
        %v2166 = vmul.f32 %v2134, %v2149
        %v2167 = vmul.f32 %v2135, %v2149
        %v2168 = vmul.f32 %v2136, %v2149
        %v2169 = vmul.f32 %v2137, %v2149
        %v2170 = vmul.f32 %v2138, %v2149
        %v2171 = vmul.f32 %v2139, %v2149
        %v2172 = vmul.f32 %v2140, %v2149
        %v2173 = vmul.f32 %v2141, %v2149
        %v2174 = vmul.f32 %v2142, %v2149
        %v2175 = vmul.f32 %v2143, %v2149
        %v2176 = vmul.f32 %v2144, %v2149
        %v2177 = vmul.f32 %v2145, %v2149
        %v2178 = vadd.f32 %v2090, %v2150
        %v2179 = vadd.f32 %v2091, %v2151
        %v2180 = vadd.f32 %v2092, %v2152
        %v2181 = vadd.f32 %v2093, %v2153
        %v2182 = vadd.f32 %v2094, %v2154
        %v2183 = vadd.f32 %v2095, %v2155
        %v2184 = vadd.f32 %v2096, %v2156
        %v2185 = vadd.f32 %v2097, %v2157
        %v2186 = vadd.f32 %v2098, %v2158
        %v2187 = vadd.f32 %v2099, %v2159
        %v2188 = vadd.f32 %v2100, %v2160
        %v2189 = vadd.f32 %v2101, %v2161
        %v2190 = vadd.f32 %v2102, %v2162
        %v2191 = vadd.f32 %v2103, %v2163
        %v2192 = vadd.f32 %v2104, %v2164
        %v2193 = vadd.f32 %v2105, %v2165
        %v2194 = vadd.f32 %v2106, %v2166
        %v2195 = vadd.f32 %v2107, %v2167
        %v2196 = vadd.f32 %v2108, %v2168
        %v2197 = vadd.f32 %v2109, %v2169
        %v2198 = vadd.f32 %v2110, %v2170
        %v2199 = vadd.f32 %v2111, %v2171
        %v2200 = vadd.f32 %v2112, %v2172
        %v2201 = vadd.f32 %v2113, %v2173
        %v2202 = vadd.f32 %v2114, %v2174
        %v2203 = vadd.f32 %v2115, %v2175
        %v2204 = vadd.f32 %v2116, %v2176
        %v2205 = vadd.f32 %v2117, %v2177
        %v2206 = vld [vmem:[%s1853 + $0x4] sm:$0xff]
        %v2207 = vld [vmem:[%s1853 + $0xc] sm:$0x3f]
        %v2208 = vld [vmem:[%s1853 + $0x1c] sm:$0xff]
        %v2209 = vld [vmem:[%s1853 + $0x24] sm:$0x3f]
        %v2210 = vld [vmem:[%s1853 + $0x34] sm:$0xff]
        %v2211 = vld [vmem:[%s1853 + $0x3c] sm:$0x3f]
        %v2212 = vld [vmem:[%s1853 + $0x4c] sm:$0xff]
        %v2213 = vld [vmem:[%s1853 + $0x54] sm:$0x3f]
        %v2214 = vld [vmem:[%s1853 + $0x64] sm:$0xff]
        %v2215 = vld [vmem:[%s1853 + $0x6c] sm:$0x3f]
        %v2216 = vld [vmem:[%s1853 + $0x7c] sm:$0xff]
        %v2217 = vld [vmem:[%s1853 + $0x84] sm:$0x3f]
        %v2218 = vld [vmem:[%s1853 + $0x94] sm:$0xff]
        %v2219 = vld [vmem:[%s1853 + $0x9c] sm:$0x3f]
        %v2220 = vld [vmem:[%s1853 + $0xac] sm:$0xff]
        %v2221 = vld [vmem:[%s1853 + $0xb4] sm:$0x3f]
        %v2222 = vld [vmem:[%s1853 + $0xc4] sm:$0xff]
        %v2223 = vld [vmem:[%s1853 + $0xcc] sm:$0x3f]
        %v2224 = vld [vmem:[%s1853 + $0xdc] sm:$0xff]
        %v2225 = vld [vmem:[%s1853 + $0xe4] sm:$0x3f]
        %v2226 = vld [vmem:[%s1853 + $0xf4] sm:$0xff]
        %v2227 = vld [vmem:[%s1853 + $0xfc] sm:$0x3f]
        %v2228 = vld [vmem:[%s1853 + $0x10c] sm:$0xff]
        %v2229 = vld [vmem:[%s1853 + $0x114] sm:$0x3f]
        %v2230 = vld [vmem:[%s1853 + $0x124] sm:$0xff]
        %v2231 = vld [vmem:[%s1853 + $0x12c] sm:$0x3f]
        %v2232 = vld [vmem:[%s1853 + $0x13c] sm:$0xff]
        %v2233 = vld [vmem:[%s1853 + $0x144] sm:$0x3f]
        %v2234 = vlaneseq
        %v2235 = vshrl.u32 %v2234, 7
        %v2236 = vsub.s32 3, %v2235
        %v2237 = vrot.slane %v530, %v2236
        %v2238 = vmul.f32 %v2206, %v2237
        %v2239 = vmul.f32 %v2207, %v2237
        %v2240 = vmul.f32 %v2208, %v2237
        %v2241 = vmul.f32 %v2209, %v2237
        %v2242 = vmul.f32 %v2210, %v2237
        %v2243 = vmul.f32 %v2211, %v2237
        %v2244 = vmul.f32 %v2212, %v2237
        %v2245 = vmul.f32 %v2213, %v2237
        %v2246 = vmul.f32 %v2214, %v2237
        %v2247 = vmul.f32 %v2215, %v2237
        %v2248 = vmul.f32 %v2216, %v2237
        %v2249 = vmul.f32 %v2217, %v2237
        %v2250 = vmul.f32 %v2218, %v2237
        %v2251 = vmul.f32 %v2219, %v2237
        %v2252 = vmul.f32 %v2220, %v2237
        %v2253 = vmul.f32 %v2221, %v2237
        %v2254 = vmul.f32 %v2222, %v2237
        %v2255 = vmul.f32 %v2223, %v2237
        %v2256 = vmul.f32 %v2224, %v2237
        %v2257 = vmul.f32 %v2225, %v2237
        %v2258 = vmul.f32 %v2226, %v2237
        %v2259 = vmul.f32 %v2227, %v2237
        %v2260 = vmul.f32 %v2228, %v2237
        %v2261 = vmul.f32 %v2229, %v2237
        %v2262 = vmul.f32 %v2230, %v2237
        %v2263 = vmul.f32 %v2231, %v2237
        %v2264 = vmul.f32 %v2232, %v2237
        %v2265 = vmul.f32 %v2233, %v2237
        %v2266 = vadd.f32 %v2178, %v2238
        %v2267 = vadd.f32 %v2179, %v2239
        %v2268 = vadd.f32 %v2180, %v2240
        %v2269 = vadd.f32 %v2181, %v2241
        %v2270 = vadd.f32 %v2182, %v2242
        %v2271 = vadd.f32 %v2183, %v2243
        %v2272 = vadd.f32 %v2184, %v2244
        %v2273 = vadd.f32 %v2185, %v2245
        %v2274 = vadd.f32 %v2186, %v2246
        %v2275 = vadd.f32 %v2187, %v2247
        %v2276 = vadd.f32 %v2188, %v2248
        %v2277 = vadd.f32 %v2189, %v2249
        %v2278 = vadd.f32 %v2190, %v2250
        %v2279 = vadd.f32 %v2191, %v2251
        %v2280 = vadd.f32 %v2192, %v2252
        %v2281 = vadd.f32 %v2193, %v2253
        %v2282 = vadd.f32 %v2194, %v2254
        %v2283 = vadd.f32 %v2195, %v2255
        %v2284 = vadd.f32 %v2196, %v2256
        %v2285 = vadd.f32 %v2197, %v2257
        %v2286 = vadd.f32 %v2198, %v2258
        %v2287 = vadd.f32 %v2199, %v2259
        %v2288 = vadd.f32 %v2200, %v2260
        %v2289 = vadd.f32 %v2201, %v2261
        %v2290 = vadd.f32 %v2202, %v2262
        %v2291 = vadd.f32 %v2203, %v2263
        %v2292 = vadd.f32 %v2204, %v2264
        %v2293 = vadd.f32 %v2205, %v2265
        %s2294 = scalar_lea.vmem [#allocation2], 96
        %v2295 = vld [vmem:[%s2294] sm:$0xff]
        %v2296 = vld [vmem:[%s2294 + $0x8] sm:$0x3f]
        %v2297 = vld [vmem:[%s2294 + $0x18] sm:$0xff]
        %v2298 = vld [vmem:[%s2294 + $0x20] sm:$0x3f]
        %v2299 = vld [vmem:[%s2294 + $0x30] sm:$0xff]
        %v2300 = vld [vmem:[%s2294 + $0x38] sm:$0x3f]
        %v2301 = vld [vmem:[%s2294 + $0x48] sm:$0xff]
        %v2302 = vld [vmem:[%s2294 + $0x50] sm:$0x3f]
        %v2303 = vld [vmem:[%s2294 + $0x60] sm:$0xff]
        %v2304 = vld [vmem:[%s2294 + $0x68] sm:$0x3f]
        %v2305 = vld [vmem:[%s2294 + $0x78] sm:$0xff]
        %v2306 = vld [vmem:[%s2294 + $0x80] sm:$0x3f]
        %v2307 = vld [vmem:[%s2294 + $0x90] sm:$0xff]
        %v2308 = vld [vmem:[%s2294 + $0x98] sm:$0x3f]
        %v2309 = vld [vmem:[%s2294 + $0xa8] sm:$0xff]
        %v2310 = vld [vmem:[%s2294 + $0xb0] sm:$0x3f]
        %v2311 = vld [vmem:[%s2294 + $0xc0] sm:$0xff]
        %v2312 = vld [vmem:[%s2294 + $0xc8] sm:$0x3f]
        %v2313 = vld [vmem:[%s2294 + $0xd8] sm:$0xff]
        %v2314 = vld [vmem:[%s2294 + $0xe0] sm:$0x3f]
        %v2315 = vld [vmem:[%s2294 + $0xf0] sm:$0xff]
        %v2316 = vld [vmem:[%s2294 + $0xf8] sm:$0x3f]
        %v2317 = vld [vmem:[%s2294 + $0x108] sm:$0xff]
        %v2318 = vld [vmem:[%s2294 + $0x110] sm:$0x3f]
        %v2319 = vld [vmem:[%s2294 + $0x120] sm:$0xff]
        %v2320 = vld [vmem:[%s2294 + $0x128] sm:$0x3f]
        %v2321 = vld [vmem:[%s2294 + $0x138] sm:$0xff]
        %v2322 = vld [vmem:[%s2294 + $0x140] sm:$0x3f]
        %v2323 = vlaneseq
        %v2324 = vshrl.u32 %v2323, 7
        %v2325 = vsub.s32 4, %v2324
        %v2326 = vrot.slane %v530, %v2325
        %v2327 = vmul.f32 %v2295, %v2326
        %v2328 = vmul.f32 %v2296, %v2326
        %v2329 = vmul.f32 %v2297, %v2326
        %v2330 = vmul.f32 %v2298, %v2326
        %v2331 = vmul.f32 %v2299, %v2326
        %v2332 = vmul.f32 %v2300, %v2326
        %v2333 = vmul.f32 %v2301, %v2326
        %v2334 = vmul.f32 %v2302, %v2326
        %v2335 = vmul.f32 %v2303, %v2326
        %v2336 = vmul.f32 %v2304, %v2326
        %v2337 = vmul.f32 %v2305, %v2326
        %v2338 = vmul.f32 %v2306, %v2326
        %v2339 = vmul.f32 %v2307, %v2326
        %v2340 = vmul.f32 %v2308, %v2326
        %v2341 = vmul.f32 %v2309, %v2326
        %v2342 = vmul.f32 %v2310, %v2326
        %v2343 = vmul.f32 %v2311, %v2326
        %v2344 = vmul.f32 %v2312, %v2326
        %v2345 = vmul.f32 %v2313, %v2326
        %v2346 = vmul.f32 %v2314, %v2326
        %v2347 = vmul.f32 %v2315, %v2326
        %v2348 = vmul.f32 %v2316, %v2326
        %v2349 = vmul.f32 %v2317, %v2326
        %v2350 = vmul.f32 %v2318, %v2326
        %v2351 = vmul.f32 %v2319, %v2326
        %v2352 = vmul.f32 %v2320, %v2326
        %v2353 = vmul.f32 %v2321, %v2326
        %v2354 = vmul.f32 %v2322, %v2326
        %v2355 = vadd.f32 %v2266, %v2327
        %v2356 = vadd.f32 %v2267, %v2328
        %v2357 = vadd.f32 %v2268, %v2329
        %v2358 = vadd.f32 %v2269, %v2330
        %v2359 = vadd.f32 %v2270, %v2331
        %v2360 = vadd.f32 %v2271, %v2332
        %v2361 = vadd.f32 %v2272, %v2333
        %v2362 = vadd.f32 %v2273, %v2334
        %v2363 = vadd.f32 %v2274, %v2335
        %v2364 = vadd.f32 %v2275, %v2336
        %v2365 = vadd.f32 %v2276, %v2337
        %v2366 = vadd.f32 %v2277, %v2338
        %v2367 = vadd.f32 %v2278, %v2339
        %v2368 = vadd.f32 %v2279, %v2340
        %v2369 = vadd.f32 %v2280, %v2341
        %v2370 = vadd.f32 %v2281, %v2342
        %v2371 = vadd.f32 %v2282, %v2343
        %v2372 = vadd.f32 %v2283, %v2344
        %v2373 = vadd.f32 %v2284, %v2345
        %v2374 = vadd.f32 %v2285, %v2346
        %v2375 = vadd.f32 %v2286, %v2347
        %v2376 = vadd.f32 %v2287, %v2348
        %v2377 = vadd.f32 %v2288, %v2349
        %v2378 = vadd.f32 %v2289, %v2350
        %v2379 = vadd.f32 %v2290, %v2351
        %v2380 = vadd.f32 %v2291, %v2352
        %v2381 = vadd.f32 %v2292, %v2353
        %v2382 = vadd.f32 %v2293, %v2354
        %v2383 = vld [vmem:[%s2294 + $0x1] sm:$0xff]
        %v2384 = vld [vmem:[%s2294 + $0x9] sm:$0x3f]
        %v2385 = vld [vmem:[%s2294 + $0x19] sm:$0xff]
        %v2386 = vld [vmem:[%s2294 + $0x21] sm:$0x3f]
        %v2387 = vld [vmem:[%s2294 + $0x31] sm:$0xff]
        %v2388 = vld [vmem:[%s2294 + $0x39] sm:$0x3f]
        %v2389 = vld [vmem:[%s2294 + $0x49] sm:$0xff]
        %v2390 = vld [vmem:[%s2294 + $0x51] sm:$0x3f]
        %v2391 = vld [vmem:[%s2294 + $0x61] sm:$0xff]
        %v2392 = vld [vmem:[%s2294 + $0x69] sm:$0x3f]
        %v2393 = vld [vmem:[%s2294 + $0x79] sm:$0xff]
        %v2394 = vld [vmem:[%s2294 + $0x81] sm:$0x3f]
        %v2395 = vld [vmem:[%s2294 + $0x91] sm:$0xff]
        %v2396 = vld [vmem:[%s2294 + $0x99] sm:$0x3f]
        %v2397 = vld [vmem:[%s2294 + $0xa9] sm:$0xff]
        %v2398 = vld [vmem:[%s2294 + $0xb1] sm:$0x3f]
        %v2399 = vld [vmem:[%s2294 + $0xc1] sm:$0xff]
        %v2400 = vld [vmem:[%s2294 + $0xc9] sm:$0x3f]
        %v2401 = vld [vmem:[%s2294 + $0xd9] sm:$0xff]
        %v2402 = vld [vmem:[%s2294 + $0xe1] sm:$0x3f]
        %v2403 = vld [vmem:[%s2294 + $0xf1] sm:$0xff]
        %v2404 = vld [vmem:[%s2294 + $0xf9] sm:$0x3f]
        %v2405 = vld [vmem:[%s2294 + $0x109] sm:$0xff]
        %v2406 = vld [vmem:[%s2294 + $0x111] sm:$0x3f]
        %v2407 = vld [vmem:[%s2294 + $0x121] sm:$0xff]
        %v2408 = vld [vmem:[%s2294 + $0x129] sm:$0x3f]
        %v2409 = vld [vmem:[%s2294 + $0x139] sm:$0xff]
        %v2410 = vld [vmem:[%s2294 + $0x141] sm:$0x3f]
        %v2411 = vlaneseq
        %v2412 = vshrl.u32 %v2411, 7
        %v2413 = vsub.s32 5, %v2412
        %v2414 = vrot.slane %v530, %v2413
        %v2415 = vmul.f32 %v2383, %v2414
        %v2416 = vmul.f32 %v2384, %v2414
        %v2417 = vmul.f32 %v2385, %v2414
        %v2418 = vmul.f32 %v2386, %v2414
        %v2419 = vmul.f32 %v2387, %v2414
        %v2420 = vmul.f32 %v2388, %v2414
        %v2421 = vmul.f32 %v2389, %v2414
        %v2422 = vmul.f32 %v2390, %v2414
        %v2423 = vmul.f32 %v2391, %v2414
        %v2424 = vmul.f32 %v2392, %v2414
        %v2425 = vmul.f32 %v2393, %v2414
        %v2426 = vmul.f32 %v2394, %v2414
        %v2427 = vmul.f32 %v2395, %v2414
        %v2428 = vmul.f32 %v2396, %v2414
        %v2429 = vmul.f32 %v2397, %v2414
        %v2430 = vmul.f32 %v2398, %v2414
        %v2431 = vmul.f32 %v2399, %v2414
        %v2432 = vmul.f32 %v2400, %v2414
        %v2433 = vmul.f32 %v2401, %v2414
        %v2434 = vmul.f32 %v2402, %v2414
        %v2435 = vmul.f32 %v2403, %v2414
        %v2436 = vmul.f32 %v2404, %v2414
        %v2437 = vmul.f32 %v2405, %v2414
        %v2438 = vmul.f32 %v2406, %v2414
        %v2439 = vmul.f32 %v2407, %v2414
        %v2440 = vmul.f32 %v2408, %v2414
        %v2441 = vmul.f32 %v2409, %v2414
        %v2442 = vmul.f32 %v2410, %v2414
        %v2443 = vadd.f32 %v2355, %v2415
        %v2444 = vadd.f32 %v2356, %v2416
        %v2445 = vadd.f32 %v2357, %v2417
        %v2446 = vadd.f32 %v2358, %v2418
        %v2447 = vadd.f32 %v2359, %v2419
        %v2448 = vadd.f32 %v2360, %v2420
        %v2449 = vadd.f32 %v2361, %v2421
        %v2450 = vadd.f32 %v2362, %v2422
        %v2451 = vadd.f32 %v2363, %v2423
        %v2452 = vadd.f32 %v2364, %v2424
        %v2453 = vadd.f32 %v2365, %v2425
        %v2454 = vadd.f32 %v2366, %v2426
        %v2455 = vadd.f32 %v2367, %v2427
        %v2456 = vadd.f32 %v2368, %v2428
        %v2457 = vadd.f32 %v2369, %v2429
        %v2458 = vadd.f32 %v2370, %v2430
        %v2459 = vadd.f32 %v2371, %v2431
        %v2460 = vadd.f32 %v2372, %v2432
        %v2461 = vadd.f32 %v2373, %v2433
        %v2462 = vadd.f32 %v2374, %v2434
        %v2463 = vadd.f32 %v2375, %v2435
        %v2464 = vadd.f32 %v2376, %v2436
        %v2465 = vadd.f32 %v2377, %v2437
        %v2466 = vadd.f32 %v2378, %v2438
        %v2467 = vadd.f32 %v2379, %v2439
        %v2468 = vadd.f32 %v2380, %v2440
        %v2469 = vadd.f32 %v2381, %v2441
        %v2470 = vadd.f32 %v2382, %v2442
        %v2471 = vld [vmem:[%s2294 + $0x2] sm:$0xff]
        %v2472 = vld [vmem:[%s2294 + $0xa] sm:$0x3f]
        %v2473 = vld [vmem:[%s2294 + $0x1a] sm:$0xff]
        %v2474 = vld [vmem:[%s2294 + $0x22] sm:$0x3f]
        %v2475 = vld [vmem:[%s2294 + $0x32] sm:$0xff]
        %v2476 = vld [vmem:[%s2294 + $0x3a] sm:$0x3f]
        %v2477 = vld [vmem:[%s2294 + $0x4a] sm:$0xff]
        %v2478 = vld [vmem:[%s2294 + $0x52] sm:$0x3f]
        %v2479 = vld [vmem:[%s2294 + $0x62] sm:$0xff]
        %v2480 = vld [vmem:[%s2294 + $0x6a] sm:$0x3f]
        %v2481 = vld [vmem:[%s2294 + $0x7a] sm:$0xff]
        %v2482 = vld [vmem:[%s2294 + $0x82] sm:$0x3f]
        %v2483 = vld [vmem:[%s2294 + $0x92] sm:$0xff]
        %v2484 = vld [vmem:[%s2294 + $0x9a] sm:$0x3f]
        %v2485 = vld [vmem:[%s2294 + $0xaa] sm:$0xff]
        %v2486 = vld [vmem:[%s2294 + $0xb2] sm:$0x3f]
        %v2487 = vld [vmem:[%s2294 + $0xc2] sm:$0xff]
        %v2488 = vld [vmem:[%s2294 + $0xca] sm:$0x3f]
        %v2489 = vld [vmem:[%s2294 + $0xda] sm:$0xff]
        %v2490 = vld [vmem:[%s2294 + $0xe2] sm:$0x3f]
        %v2491 = vld [vmem:[%s2294 + $0xf2] sm:$0xff]
        %v2492 = vld [vmem:[%s2294 + $0xfa] sm:$0x3f]
        %v2493 = vld [vmem:[%s2294 + $0x10a] sm:$0xff]
        %v2494 = vld [vmem:[%s2294 + $0x112] sm:$0x3f]
        %v2495 = vld [vmem:[%s2294 + $0x122] sm:$0xff]
        %v2496 = vld [vmem:[%s2294 + $0x12a] sm:$0x3f]
        %v2497 = vld [vmem:[%s2294 + $0x13a] sm:$0xff]
        %v2498 = vld [vmem:[%s2294 + $0x142] sm:$0x3f]
        %v2499 = vlaneseq
        %v2500 = vshrl.u32 %v2499, 7
        %v2501 = vsub.s32 6, %v2500
        %v2502 = vrot.slane %v530, %v2501
        %v2503 = vmul.f32 %v2471, %v2502
        %v2504 = vmul.f32 %v2472, %v2502
        %v2505 = vmul.f32 %v2473, %v2502
        %v2506 = vmul.f32 %v2474, %v2502
        %v2507 = vmul.f32 %v2475, %v2502
        %v2508 = vmul.f32 %v2476, %v2502
        %v2509 = vmul.f32 %v2477, %v2502
        %v2510 = vmul.f32 %v2478, %v2502
        %v2511 = vmul.f32 %v2479, %v2502
        %v2512 = vmul.f32 %v2480, %v2502
        %v2513 = vmul.f32 %v2481, %v2502
        %v2514 = vmul.f32 %v2482, %v2502
        %v2515 = vmul.f32 %v2483, %v2502
        %v2516 = vmul.f32 %v2484, %v2502
        %v2517 = vmul.f32 %v2485, %v2502
        %v2518 = vmul.f32 %v2486, %v2502
        %v2519 = vmul.f32 %v2487, %v2502
        %v2520 = vmul.f32 %v2488, %v2502
        %v2521 = vmul.f32 %v2489, %v2502
        %v2522 = vmul.f32 %v2490, %v2502
        %v2523 = vmul.f32 %v2491, %v2502
        %v2524 = vmul.f32 %v2492, %v2502
        %v2525 = vmul.f32 %v2493, %v2502
        %v2526 = vmul.f32 %v2494, %v2502
        %v2527 = vmul.f32 %v2495, %v2502
        %v2528 = vmul.f32 %v2496, %v2502
        %v2529 = vmul.f32 %v2497, %v2502
        %v2530 = vmul.f32 %v2498, %v2502
        %v2531 = vadd.f32 %v2443, %v2503
        %v2532 = vadd.f32 %v2444, %v2504
        %v2533 = vadd.f32 %v2445, %v2505
        %v2534 = vadd.f32 %v2446, %v2506
        %v2535 = vadd.f32 %v2447, %v2507
        %v2536 = vadd.f32 %v2448, %v2508
        %v2537 = vadd.f32 %v2449, %v2509
        %v2538 = vadd.f32 %v2450, %v2510
        %v2539 = vadd.f32 %v2451, %v2511
        %v2540 = vadd.f32 %v2452, %v2512
        %v2541 = vadd.f32 %v2453, %v2513
        %v2542 = vadd.f32 %v2454, %v2514
        %v2543 = vadd.f32 %v2455, %v2515
        %v2544 = vadd.f32 %v2456, %v2516
        %v2545 = vadd.f32 %v2457, %v2517
        %v2546 = vadd.f32 %v2458, %v2518
        %v2547 = vadd.f32 %v2459, %v2519
        %v2548 = vadd.f32 %v2460, %v2520
        %v2549 = vadd.f32 %v2461, %v2521
        %v2550 = vadd.f32 %v2462, %v2522
        %v2551 = vadd.f32 %v2463, %v2523
        %v2552 = vadd.f32 %v2464, %v2524
        %v2553 = vadd.f32 %v2465, %v2525
        %v2554 = vadd.f32 %v2466, %v2526
        %v2555 = vadd.f32 %v2467, %v2527
        %v2556 = vadd.f32 %v2468, %v2528
        %v2557 = vadd.f32 %v2469, %v2529
        %v2558 = vadd.f32 %v2470, %v2530
        %v2559 = vld [vmem:[%s2294 + $0x3] sm:$0xff]
        %v2560 = vld [vmem:[%s2294 + $0xb] sm:$0x3f]
        %v2561 = vld [vmem:[%s2294 + $0x1b] sm:$0xff]
        %v2562 = vld [vmem:[%s2294 + $0x23] sm:$0x3f]
        %v2563 = vld [vmem:[%s2294 + $0x33] sm:$0xff]
        %v2564 = vld [vmem:[%s2294 + $0x3b] sm:$0x3f]
        %v2565 = vld [vmem:[%s2294 + $0x4b] sm:$0xff]
        %v2566 = vld [vmem:[%s2294 + $0x53] sm:$0x3f]
        %v2567 = vld [vmem:[%s2294 + $0x63] sm:$0xff]
        %v2568 = vld [vmem:[%s2294 + $0x6b] sm:$0x3f]
        %v2569 = vld [vmem:[%s2294 + $0x7b] sm:$0xff]
        %v2570 = vld [vmem:[%s2294 + $0x83] sm:$0x3f]
        %v2571 = vld [vmem:[%s2294 + $0x93] sm:$0xff]
        %v2572 = vld [vmem:[%s2294 + $0x9b] sm:$0x3f]
        %v2573 = vld [vmem:[%s2294 + $0xab] sm:$0xff]
        %v2574 = vld [vmem:[%s2294 + $0xb3] sm:$0x3f]
        %v2575 = vld [vmem:[%s2294 + $0xc3] sm:$0xff]
        %v2576 = vld [vmem:[%s2294 + $0xcb] sm:$0x3f]
        %v2577 = vld [vmem:[%s2294 + $0xdb] sm:$0xff]
        %v2578 = vld [vmem:[%s2294 + $0xe3] sm:$0x3f]
        %v2579 = vld [vmem:[%s2294 + $0xf3] sm:$0xff]
        %v2580 = vld [vmem:[%s2294 + $0xfb] sm:$0x3f]
        %v2581 = vld [vmem:[%s2294 + $0x10b] sm:$0xff]
        %v2582 = vld [vmem:[%s2294 + $0x113] sm:$0x3f]
        %v2583 = vld [vmem:[%s2294 + $0x123] sm:$0xff]
        %v2584 = vld [vmem:[%s2294 + $0x12b] sm:$0x3f]
        %v2585 = vld [vmem:[%s2294 + $0x13b] sm:$0xff]
        %v2586 = vld [vmem:[%s2294 + $0x143] sm:$0x3f]
        %v2587 = vlaneseq
        %v2588 = vshrl.u32 %v2587, 7
        %v2589 = vsub.s32 7, %v2588
        %v2590 = vrot.slane %v530, %v2589
        %v2591 = vmul.f32 %v2559, %v2590
        %v2592 = vmul.f32 %v2560, %v2590
        %v2593 = vmul.f32 %v2561, %v2590
        %v2594 = vmul.f32 %v2562, %v2590
        %v2595 = vmul.f32 %v2563, %v2590
        %v2596 = vmul.f32 %v2564, %v2590
        %v2597 = vmul.f32 %v2565, %v2590
        %v2598 = vmul.f32 %v2566, %v2590
        %v2599 = vmul.f32 %v2567, %v2590
        %v2600 = vmul.f32 %v2568, %v2590
        %v2601 = vmul.f32 %v2569, %v2590
        %v2602 = vmul.f32 %v2570, %v2590
        %v2603 = vmul.f32 %v2571, %v2590
        %v2604 = vmul.f32 %v2572, %v2590
        %v2605 = vmul.f32 %v2573, %v2590
        %v2606 = vmul.f32 %v2574, %v2590
        %v2607 = vmul.f32 %v2575, %v2590
        %v2608 = vmul.f32 %v2576, %v2590
        %v2609 = vmul.f32 %v2577, %v2590
        %v2610 = vmul.f32 %v2578, %v2590
        %v2611 = vmul.f32 %v2579, %v2590
        %v2612 = vmul.f32 %v2580, %v2590
        %v2613 = vmul.f32 %v2581, %v2590
        %v2614 = vmul.f32 %v2582, %v2590
        %v2615 = vmul.f32 %v2583, %v2590
        %v2616 = vmul.f32 %v2584, %v2590
        %v2617 = vmul.f32 %v2585, %v2590
        %v2618 = vmul.f32 %v2586, %v2590
        %v2619 = vadd.f32 %v2531, %v2591
        %v2620 = vadd.f32 %v2532, %v2592
        %v2621 = vadd.f32 %v2533, %v2593
        %v2622 = vadd.f32 %v2534, %v2594
        %v2623 = vadd.f32 %v2535, %v2595
        %v2624 = vadd.f32 %v2536, %v2596
        %v2625 = vadd.f32 %v2537, %v2597
        %v2626 = vadd.f32 %v2538, %v2598
        %v2627 = vadd.f32 %v2539, %v2599
        %v2628 = vadd.f32 %v2540, %v2600
        %v2629 = vadd.f32 %v2541, %v2601
        %v2630 = vadd.f32 %v2542, %v2602
        %v2631 = vadd.f32 %v2543, %v2603
        %v2632 = vadd.f32 %v2544, %v2604
        %v2633 = vadd.f32 %v2545, %v2605
        %v2634 = vadd.f32 %v2546, %v2606
        %v2635 = vadd.f32 %v2547, %v2607
        %v2636 = vadd.f32 %v2548, %v2608
        %v2637 = vadd.f32 %v2549, %v2609
        %v2638 = vadd.f32 %v2550, %v2610
        %v2639 = vadd.f32 %v2551, %v2611
        %v2640 = vadd.f32 %v2552, %v2612
        %v2641 = vadd.f32 %v2553, %v2613
        %v2642 = vadd.f32 %v2554, %v2614
        %v2643 = vadd.f32 %v2555, %v2615
        %v2644 = vadd.f32 %v2556, %v2616
        %v2645 = vadd.f32 %v2557, %v2617
        %v2646 = vadd.f32 %v2558, %v2618
        %v2647 = vld [vmem:[%s2294 + $0x4] sm:$0xff]
        %v2648 = vld [vmem:[%s2294 + $0xc] sm:$0x3f]
        %v2649 = vld [vmem:[%s2294 + $0x1c] sm:$0xff]
        %v2650 = vld [vmem:[%s2294 + $0x24] sm:$0x3f]
        %v2651 = vld [vmem:[%s2294 + $0x34] sm:$0xff]
        %v2652 = vld [vmem:[%s2294 + $0x3c] sm:$0x3f]
        %v2653 = vld [vmem:[%s2294 + $0x4c] sm:$0xff]
        %v2654 = vld [vmem:[%s2294 + $0x54] sm:$0x3f]
        %v2655 = vld [vmem:[%s2294 + $0x64] sm:$0xff]
        %v2656 = vld [vmem:[%s2294 + $0x6c] sm:$0x3f]
        %v2657 = vld [vmem:[%s2294 + $0x7c] sm:$0xff]
        %v2658 = vld [vmem:[%s2294 + $0x84] sm:$0x3f]
        %v2659 = vld [vmem:[%s2294 + $0x94] sm:$0xff]
        %v2660 = vld [vmem:[%s2294 + $0x9c] sm:$0x3f]
        %v2661 = vld [vmem:[%s2294 + $0xac] sm:$0xff]
        %v2662 = vld [vmem:[%s2294 + $0xb4] sm:$0x3f]
        %v2663 = vld [vmem:[%s2294 + $0xc4] sm:$0xff]
        %v2664 = vld [vmem:[%s2294 + $0xcc] sm:$0x3f]
        %v2665 = vld [vmem:[%s2294 + $0xdc] sm:$0xff]
        %v2666 = vld [vmem:[%s2294 + $0xe4] sm:$0x3f]
        %v2667 = vld [vmem:[%s2294 + $0xf4] sm:$0xff]
        %v2668 = vld [vmem:[%s2294 + $0xfc] sm:$0x3f]
        %v2669 = vld [vmem:[%s2294 + $0x10c] sm:$0xff]
        %v2670 = vld [vmem:[%s2294 + $0x114] sm:$0x3f]
        %v2671 = vld [vmem:[%s2294 + $0x124] sm:$0xff]
        %v2672 = vld [vmem:[%s2294 + $0x12c] sm:$0x3f]
        %v2673 = vld [vmem:[%s2294 + $0x13c] sm:$0xff]
        %v2674 = vld [vmem:[%s2294 + $0x144] sm:$0x3f]
        %v2675 = vlaneseq
        %v2676 = vshrl.u32 %v2675, 7
        %v2677 = vsub.s32 0, %v2676
        %v2678 = vrot.slane %v531, %v2677
        %v2679 = vmul.f32 %v2647, %v2678
        %v2680 = vmul.f32 %v2648, %v2678
        %v2681 = vmul.f32 %v2649, %v2678
        %v2682 = vmul.f32 %v2650, %v2678
        %v2683 = vmul.f32 %v2651, %v2678
        %v2684 = vmul.f32 %v2652, %v2678
        %v2685 = vmul.f32 %v2653, %v2678
        %v2686 = vmul.f32 %v2654, %v2678
        %v2687 = vmul.f32 %v2655, %v2678
        %v2688 = vmul.f32 %v2656, %v2678
        %v2689 = vmul.f32 %v2657, %v2678
        %v2690 = vmul.f32 %v2658, %v2678
        %v2691 = vmul.f32 %v2659, %v2678
        %v2692 = vmul.f32 %v2660, %v2678
        %v2693 = vmul.f32 %v2661, %v2678
        %v2694 = vmul.f32 %v2662, %v2678
        %v2695 = vmul.f32 %v2663, %v2678
        %v2696 = vmul.f32 %v2664, %v2678
        %v2697 = vmul.f32 %v2665, %v2678
        %v2698 = vmul.f32 %v2666, %v2678
        %v2699 = vmul.f32 %v2667, %v2678
        %v2700 = vmul.f32 %v2668, %v2678
        %v2701 = vmul.f32 %v2669, %v2678
        %v2702 = vmul.f32 %v2670, %v2678
        %v2703 = vmul.f32 %v2671, %v2678
        %v2704 = vmul.f32 %v2672, %v2678
        %v2705 = vmul.f32 %v2673, %v2678
        %v2706 = vmul.f32 %v2674, %v2678
        %v2707 = vadd.f32 %v2619, %v2679
        %v2708 = vadd.f32 %v2620, %v2680
        %v2709 = vadd.f32 %v2621, %v2681
        %v2710 = vadd.f32 %v2622, %v2682
        %v2711 = vadd.f32 %v2623, %v2683
        %v2712 = vadd.f32 %v2624, %v2684
        %v2713 = vadd.f32 %v2625, %v2685
        %v2714 = vadd.f32 %v2626, %v2686
        %v2715 = vadd.f32 %v2627, %v2687
        %v2716 = vadd.f32 %v2628, %v2688
        %v2717 = vadd.f32 %v2629, %v2689
        %v2718 = vadd.f32 %v2630, %v2690
        %v2719 = vadd.f32 %v2631, %v2691
        %v2720 = vadd.f32 %v2632, %v2692
        %v2721 = vadd.f32 %v2633, %v2693
        %v2722 = vadd.f32 %v2634, %v2694
        %v2723 = vadd.f32 %v2635, %v2695
        %v2724 = vadd.f32 %v2636, %v2696
        %v2725 = vadd.f32 %v2637, %v2697
        %v2726 = vadd.f32 %v2638, %v2698
        %v2727 = vadd.f32 %v2639, %v2699
        %v2728 = vadd.f32 %v2640, %v2700
        %v2729 = vadd.f32 %v2641, %v2701
        %v2730 = vadd.f32 %v2642, %v2702
        %v2731 = vadd.f32 %v2643, %v2703
        %v2732 = vadd.f32 %v2644, %v2704
        %v2733 = vadd.f32 %v2645, %v2705
        %v2734 = vadd.f32 %v2646, %v2706
        %vm2735 = vcmask 1045504
        %v2736 = vsel %vm2735, %v2708, 0.0
        %v2737 = vadd.f32 %v2707, %v2736
        %v2738 = vadd.f32 %v2737, %v2709
        %v2739 = vsel %vm2735, %v2710, 0.0
        %v2740 = vadd.f32 %v2738, %v2739
        %v2741 = vadd.f32 %v2740, %v2711
        %v2742 = vsel %vm2735, %v2712, 0.0
        %v2743 = vadd.f32 %v2741, %v2742
        %v2744 = vadd.f32 %v2743, %v2713
        %v2745 = vsel %vm2735, %v2714, 0.0
        %v2746 = vadd.f32 %v2744, %v2745
        %v2747 = vadd.f32 %v2746, %v2715
        %v2748 = vsel %vm2735, %v2716, 0.0
        %v2749 = vadd.f32 %v2747, %v2748
        %v2750 = vadd.f32 %v2749, %v2717
        %v2751 = vsel %vm2735, %v2718, 0.0
        %v2752 = vadd.f32 %v2750, %v2751
        %v2753 = vadd.f32 %v2752, %v2719
        %v2754 = vsel %vm2735, %v2720, 0.0
        %v2755 = vadd.f32 %v2753, %v2754
        %v2756 = vadd.f32 %v2755, %v2721
        %v2757 = vsel %vm2735, %v2722, 0.0
        %v2758 = vadd.f32 %v2756, %v2757
        %v2759 = vadd.f32 %v2758, %v2723
        %v2760 = vsel %vm2735, %v2724, 0.0
        %v2761 = vadd.f32 %v2759, %v2760
        %v2762 = vadd.f32 %v2761, %v2725
        %v2763 = vsel %vm2735, %v2726, 0.0
        %v2764 = vadd.f32 %v2762, %v2763
        %v2765 = vadd.f32 %v2764, %v2727
        %v2766 = vsel %vm2735, %v2728, 0.0
        %v2767 = vadd.f32 %v2765, %v2766
        %v2768 = vadd.f32 %v2767, %v2729
        %v2769 = vsel %vm2735, %v2730, 0.0
        %v2770 = vadd.f32 %v2768, %v2769
        %v2771 = vadd.f32 %v2770, %v2731
        %v2772 = vsel %vm2735, %v2732, 0.0
        %v2773 = vadd.f32 %v2771, %v2772
        %v2774 = vadd.f32 %v2773, %v2733
        %v2775 = vsel %vm2735, %v2734, 0.0
        %v2776 = vadd.f32 %v2774, %v2775
        %v2777 = vrot.slane %v2776, 4
        %v2778 = vadd.f32 %v2776, %v2777
        %v2779 = vrot.slane %v2778, 2
        %v2780 = vadd.f32 %v2778, %v2779
        %v2781 = vrot.slane %v2780, 1
        %v2782 = vadd.f32 %v2780, %v2781
        %v2783 = vmul.f32 %v2782, 0.0051020407
        %v2784 = vsub.f32 %v2707, %v2783
        %v2785 = vsub.f32 %v2708, %v2783
        %v2786 = vmul.f32 %v2784, %v2784
        %v2787 = vmul.f32 %v2785, %v2785
        %v2788 = vsel %vm2735, %v2787, 0.0
        %v2789 = vadd.f32 %v2786, %v2788
        %v2790 = vrot.slane %v2789, 4
        %v2791 = vadd.f32 %v2789, %v2790
        %v2792 = vrot.slane %v2791, 2
        %v2793 = vadd.f32 %v2791, %v2792
        %v2794 = vrot.slane %v2793, 1
        %v2795 = vadd.f32 %v2793, %v2794
        %v2796 = vadd.f32 %v2795, 0.0
        %v2797 = vsub.f32 %v2709, %v2783
        %v2798 = vsub.f32 %v2710, %v2783
        %v2799 = vmul.f32 %v2797, %v2797
        %v2800 = vmul.f32 %v2798, %v2798
        %v2801 = vsel %vm2735, %v2800, 0.0
        %v2802 = vadd.f32 %v2799, %v2801
        %v2803 = vrot.slane %v2802, 4
        %v2804 = vadd.f32 %v2802, %v2803
        %v2805 = vrot.slane %v2804, 2
        %v2806 = vadd.f32 %v2804, %v2805
        %v2807 = vrot.slane %v2806, 1
        %v2808 = vadd.f32 %v2806, %v2807
        %v2809 = vadd.f32 %v2796, %v2808
        %v2810 = vsub.f32 %v2711, %v2783
        %v2811 = vsub.f32 %v2712, %v2783
        %v2812 = vmul.f32 %v2810, %v2810
        %v2813 = vmul.f32 %v2811, %v2811
        %v2814 = vsel %vm2735, %v2813, 0.0
        %v2815 = vadd.f32 %v2812, %v2814
        %v2816 = vrot.slane %v2815, 4
        %v2817 = vadd.f32 %v2815, %v2816
        %v2818 = vrot.slane %v2817, 2
        %v2819 = vadd.f32 %v2817, %v2818
        %v2820 = vrot.slane %v2819, 1
        %v2821 = vadd.f32 %v2819, %v2820
        %v2822 = vadd.f32 %v2809, %v2821
        %v2823 = vsub.f32 %v2713, %v2783
        %v2824 = vsub.f32 %v2714, %v2783
        %v2825 = vmul.f32 %v2823, %v2823
        %v2826 = vmul.f32 %v2824, %v2824
        %v2827 = vsel %vm2735, %v2826, 0.0
        %v2828 = vadd.f32 %v2825, %v2827
        %v2829 = vrot.slane %v2828, 4
        %v2830 = vadd.f32 %v2828, %v2829
        %v2831 = vrot.slane %v2830, 2
        %v2832 = vadd.f32 %v2830, %v2831
        %v2833 = vrot.slane %v2832, 1
        %v2834 = vadd.f32 %v2832, %v2833
        %v2835 = vadd.f32 %v2822, %v2834
        %v2836 = vsub.f32 %v2715, %v2783
        %v2837 = vsub.f32 %v2716, %v2783
        %v2838 = vmul.f32 %v2836, %v2836
        %v2839 = vmul.f32 %v2837, %v2837
        %v2840 = vsel %vm2735, %v2839, 0.0
        %v2841 = vadd.f32 %v2838, %v2840
        %v2842 = vrot.slane %v2841, 4
        %v2843 = vadd.f32 %v2841, %v2842
        %v2844 = vrot.slane %v2843, 2
        %v2845 = vadd.f32 %v2843, %v2844
        %v2846 = vrot.slane %v2845, 1
        %v2847 = vadd.f32 %v2845, %v2846
        %v2848 = vadd.f32 %v2835, %v2847
        %v2849 = vsub.f32 %v2717, %v2783
        %v2850 = vsub.f32 %v2718, %v2783
        %v2851 = vmul.f32 %v2849, %v2849
        %v2852 = vmul.f32 %v2850, %v2850
        %v2853 = vsel %vm2735, %v2852, 0.0
        %v2854 = vadd.f32 %v2851, %v2853
        %v2855 = vrot.slane %v2854, 4
        %v2856 = vadd.f32 %v2854, %v2855
        %v2857 = vrot.slane %v2856, 2
        %v2858 = vadd.f32 %v2856, %v2857
        %v2859 = vrot.slane %v2858, 1
        %v2860 = vadd.f32 %v2858, %v2859
        %v2861 = vadd.f32 %v2848, %v2860
        %v2862 = vsub.f32 %v2719, %v2783
        %v2863 = vsub.f32 %v2720, %v2783
        %v2864 = vmul.f32 %v2862, %v2862
        %v2865 = vmul.f32 %v2863, %v2863
        %v2866 = vsel %vm2735, %v2865, 0.0
        %v2867 = vadd.f32 %v2864, %v2866
        %v2868 = vrot.slane %v2867, 4
        %v2869 = vadd.f32 %v2867, %v2868
        %v2870 = vrot.slane %v2869, 2
        %v2871 = vadd.f32 %v2869, %v2870
        %v2872 = vrot.slane %v2871, 1
        %v2873 = vadd.f32 %v2871, %v2872
        %v2874 = vadd.f32 %v2861, %v2873
        %v2875 = vsub.f32 %v2721, %v2783
        %v2876 = vsub.f32 %v2722, %v2783
        %v2877 = vmul.f32 %v2875, %v2875
        %v2878 = vmul.f32 %v2876, %v2876
        %v2879 = vsel %vm2735, %v2878, 0.0
        %v2880 = vadd.f32 %v2877, %v2879
        %v2881 = vrot.slane %v2880, 4
        %v2882 = vadd.f32 %v2880, %v2881
        %v2883 = vrot.slane %v2882, 2
        %v2884 = vadd.f32 %v2882, %v2883
        %v2885 = vrot.slane %v2884, 1
        %v2886 = vadd.f32 %v2884, %v2885
        %v2887 = vadd.f32 %v2874, %v2886
        %v2888 = vsub.f32 %v2723, %v2783
        %v2889 = vsub.f32 %v2724, %v2783
        %v2890 = vmul.f32 %v2888, %v2888
        %v2891 = vmul.f32 %v2889, %v2889
        %v2892 = vsel %vm2735, %v2891, 0.0
        %v2893 = vadd.f32 %v2890, %v2892
        %v2894 = vrot.slane %v2893, 4
        %v2895 = vadd.f32 %v2893, %v2894
        %v2896 = vrot.slane %v2895, 2
        %v2897 = vadd.f32 %v2895, %v2896
        %v2898 = vrot.slane %v2897, 1
        %v2899 = vadd.f32 %v2897, %v2898
        %v2900 = vadd.f32 %v2887, %v2899
        %v2901 = vsub.f32 %v2725, %v2783
        %v2902 = vsub.f32 %v2726, %v2783
        %v2903 = vmul.f32 %v2901, %v2901
        %v2904 = vmul.f32 %v2902, %v2902
        %v2905 = vsel %vm2735, %v2904, 0.0
        %v2906 = vadd.f32 %v2903, %v2905
        %v2907 = vrot.slane %v2906, 4
        %v2908 = vadd.f32 %v2906, %v2907
        %v2909 = vrot.slane %v2908, 2
        %v2910 = vadd.f32 %v2908, %v2909
        %v2911 = vrot.slane %v2910, 1
        %v2912 = vadd.f32 %v2910, %v2911
        %v2913 = vadd.f32 %v2900, %v2912
        %v2914 = vsub.f32 %v2727, %v2783
        %v2915 = vsub.f32 %v2728, %v2783
        %v2916 = vmul.f32 %v2914, %v2914
        %v2917 = vmul.f32 %v2915, %v2915
        %v2918 = vsel %vm2735, %v2917, 0.0
        %v2919 = vadd.f32 %v2916, %v2918
        %v2920 = vrot.slane %v2919, 4
        %v2921 = vadd.f32 %v2919, %v2920
        %v2922 = vrot.slane %v2921, 2
        %v2923 = vadd.f32 %v2921, %v2922
        %v2924 = vrot.slane %v2923, 1
        %v2925 = vadd.f32 %v2923, %v2924
        %v2926 = vadd.f32 %v2913, %v2925
        %v2927 = vsub.f32 %v2729, %v2783
        %v2928 = vsub.f32 %v2730, %v2783
        %v2929 = vmul.f32 %v2927, %v2927
        %v2930 = vmul.f32 %v2928, %v2928
        %v2931 = vsel %vm2735, %v2930, 0.0
        %v2932 = vadd.f32 %v2929, %v2931
        %v2933 = vrot.slane %v2932, 4
        %v2934 = vadd.f32 %v2932, %v2933
        %v2935 = vrot.slane %v2934, 2
        %v2936 = vadd.f32 %v2934, %v2935
        %v2937 = vrot.slane %v2936, 1
        %v2938 = vadd.f32 %v2936, %v2937
        %v2939 = vadd.f32 %v2926, %v2938
        %v2940 = vsub.f32 %v2731, %v2783
        %v2941 = vsub.f32 %v2732, %v2783
        %v2942 = vmul.f32 %v2940, %v2940
        %v2943 = vmul.f32 %v2941, %v2941
        %v2944 = vsel %vm2735, %v2943, 0.0
        %v2945 = vadd.f32 %v2942, %v2944
        %v2946 = vrot.slane %v2945, 4
        %v2947 = vadd.f32 %v2945, %v2946
        %v2948 = vrot.slane %v2947, 2
        %v2949 = vadd.f32 %v2947, %v2948
        %v2950 = vrot.slane %v2949, 1
        %v2951 = vadd.f32 %v2949, %v2950
        %v2952 = vadd.f32 %v2939, %v2951
        %v2953 = vsub.f32 %v2733, %v2783
        %v2954 = vsub.f32 %v2734, %v2783
        %v2955 = vmul.f32 %v2953, %v2953
        %v2956 = vmul.f32 %v2954, %v2954
        %v2957 = vsel %vm2735, %v2956, 0.0
        %v2958 = vadd.f32 %v2955, %v2957
        %v2959 = vrot.slane %v2958, 4
        %v2960 = vadd.f32 %v2958, %v2959
        %v2961 = vrot.slane %v2960, 2
        %v2962 = vadd.f32 %v2960, %v2961
        %v2963 = vrot.slane %v2962, 1
        %v2964 = vadd.f32 %v2962, %v2963
        %v2965 = vadd.f32 %v2952, %v2964
        %v2966 = vmul.f32 %v2965, 0.0051020407
        %v2967 = vadd.f32 %v2966, 0.001
        %v2968 = vrsqrt.pop %v2967
        %v2969 = vld [vmem:[%s426] sm:$0x1]
        %v2970 = vmul.f32 %v2968, %v2969
        %v2971 = vld [vmem:[%s429] sm:$0x1]
        %v2972 = vmul.f32 %v2783, %v2970
        %v2973 = vsub.f32 %v2971, %v2972
        %v2974 = vlaneseq
        %v2975 = vshrl.u32 %v2974, 7
        %v2976 = vsub.s32 0, %v2975
        %v2977 = vrot.slane %v2970, %v2976
        %v2978 = vmul.f32 %v2707, %v2977
        %v2979 = vmul.f32 %v2708, %v2977
        %v2980 = vmul.f32 %v2709, %v2977
        %v2981 = vmul.f32 %v2710, %v2977
        %v2982 = vmul.f32 %v2711, %v2977
        %v2983 = vmul.f32 %v2712, %v2977
        %v2984 = vmul.f32 %v2713, %v2977
        %v2985 = vmul.f32 %v2714, %v2977
        %v2986 = vmul.f32 %v2715, %v2977
        %v2987 = vmul.f32 %v2716, %v2977
        %v2988 = vmul.f32 %v2717, %v2977
        %v2989 = vmul.f32 %v2718, %v2977
        %v2990 = vmul.f32 %v2719, %v2977
        %v2991 = vmul.f32 %v2720, %v2977
        %v2992 = vmul.f32 %v2721, %v2977
        %v2993 = vmul.f32 %v2722, %v2977
        %v2994 = vmul.f32 %v2723, %v2977
        %v2995 = vmul.f32 %v2724, %v2977
        %v2996 = vmul.f32 %v2725, %v2977
        %v2997 = vmul.f32 %v2726, %v2977
        %v2998 = vmul.f32 %v2727, %v2977
        %v2999 = vmul.f32 %v2728, %v2977
        %v3000 = vmul.f32 %v2729, %v2977
        %v3001 = vmul.f32 %v2730, %v2977
        %v3002 = vmul.f32 %v2731, %v2977
        %v3003 = vmul.f32 %v2732, %v2977
        %v3004 = vmul.f32 %v2733, %v2977
        %v3005 = vmul.f32 %v2734, %v2977
        %v3007 = vlaneseq
        %v3008 = vshrl.u32 %v3007, 7
        %v3009 = vsub.s32 0, %v3008
        %v3010 = vrot.slane %v2973, %v3009
        %v3012 = vadd.f32 %v2978, %v3010
        %v3013 = vadd.f32 %v2979, %v3010
        %v3014 = vadd.f32 %v2980, %v3010
        %v3015 = vadd.f32 %v2981, %v3010
        %v3016 = vadd.f32 %v2982, %v3010
        %v3017 = vadd.f32 %v2983, %v3010
        %v3018 = vadd.f32 %v2984, %v3010
        %v3019 = vadd.f32 %v2985, %v3010
        %v3020 = vadd.f32 %v2986, %v3010
        %v3021 = vadd.f32 %v2987, %v3010
        %v3022 = vadd.f32 %v2988, %v3010
        %v3023 = vadd.f32 %v2989, %v3010
        %v3024 = vadd.f32 %v2990, %v3010
        %v3025 = vadd.f32 %v2991, %v3010
        %v3026 = vadd.f32 %v2992, %v3010
        %v3027 = vadd.f32 %v2993, %v3010
        %v3028 = vadd.f32 %v2994, %v3010
        %v3029 = vadd.f32 %v2995, %v3010
        %v3030 = vadd.f32 %v2996, %v3010
        %v3031 = vadd.f32 %v2997, %v3010
        %v3032 = vadd.f32 %v2998, %v3010
        %v3033 = vadd.f32 %v2999, %v3010
        %v3034 = vadd.f32 %v3000, %v3010
        %v3035 = vadd.f32 %v3001, %v3010
        %v3036 = vadd.f32 %v3002, %v3010
        %v3037 = vadd.f32 %v3003, %v3010
        %v3038 = vadd.f32 %v3004, %v3010
        %v3039 = vadd.f32 %v3005, %v3010
        %v3040 = vmax.f32 %v3012, 0.0
        %v3041 = vmax.f32 %v3013, 0.0
        %v3042 = vmax.f32 %v3014, 0.0
        %v3043 = vmax.f32 %v3015, 0.0
        %v3044 = vmax.f32 %v3016, 0.0
        %v3045 = vmax.f32 %v3017, 0.0
        %v3046 = vmax.f32 %v3018, 0.0
        %v3047 = vmax.f32 %v3019, 0.0
        %v3048 = vmax.f32 %v3020, 0.0
        %v3049 = vmax.f32 %v3021, 0.0
        %v3050 = vmax.f32 %v3022, 0.0
        %v3051 = vmax.f32 %v3023, 0.0
        %v3052 = vmax.f32 %v3024, 0.0
        %v3053 = vmax.f32 %v3025, 0.0
        %v3054 = vmax.f32 %v3026, 0.0
        %v3055 = vmax.f32 %v3027, 0.0
        %v3056 = vmax.f32 %v3028, 0.0
        %v3057 = vmax.f32 %v3029, 0.0
        %v3058 = vmax.f32 %v3030, 0.0
        %v3059 = vmax.f32 %v3031, 0.0
        %v3060 = vmax.f32 %v3032, 0.0
        %v3061 = vmax.f32 %v3033, 0.0
        %v3062 = vmax.f32 %v3034, 0.0
        %v3063 = vmax.f32 %v3035, 0.0
        %v3064 = vmax.f32 %v3036, 0.0
        %v3065 = vmax.f32 %v3037, 0.0
        %v3066 = vmax.f32 %v3038, 0.0
        %v3067 = vmax.f32 %v3039, 0.0
        %3068 = vst [vmem:[%s423] sm:$0xff] %v3040
        %3069 = vst [vmem:[%s423 + $0x8] sm:$0x3f] %v3041
        %3070 = vst [vmem:[%s423 + $0x10] sm:$0xff] %v3042
        %3071 = vst [vmem:[%s423 + $0x18] sm:$0x3f] %v3043
        %3072 = vst [vmem:[%s423 + $0x20] sm:$0xff] %v3044
        %3073 = vst [vmem:[%s423 + $0x28] sm:$0x3f] %v3045
        %3074 = vst [vmem:[%s423 + $0x30] sm:$0xff] %v3046
        %3075 = vst [vmem:[%s423 + $0x38] sm:$0x3f] %v3047
        %3076 = vst [vmem:[%s423 + $0x40] sm:$0xff] %v3048
        %3077 = vst [vmem:[%s423 + $0x48] sm:$0x3f] %v3049
        %3078 = vst [vmem:[%s423 + $0x50] sm:$0xff] %v3050
        %3079 = vst [vmem:[%s423 + $0x58] sm:$0x3f] %v3051
        %3080 = vst [vmem:[%s423 + $0x60] sm:$0xff] %v3052
        %3081 = vst [vmem:[%s423 + $0x68] sm:$0x3f] %v3053
        %3082 = vst [vmem:[%s423 + $0x70] sm:$0xff] %v3054
        %3083 = vst [vmem:[%s423 + $0x78] sm:$0x3f] %v3055
        %3084 = vst [vmem:[%s423 + $0x80] sm:$0xff] %v3056
        %3085 = vst [vmem:[%s423 + $0x88] sm:$0x3f] %v3057
        %3086 = vst [vmem:[%s423 + $0x90] sm:$0xff] %v3058
        %3087 = vst [vmem:[%s423 + $0x98] sm:$0x3f] %v3059
        %3088 = vst [vmem:[%s423 + $0xa0] sm:$0xff] %v3060
        %3089 = vst [vmem:[%s423 + $0xa8] sm:$0x3f] %v3061
        %3090 = vst [vmem:[%s423 + $0xb0] sm:$0xff] %v3062
        %3091 = vst [vmem:[%s423 + $0xb8] sm:$0x3f] %v3063
        %3092 = vst [vmem:[%s423 + $0xc0] sm:$0xff] %v3064
        %3093 = vst [vmem:[%s423 + $0xc8] sm:$0x3f] %v3065
        %3094 = vst [vmem:[%s423 + $0xd0] sm:$0xff] %v3066
        %3095 = vst [vmem:[%s423 + $0xd8] sm:$0x3f] %v3067
        %s3096 = sand.u32 %s127, 1
        %s3097 = sand.u32 %s127, 1
        %s3098 = smul.addr %s3097, 224
        %s3099 = scalar_lea.vmem [#allocation5], %s3098
        // Predicated region
        $region113: #{_fused_impl.1} parent=103 // pred_check
          %p3100 = pneg %p137
        $region114: #{_fused_impl.1} parent=103 // pred_check_branch
          %3102 = sbr.rel (%p3100) target = $region116
        $region115: #{_fused_impl.1} parent=103 // pred_region
          %s3103 = smul.addr %s15, 8
          %s3104 = scalar_lea.vmem %s4, %s3103
          // Predicated region
          $region117: #{_fused_impl.1} parent=115 // pred_check
            _
          $region118: #{_fused_impl.1} parent=115 // pred_check_branch
            %3106 = sbr.rel (0) target = $region120
          $region119: #{_fused_impl.1} parent=115 // pred_region
            // Predicated region
            $region121: #{_fused_impl.1} parent=119 // pred_check
              _
            $region122: #{_fused_impl.1} parent=119 // pred_check_branch
              %3108 = sbr.rel (0) target = $region124
            $region123: #{_fused_impl.1} parent=119 // pred_region
              // Predicated region
              $region136: #{_fused_impl.1} parent=123 // pred_check
                _
              $region137: #{_fused_impl.1} parent=123 // pred_check_branch
                %3178 = sbr.rel (0) target = $region139
              $region138: #{_fused_impl.1} parent=123 // pred_region
                loop: start=0, step=1, limit=1
                $region140: #{_fused_impl.1} parent=138 // loop_pre_header
                  _
                $region141: #{_fused_impl.1} parent=138 // loop_header
                  %s3180 = sphi 0, %s3184
                  %p3181 = scmp.ge.s32.totalorder %s3180, 1
                  %s3185 = sphi %s3099, %s3099
                  %s3186 = sphi %s3104, %s3104
                $region142: #{_fused_impl.1} parent=138 // loop_header_branch
                  %3183 = sbr.rel (%p3181) target = $region146
                $region143: #{_fused_impl.1} parent=138 // loop_body
                  %v3187 = vld [vmem:[%s3185] sm:$0xff]
                  %3188 = vst [vmem:[%s3186] sm:$0xff] %v3187
                  %v3189 = vld [vmem:[%s3185 + $0x8] sm:$0xff]
                  %3190 = vst [vmem:[%s3186 + $0x18] sm:$0xff] %v3189
                  %v3191 = vld [vmem:[%s3185 + $0x10] sm:$0xff]
                  %3192 = vst [vmem:[%s3186 + $0x30] sm:$0xff] %v3191
                  %v3193 = vld [vmem:[%s3185 + $0x18] sm:$0xff]
                  %3194 = vst [vmem:[%s3186 + $0x48] sm:$0xff] %v3193
                  %v3195 = vld [vmem:[%s3185 + $0x20] sm:$0xff]
                  %3196 = vst [vmem:[%s3186 + $0x60] sm:$0xff] %v3195
                  %v3197 = vld [vmem:[%s3185 + $0x28] sm:$0xff]
                  %3198 = vst [vmem:[%s3186 + $0x78] sm:$0xff] %v3197
                  %v3199 = vld [vmem:[%s3185 + $0x30] sm:$0xff]
                  %3200 = vst [vmem:[%s3186 + $0x90] sm:$0xff] %v3199
                  %v3201 = vld [vmem:[%s3185 + $0x38] sm:$0xff]
                  %3202 = vst [vmem:[%s3186 + $0xa8] sm:$0xff] %v3201
                  %v3203 = vld [vmem:[%s3185 + $0x40] sm:$0xff]
                  %3204 = vst [vmem:[%s3186 + $0xc0] sm:$0xff] %v3203
                  %v3205 = vld [vmem:[%s3185 + $0x48] sm:$0xff]
                  %3206 = vst [vmem:[%s3186 + $0xd8] sm:$0xff] %v3205
                  %v3207 = vld [vmem:[%s3185 + $0x50] sm:$0xff]
                  %3208 = vst [vmem:[%s3186 + $0xf0] sm:$0xff] %v3207
                  %v3209 = vld [vmem:[%s3185 + $0x58] sm:$0xff]
                  %3210 = vst [vmem:[%s3186 + $0x108] sm:$0xff] %v3209
                  %v3211 = vld [vmem:[%s3185 + $0x60] sm:$0xff]
                  %3212 = vst [vmem:[%s3186 + $0x120] sm:$0xff] %v3211
                  %v3213 = vld [vmem:[%s3185 + $0x68] sm:$0xff]
                  %3214 = vst [vmem:[%s3186 + $0x138] sm:$0xff] %v3213
                  %v3215 = vld [vmem:[%s3185 + $0x70] sm:$0xff]
                  %3216 = vst [vmem:[%s3186 + $0x150] sm:$0xff] %v3215
                  %v3217 = vld [vmem:[%s3185 + $0x78] sm:$0xff]
                  %3218 = vst [vmem:[%s3186 + $0x168] sm:$0xff] %v3217
                  %v3219 = vld [vmem:[%s3185 + $0x80] sm:$0xff]
                  %3220 = vst [vmem:[%s3186 + $0x180] sm:$0xff] %v3219
                  %v3221 = vld [vmem:[%s3185 + $0x88] sm:$0xff]
                  %3222 = vst [vmem:[%s3186 + $0x198] sm:$0xff] %v3221
                  %v3223 = vld [vmem:[%s3185 + $0x90] sm:$0xff]
                  %3224 = vst [vmem:[%s3186 + $0x1b0] sm:$0xff] %v3223
                  %v3225 = vld [vmem:[%s3185 + $0x98] sm:$0xff]
                  %3226 = vst [vmem:[%s3186 + $0x1c8] sm:$0xff] %v3225
                  %v3227 = vld [vmem:[%s3185 + $0xa0] sm:$0xff]
                  %3228 = vst [vmem:[%s3186 + $0x1e0] sm:$0xff] %v3227
                  %v3229 = vld [vmem:[%s3185 + $0xa8] sm:$0xff]
                  %3230 = vst [vmem:[%s3186 + $0x1f8] sm:$0xff] %v3229
                  %v3231 = vld [vmem:[%s3185 + $0xb0] sm:$0xff]
                  %3232 = vst [vmem:[%s3186 + $0x210] sm:$0xff] %v3231
                  %v3233 = vld [vmem:[%s3185 + $0xb8] sm:$0xff]
                  %3234 = vst [vmem:[%s3186 + $0x228] sm:$0xff] %v3233
                  %v3235 = vld [vmem:[%s3185 + $0xc0] sm:$0xff]
                  %3236 = vst [vmem:[%s3186 + $0x240] sm:$0xff] %v3235
                  %v3237 = vld [vmem:[%s3185 + $0xc8] sm:$0xff]
                  %3238 = vst [vmem:[%s3186 + $0x258] sm:$0xff] %v3237
                  %v3239 = vld [vmem:[%s3185 + $0xd0] sm:$0xff]
                  %3240 = vst [vmem:[%s3186 + $0x270] sm:$0xff] %v3239
                  %v3241 = vld [vmem:[%s3185 + $0xd8] sm:$0xff]
                  %3242 = vst [vmem:[%s3186 + $0x288] sm:$0xff] %v3241
                $region144: #{_fused_impl.1} parent=138 // loop_footer
                  %s3184 = sadd.s32 1, %s3180
                $region145: #{_fused_impl.1} parent=138 // loop_footer_branch
                  %3179 = sbr.rel target = $region141
                $region146: #{_fused_impl.1} parent=138 // loop_exit
                  _
              $region139: #{_fused_impl.1} parent=123 // pred_fallthru
                _
              // Predicated region
              $region147: #{_fused_impl.1} parent=123 // pred_check
                _
              $region148: #{_fused_impl.1} parent=123 // pred_check_branch
                %3244 = sbr.rel target = $region150
              $region149: #{_fused_impl.1} parent=123 // pred_region
                _
              $region150: #{_fused_impl.1} parent=123 // pred_fallthru
                _
            $region124: #{_fused_impl.1} parent=119 // pred_fallthru
              _
            // Predicated region
            $region125: #{_fused_impl.1} parent=119 // pred_check
              _
            $region126: #{_fused_impl.1} parent=119 // pred_check_branch
              %3110 = sbr.rel target = $region128
            $region127: #{_fused_impl.1} parent=119 // pred_region
              %s3112 = ssub.s32 256, 1
              loop: start=0, step=1, limit=1
              $region129: #{_fused_impl.1} parent=127 // loop_pre_header
                _
              $region130: #{_fused_impl.1} parent=127 // loop_header
                %s3114 = sphi 0, %s3118
                %p3115 = scmp.ge.s32.totalorder %s3114, 1
                %s3119 = sphi %s3099, %s3099
                %s3120 = sphi %s3104, %s3104
              $region131: #{_fused_impl.1} parent=127 // loop_header_branch
                %3117 = sbr.rel (%p3115) target = $region135
              $region132: #{_fused_impl.1} parent=127 // loop_body
                %v3121 = vld [vmem:[%s3119] sm:%s3112]
                %3122 = vst [vmem:[%s3120] sm:%s3112] %v3121
                %v3123 = vld [vmem:[%s3119 + $0x8] sm:%s3112]
                %3124 = vst [vmem:[%s3120 + $0x18] sm:%s3112] %v3123
                %v3125 = vld [vmem:[%s3119 + $0x10] sm:%s3112]
                %3126 = vst [vmem:[%s3120 + $0x30] sm:%s3112] %v3125
                %v3127 = vld [vmem:[%s3119 + $0x18] sm:%s3112]
                %3128 = vst [vmem:[%s3120 + $0x48] sm:%s3112] %v3127
                %v3129 = vld [vmem:[%s3119 + $0x20] sm:%s3112]
                %3130 = vst [vmem:[%s3120 + $0x60] sm:%s3112] %v3129
                %v3131 = vld [vmem:[%s3119 + $0x28] sm:%s3112]
                %3132 = vst [vmem:[%s3120 + $0x78] sm:%s3112] %v3131
                %v3133 = vld [vmem:[%s3119 + $0x30] sm:%s3112]
                %3134 = vst [vmem:[%s3120 + $0x90] sm:%s3112] %v3133
                %v3135 = vld [vmem:[%s3119 + $0x38] sm:%s3112]
                %3136 = vst [vmem:[%s3120 + $0xa8] sm:%s3112] %v3135
                %v3137 = vld [vmem:[%s3119 + $0x40] sm:%s3112]
                %3138 = vst [vmem:[%s3120 + $0xc0] sm:%s3112] %v3137
                %v3139 = vld [vmem:[%s3119 + $0x48] sm:%s3112]
                %3140 = vst [vmem:[%s3120 + $0xd8] sm:%s3112] %v3139
                %v3141 = vld [vmem:[%s3119 + $0x50] sm:%s3112]
                %3142 = vst [vmem:[%s3120 + $0xf0] sm:%s3112] %v3141
                %v3143 = vld [vmem:[%s3119 + $0x58] sm:%s3112]
                %3144 = vst [vmem:[%s3120 + $0x108] sm:%s3112] %v3143
                %v3145 = vld [vmem:[%s3119 + $0x60] sm:%s3112]
                %3146 = vst [vmem:[%s3120 + $0x120] sm:%s3112] %v3145
                %v3147 = vld [vmem:[%s3119 + $0x68] sm:%s3112]
                %3148 = vst [vmem:[%s3120 + $0x138] sm:%s3112] %v3147
                %v3149 = vld [vmem:[%s3119 + $0x70] sm:%s3112]
                %3150 = vst [vmem:[%s3120 + $0x150] sm:%s3112] %v3149
                %v3151 = vld [vmem:[%s3119 + $0x78] sm:%s3112]
                %3152 = vst [vmem:[%s3120 + $0x168] sm:%s3112] %v3151
                %v3153 = vld [vmem:[%s3119 + $0x80] sm:%s3112]
                %3154 = vst [vmem:[%s3120 + $0x180] sm:%s3112] %v3153
                %v3155 = vld [vmem:[%s3119 + $0x88] sm:%s3112]
                %3156 = vst [vmem:[%s3120 + $0x198] sm:%s3112] %v3155
                %v3157 = vld [vmem:[%s3119 + $0x90] sm:%s3112]
                %3158 = vst [vmem:[%s3120 + $0x1b0] sm:%s3112] %v3157
                %v3159 = vld [vmem:[%s3119 + $0x98] sm:%s3112]
                %3160 = vst [vmem:[%s3120 + $0x1c8] sm:%s3112] %v3159
                %v3161 = vld [vmem:[%s3119 + $0xa0] sm:%s3112]
                %3162 = vst [vmem:[%s3120 + $0x1e0] sm:%s3112] %v3161
                %v3163 = vld [vmem:[%s3119 + $0xa8] sm:%s3112]
                %3164 = vst [vmem:[%s3120 + $0x1f8] sm:%s3112] %v3163
                %v3165 = vld [vmem:[%s3119 + $0xb0] sm:%s3112]
                %3166 = vst [vmem:[%s3120 + $0x210] sm:%s3112] %v3165
                %v3167 = vld [vmem:[%s3119 + $0xb8] sm:%s3112]
                %3168 = vst [vmem:[%s3120 + $0x228] sm:%s3112] %v3167
                %v3169 = vld [vmem:[%s3119 + $0xc0] sm:%s3112]
                %3170 = vst [vmem:[%s3120 + $0x240] sm:%s3112] %v3169
                %v3171 = vld [vmem:[%s3119 + $0xc8] sm:%s3112]
                %3172 = vst [vmem:[%s3120 + $0x258] sm:%s3112] %v3171
                %v3173 = vld [vmem:[%s3119 + $0xd0] sm:%s3112]
                %3174 = vst [vmem:[%s3120 + $0x270] sm:%s3112] %v3173
                %v3175 = vld [vmem:[%s3119 + $0xd8] sm:%s3112]
                %3176 = vst [vmem:[%s3120 + $0x288] sm:%s3112] %v3175
              $region133: #{_fused_impl.1} parent=127 // loop_footer
                %s3118 = sadd.s32 1, %s3114
              $region134: #{_fused_impl.1} parent=127 // loop_footer_branch
                %3113 = sbr.rel target = $region130
              $region135: #{_fused_impl.1} parent=127 // loop_exit
                _
            $region128: #{_fused_impl.1} parent=119 // pred_fallthru
              _
          $region120: #{_fused_impl.1} parent=115 // pred_fallthru
            _
          %3245 = vnop
        $region116: #{_fused_impl.1} parent=103 // pred_fallthru
          _
      $region104: #{_fused_impl.1} parent=5 // pred_fallthru
        _
      %p3246 = scmp.le.s32.totalorder 2, %s10
      // Predicated region
      $region151: #{_fused_impl.1} parent=5 // pred_check
        %p3247 = pneg %p3246
      $region152: #{_fused_impl.1} parent=5 // pred_check_branch
        %3249 = sbr.rel (%p3247) target = $region154
      $region153: #{_fused_impl.1} parent=5 // pred_region
        %s3250 = ssub.s32 %s10, 2
        // Predicated region
        $region155: #{_fused_impl.1} parent=153 // pred_check
          %p3251 = pneg %p143
        $region156: #{_fused_impl.1} parent=153 // pred_check_branch
          %3253 = sbr.rel (%p3251) target = $region158
        $region157: #{_fused_impl.1} parent=153 // pred_region
          %s3254 = sand.u32 %s128, 1
          %s3255 = sand.u32 %s128, 1
          %s3256 = smul.addr %s3255, 224
          %s3257 = scalar_lea.vmem [#allocation5], %s3256
        $region158: #{_fused_impl.1} parent=153 // pred_fallthru
          _
      $region154: #{_fused_impl.1} parent=5 // pred_fallthru
        _
    $region6: #{_fused_impl.1} parent=1 // loop_footer
      %s14 = sadd.s32 1, %s10
    $region7: #{_fused_impl.1} parent=1 // loop_footer_branch
      %9 = sbr.rel target = $region3
    $region8: #{_fused_impl.1} parent=1 // loop_exit
      _

</llo_original>
